<compile_context>
chip_gen: v5e
topology: v5e:2x2
jax: 0.10.0
libtpu: 0.0.40
codegen_flags: <defaults>
</compile_context>

<pallas_src>
import jax
import jax.numpy as jnp
from jax.experimental import pallas as pl
from jax.experimental.pallas import tpu as pltpu

num_classes = 7
num_features = 1433
num_heads = 8
num_layers = 3
per_head_channels = 16
hidden = per_head_channels * num_heads  # 128


# ----------------------------------------------------------------------------
# Single fused kernel: 3 x (GCN+ReLU -> GAT mean-over-heads) -> Linear
# ----------------------------------------------------------------------------
def _mas_fused_kernel(
    x_ref, adj_ref, ahat_ref,
    gcn_w0_ref, gcn_wr_ref, gcn_b_ref,
    gat_w_ref, gat_asrc_ref, gat_adst_ref, gat_b_ref,
    w_out_ref, b_out_ref,
    o_ref,
):
    H, C = num_heads, per_head_channels

    adj = adj_ref[...]                               # (N, N) f32, edge mask (w/ self loops)
    ahat_bf = ahat_ref[...].astype(jnp.bfloat16)     # (N, N) normalized propagation matrix

    x = x_ref[...]                                   # (N, F) bf16
    for i in range(num_layers):
        # ---------------- GCNConv + ReLU: relu(A_hat @ (X @ W) + b) ----------
        w = gcn_w0_ref[...] if i == 0 else gcn_wr_ref[i - 1]          # bf16
        xw = jnp.dot(x, w, preferred_element_type=jnp.float32)        # (N, 128)
        agg = jnp.dot(ahat_bf, xw.astype(jnp.bfloat16),
                      preferred_element_type=jnp.float32)             # (N, 128)
        h_feat = jnp.maximum(agg + gcn_b_ref[i], 0.0)                 # (N, 128) f32

        # ---------------- GATConv (heads=8, concat=False -> mean) ------------
        # All heads' projections packed along lanes: one (N,128)@(128,128).
        z_all = jnp.dot(h_feat.astype(jnp.bfloat16), gat_w_ref[i],
                        preferred_element_type=jnp.float32)           # (N, H*C)
        # Attention scores for all heads via block-packed matmuls (MXU, no
        # per-head cross-lane reductions): column h = <Z_h, a_h>.
        s_src = jnp.dot(z_all, gat_asrc_ref[i],
                        preferred_element_type=jnp.float32)           # (N, H)
        s_dst = jnp.dot(z_all, gat_adst_ref[i],
                        preferred_element_type=jnp.float32)           # (N, H)
        s_src_t = jnp.transpose(s_src)                                # (H, N)

        acc = jnp.zeros((adj.shape[0], C), jnp.float32)
        for h in range(H):                                            # unrolled, tiny 2-D ops
            z_h = z_all[:, h * C:(h + 1) * C]                         # (N, C)
            e = s_dst[:, h:h + 1] + s_src_t[h:h + 1, :]               # (N, N): e[i,j]
            e = jnp.where(e > 0, e, 0.2 * e)                          # LeakyReLU(0.2)
            e = jnp.where(adj > 0, e, jnp.float32(-1e30))             # mask non-edges
            e = e - jnp.max(e, axis=-1, keepdims=True)
            p = jnp.exp(e)
            alpha = p * pl.reciprocal(jnp.sum(p, axis=-1, keepdims=True), approx=True)
            acc = acc + jnp.dot(alpha, z_h, preferred_element_type=jnp.float32)
        x_next = acc * (1.0 / H) + gat_b_ref[i]                       # (N, C)
        # F.dropout(p=0.1) is identity at inference (training=False).

        x = x_next.astype(jnp.bfloat16) if i + 1 < num_layers else x_next

    # ---------------- final Linear ----------------------------------------
    o_ref[...] = (
        jnp.dot(x.astype(jnp.float32), w_out_ref[...],
                preferred_element_type=jnp.float32)
        + b_out_ref[...]
    )


@jax.jit
def mas_forward(x, adj, ahat, params):
    n = x.shape[0]
    return pl.pallas_call(
        _mas_fused_kernel,
        out_shape=jax.ShapeDtypeStruct((n, num_classes), jnp.float32),
        grid=(1,),
        in_specs=[
            pl.BlockSpec(x.shape, lambda i: (0, 0)),
            pl.BlockSpec(adj.shape, lambda i: (0, 0)),
            pl.BlockSpec(ahat.shape, lambda i: (0, 0)),
            pl.BlockSpec(params["gcn_w0"].shape, lambda i: (0, 0)),
            pl.BlockSpec(params["gcn_wr"].shape, lambda i: (0, 0, 0)),
            pl.BlockSpec(params["gcn_b"].shape, lambda i: (0, 0, 0)),
            pl.BlockSpec(params["gat_w"].shape, lambda i: (0, 0, 0)),
            pl.BlockSpec(params["gat_asrc"].shape, lambda i: (0, 0, 0)),
            pl.BlockSpec(params["gat_adst"].shape, lambda i: (0, 0, 0)),
            pl.BlockSpec(params["gat_b"].shape, lambda i: (0, 0, 0)),
            pl.BlockSpec(params["w_out"].shape, lambda i: (0, 0)),
            pl.BlockSpec(params["b_out"].shape, lambda i: (0, 0)),
        ],
        out_specs=pl.BlockSpec((n, num_classes), lambda i: (0, 0)),
        compiler_params=pltpu.CompilerParams(dimension_semantics=("arbitrary",)),
    )(
        x, adj, ahat,
        params["gcn_w0"], params["gcn_wr"], params["gcn_b"],
        params["gat_w"], params["gat_asrc"], params["gat_adst"], params["gat_b"],
        params["w_out"], params["b_out"],
    )


# ----------------------------------------------------------------------------
# Glue: parameters, dense adjacency
# ----------------------------------------------------------------------------
def _glorot(key, shape):
    fan_in, fan_out = shape[-2], shape[-1]
    s = (6.0 / (fan_in + fan_out)) ** 0.5
    return jax.random.uniform(key, shape, jnp.float32, -s, s)


def init_params(key):
    keys = iter(jax.random.split(key, 4 * num_layers + 2))

    in_dims = [num_features] + [per_head_channels] * (num_layers - 1)
    gcn_w = [_glorot(next(keys), (in_dims[i], hidden)) for i in range(num_layers)]
    gcn_w0 = gcn_w[0].astype(jnp.bfloat16)                       # (1433, 128)
    gcn_wr = jnp.stack(gcn_w[1:]).astype(jnp.bfloat16)           # (2, 16, 128)
    gcn_b = jnp.zeros((num_layers, 1, hidden), jnp.float32)      # (3, 1, 128)

    gat_w, gat_asrc, gat_adst = [], [], []
    for _ in range(num_layers):
        w = _glorot(next(keys), (num_heads, hidden, per_head_channels))
        a_src = _glorot(next(keys), (num_heads, 1, per_head_channels))
        a_dst = _glorot(next(keys), (num_heads, 1, per_head_channels))
        # pack heads along output lanes: W_all[:, h*C:(h+1)*C] = W_h
        w_all = jnp.transpose(w, (1, 0, 2)).reshape(hidden, num_heads * per_head_channels)
        # block-"diagonal" attention vectors: A_pack[h*C:(h+1)*C, h] = a_h
        asrc_pack = jnp.zeros((hidden, num_heads), jnp.float32)
        adst_pack = jnp.zeros((hidden, num_heads), jnp.float32)
        for h in range(num_heads):
            lo, hi = h * per_head_channels, (h + 1) * per_head_channels
            asrc_pack = asrc_pack.at[lo:hi, h].set(a_src[h, 0])
            adst_pack = adst_pack.at[lo:hi, h].set(a_dst[h, 0])
        gat_w.append(w_all)
        gat_asrc.append(asrc_pack)
        gat_adst.append(adst_pack)

    params = dict(
        gcn_w0=gcn_w0,
        gcn_wr=gcn_wr,
        gcn_b=gcn_b,
        gat_w=jnp.stack(gat_w).astype(jnp.bfloat16),             # (3, 128, 128)
        gat_asrc=jnp.stack(gat_asrc),                            # (3, 128, 8)
        gat_adst=jnp.stack(gat_adst),                            # (3, 128, 8)
        gat_b=jnp.zeros((num_layers, 1, per_head_channels), jnp.float32),
        w_out=_glorot(next(keys), (per_head_channels, num_classes)),
        b_out=jnp.zeros((1, num_classes), jnp.float32),
    )
    return params


def build_adj(edge_index, n):
    """Dense adjacency with self-loops (GAT mask) and symmetric-normalized
    A_hat = D^{-1/2}(A+I)D^{-1/2} (GCN propagation matrix)."""
    src, dst = edge_index[0], edge_index[1]
    adj = jnp.zeros((n, n), jnp.float32)
    adj = adj.at[dst, src].set(1.0)
    adj = adj.at[src, dst].set(1.0)                              # undirected
    adj = jnp.maximum(adj, jnp.eye(n, dtype=jnp.float32))        # self-loops
    deg = jnp.sum(adj, axis=1)
    dinv = 1.0 / jnp.sqrt(deg)
    ahat = adj * dinv[:, None] * dinv[None, :]
    return adj, ahat


if __name__ == "__main__":
    key = jax.random.PRNGKey(0)
    k_x, k_e, k_p = jax.random.split(key, 3)

    N = 16  # small node count
    # TODO(synk): for real graph sizes (e.g. Cora N=2708) the full-array
    #             BlockSpecs / dense (N,N) attention would need row tiling +
    #             blocked online softmax; at demo scale everything fits VMEM.
    x = jax.random.normal(k_x, (N, num_features), jnp.float32).astype(jnp.bfloat16)

    # deterministic edge_index [2, E]: a ring plus a few chords
    ring_src = jnp.arange(N, dtype=jnp.int32)
    ring_dst = (ring_src + 1) % N
    extra_src = jax.random.randint(k_e, (8,), 0, N, dtype=jnp.int32)
    extra_dst = (extra_src + 5) % N
    edge_index = jnp.stack(
        [jnp.concatenate([ring_src, extra_src]),
         jnp.concatenate([ring_dst, extra_dst])]
    )

    adj, ahat = build_adj(edge_index, N)
    params = init_params(k_p)

    out = mas_forward(x, adj, ahat, params)
    out = jax.block_until_ready(out)
    assert out.shape == (N, num_classes) and out.dtype == jnp.float32
    print("KERNEL_OK")
</pallas_src>

<mosaic_0001>
module attributes {stable_mosaic.version = 11 : i64} {
  func.func @_mas_fused_kernel(%arg0: i32, %arg1: memref<16x1433xbf16, #tpu.memory_space<vmem>>, %arg2: memref<16x16xf32, #tpu.memory_space<vmem>>, %arg3: memref<16x16xf32, #tpu.memory_space<vmem>>, %arg4: memref<1433x128xbf16, #tpu.memory_space<vmem>>, %arg5: memref<2x16x128xbf16, #tpu.memory_space<vmem>>, %arg6: memref<3x1x128xf32, #tpu.memory_space<vmem>>, %arg7: memref<3x128x128xbf16, #tpu.memory_space<vmem>>, %arg8: memref<3x128x8xf32, #tpu.memory_space<vmem>>, %arg9: memref<3x128x8xf32, #tpu.memory_space<vmem>>, %arg10: memref<3x1x16xf32, #tpu.memory_space<vmem>>, %arg11: memref<16x7xf32, #tpu.memory_space<vmem>>, %arg12: memref<1x7xf32, #tpu.memory_space<vmem>>, %arg13: memref<16x7xf32, #tpu.memory_space<vmem>>) attributes {dimension_semantics = [#tpu.dimension_semantics<arbitrary>], iteration_bounds = array<i64: 1>, scalar_prefetch = 0 : i64, scratch_operands = 0 : i64, tpu.core_type = #tpu.core_type<tc>, window_params = [{pipeline_mode = #tpu.pipeline_mode<synchronous>, transform_indices = @transform_0, window_bounds = array<i64: 16, 1433>}, {pipeline_mode = #tpu.pipeline_mode<synchronous>, transform_indices = @transform_1, window_bounds = array<i64: 16, 16>}, {pipeline_mode = #tpu.pipeline_mode<synchronous>, transform_indices = @transform_2, window_bounds = array<i64: 16, 16>}, {pipeline_mode = #tpu.pipeline_mode<synchronous>, transform_indices = @transform_3, window_bounds = array<i64: 1433, 128>}, {pipeline_mode = #tpu.pipeline_mode<synchronous>, transform_indices = @transform_4, window_bounds = array<i64: 2, 16, 128>}, {pipeline_mode = #tpu.pipeline_mode<synchronous>, transform_indices = @transform_5, window_bounds = array<i64: 3, 1, 128>}, {pipeline_mode = #tpu.pipeline_mode<synchronous>, transform_indices = @transform_6, window_bounds = array<i64: 3, 128, 128>}, {pipeline_mode = #tpu.pipeline_mode<synchronous>, transform_indices = @transform_7, window_bounds = array<i64: 3, 128, 8>}, {pipeline_mode = #tpu.pipeline_mode<synchronous>, transform_indices = @transform_8, window_bounds = array<i64: 3, 128, 8>}, {pipeline_mode = #tpu.pipeline_mode<synchronous>, transform_indices = @transform_9, window_bounds = array<i64: 3, 1, 16>}, {pipeline_mode = #tpu.pipeline_mode<synchronous>, transform_indices = @transform_10, window_bounds = array<i64: 16, 7>}, {pipeline_mode = #tpu.pipeline_mode<synchronous>, transform_indices = @transform_11, window_bounds = array<i64: 1, 7>}, {pipeline_mode = #tpu.pipeline_mode<synchronous>, transform_indices = @transform_12, window_bounds = array<i64: 16, 7>}]} {
    %c0 = arith.constant 0 : index
    %c0_0 = arith.constant 0 : index
    %0 = vector.load %arg2[%c0, %c0_0] : memref<16x16xf32, #tpu.memory_space<vmem>>, vector<16x16xf32>
    %c0_1 = arith.constant 0 : index
    %c0_2 = arith.constant 0 : index
    %1 = vector.load %arg3[%c0_1, %c0_2] : memref<16x16xf32, #tpu.memory_space<vmem>>, vector<16x16xf32>
    %2 = arith.truncf %1 : vector<16x16xf32> to vector<16x16xbf16>
    %c0_3 = arith.constant 0 : index
    %c0_4 = arith.constant 0 : index
    %3 = vector.load %arg1[%c0_3, %c0_4] : memref<16x1433xbf16, #tpu.memory_space<vmem>>, vector<16x1433xbf16>
    %c0_5 = arith.constant 0 : index
    %c0_6 = arith.constant 0 : index
    %4 = vector.load %arg4[%c0_5, %c0_6] : memref<1433x128xbf16, #tpu.memory_space<vmem>>, vector<1433x128xbf16>
    %cst = arith.constant dense<0.000000e+00> : vector<16x128xf32>
    %5 = tpu.matmul %3, %4, %cst {dimension_numbers = #tpu.dot_dimension_numbers<[1], [0], [0], [1], [0, 0, 1, 1], [], []>} : vector<16x1433xbf16>, vector<1433x128xbf16>, vector<16x128xf32> -> vector<16x128xf32>
    %6 = arith.truncf %5 : vector<16x128xf32> to vector<16x128xbf16>
    %cst_7 = arith.constant dense<0.000000e+00> : vector<16x128xf32>
    %7 = tpu.matmul %2, %6, %cst_7 {dimension_numbers = #tpu.dot_dimension_numbers<[1], [0], [0], [1], [0, 0, 1, 1], [], []>} : vector<16x16xbf16>, vector<16x128xbf16>, vector<16x128xf32> -> vector<16x128xf32>
    %c0_8 = arith.constant 0 : index
    %c0_9 = arith.constant 0 : index
    %c0_10 = arith.constant 0 : index
    %8 = vector.load %arg6[%c0_8, %c0_9, %c0_10] : memref<3x1x128xf32, #tpu.memory_space<vmem>>, vector<1x1x128xf32>
    %9 = vector.shape_cast %8 : vector<1x1x128xf32> to vector<1x128xf32>
    %10 = vector.broadcast %9 : vector<1x128xf32> to vector<16x128xf32>
    %11 = arith.addf %7, %10 : vector<16x128xf32>
    %cst_11 = arith.constant 0.000000e+00 : f32
    %12 = vector.broadcast %cst_11 : f32 to vector<16x128xf32>
    %13 = arith.maximumf %11, %12 : vector<16x128xf32>
    %14 = arith.truncf %13 : vector<16x128xf32> to vector<16x128xbf16>
    %c0_12 = arith.constant 0 : index
    %c0_13 = arith.constant 0 : index
    %c0_14 = arith.constant 0 : index
    %15 = vector.load %arg7[%c0_12, %c0_13, %c0_14] : memref<3x128x128xbf16, #tpu.memory_space<vmem>>, vector<1x128x128xbf16>
    %16 = vector.shape_cast %15 : vector<1x128x128xbf16> to vector<128x128xbf16>
    %cst_15 = arith.constant dense<0.000000e+00> : vector<16x128xf32>
    %17 = tpu.matmul %14, %16, %cst_15 {dimension_numbers = #tpu.dot_dimension_numbers<[1], [0], [0], [1], [0, 0, 1, 1], [], []>} : vector<16x128xbf16>, vector<128x128xbf16>, vector<16x128xf32> -> vector<16x128xf32>
    %c0_16 = arith.constant 0 : index
    %c0_17 = arith.constant 0 : index
    %c0_18 = arith.constant 0 : index
    %18 = vector.load %arg8[%c0_16, %c0_17, %c0_18] : memref<3x128x8xf32, #tpu.memory_space<vmem>>, vector<1x128x8xf32>
    %19 = vector.shape_cast %18 : vector<1x128x8xf32> to vector<128x8xf32>
    %cst_19 = arith.constant dense<0.000000e+00> : vector<16x8xf32>
    %20 = tpu.matmul %17, %19, %cst_19 {dimension_numbers = #tpu.dot_dimension_numbers<[1], [0], [0], [1], [0, 0, 1, 1], [], []>} : vector<16x128xf32>, vector<128x8xf32>, vector<16x8xf32> -> vector<16x8xf32>
    %c0_20 = arith.constant 0 : index
    %c0_21 = arith.constant 0 : index
    %c0_22 = arith.constant 0 : index
    %21 = vector.load %arg9[%c0_20, %c0_21, %c0_22] : memref<3x128x8xf32, #tpu.memory_space<vmem>>, vector<1x128x8xf32>
    %22 = vector.shape_cast %21 : vector<1x128x8xf32> to vector<128x8xf32>
    %cst_23 = arith.constant dense<0.000000e+00> : vector<16x8xf32>
    %23 = tpu.matmul %17, %22, %cst_23 {dimension_numbers = #tpu.dot_dimension_numbers<[1], [0], [0], [1], [0, 0, 1, 1], [], []>} : vector<16x128xf32>, vector<128x8xf32>, vector<16x8xf32> -> vector<16x8xf32>
    %24 = tpu.transpose %20, [1, 0] : vector<16x8xf32> -> vector<8x16xf32>
    %cst_24 = arith.constant 0.000000e+00 : f32
    %25 = vector.broadcast %cst_24 : f32 to vector<16x16xf32>
    %26 = vector.extract_strided_slice %17 {offsets = [0, 0], sizes = [16, 16], strides = [1, 1]} : vector<16x128xf32> to vector<16x16xf32>
    %27 = vector.extract_strided_slice %23 {offsets = [0, 0], sizes = [16, 1], strides = [1, 1]} : vector<16x8xf32> to vector<16x1xf32>
    %28 = vector.extract_strided_slice %24 {offsets = [0, 0], sizes = [1, 16], strides = [1, 1]} : vector<8x16xf32> to vector<1x16xf32>
    %29 = vector.broadcast %27 : vector<16x1xf32> to vector<16x16xf32>
    %30 = vector.broadcast %28 : vector<1x16xf32> to vector<16x16xf32>
    %31 = arith.addf %29, %30 : vector<16x16xf32>
    %cst_25 = arith.constant 0.000000e+00 : f32
    %32 = vector.broadcast %cst_25 : f32 to vector<16x16xf32>
    %33 = arith.cmpf ogt, %31, %32 : vector<16x16xf32>
    %cst_26 = arith.constant 2.000000e-01 : f32
    %34 = vector.broadcast %cst_26 : f32 to vector<16x16xf32>
    %35 = arith.mulf %34, %31 : vector<16x16xf32>
    %36 = arith.select %33, %31, %35 : vector<16x16xi1>, vector<16x16xf32>
    %cst_27 = arith.constant 0.000000e+00 : f32
    %37 = vector.broadcast %cst_27 : f32 to vector<16x16xf32>
    %38 = arith.cmpf ogt, %0, %37 : vector<16x16xf32>
    %cst_28 = arith.constant -1.000000e+30 : f32
    %39 = vector.broadcast %cst_28 : f32 to vector<16x16xf32>
    %40 = arith.select %38, %36, %39 : vector<16x16xi1>, vector<16x16xf32>
    %cst_29 = arith.constant dense<0xFF800000> : vector<16xf32>
    %41 = vector.multi_reduction <maximumf>, %40, %cst_29 [1] : vector<16x16xf32> to vector<16xf32>
    %42 = vector.shape_cast %41 : vector<16xf32> to vector<16x1xf32>
    %43 = vector.broadcast %42 : vector<16x1xf32> to vector<16x16xf32>
    %44 = arith.subf %40, %43 : vector<16x16xf32>
    %45 = math.exp %44 : vector<16x16xf32>
    %cst_30 = arith.constant dense<0.000000e+00> : vector<16xf32>
    %46 = vector.multi_reduction <add>, %45, %cst_30 [1] : vector<16x16xf32> to vector<16xf32>
    %47 = vector.shape_cast %46 : vector<16xf32> to vector<16x1xf32>
    %48 = tpu.reciprocal %47 {approx = true} : vector<16x1xf32> -> vector<16x1xf32>
    %49 = vector.broadcast %48 : vector<16x1xf32> to vector<16x16xf32>
    %50 = arith.mulf %45, %49 : vector<16x16xf32>
    %cst_31 = arith.constant dense<0.000000e+00> : vector<16x16xf32>
    %51 = tpu.matmul %50, %26, %cst_31 {dimension_numbers = #tpu.dot_dimension_numbers<[1], [0], [0], [1], [0, 0, 1, 1], [], []>} : vector<16x16xf32>, vector<16x16xf32>, vector<16x16xf32> -> vector<16x16xf32>
    %52 = arith.addf %25, %51 : vector<16x16xf32>
    %53 = vector.extract_strided_slice %17 {offsets = [0, 16], sizes = [16, 16], strides = [1, 1]} : vector<16x128xf32> to vector<16x16xf32>
    %54 = vector.extract_strided_slice %23 {offsets = [0, 1], sizes = [16, 1], strides = [1, 1]} : vector<16x8xf32> to vector<16x1xf32>
    %55 = vector.extract_strided_slice %24 {offsets = [1, 0], sizes = [1, 16], strides = [1, 1]} : vector<8x16xf32> to vector<1x16xf32>
    %56 = vector.broadcast %54 : vector<16x1xf32> to vector<16x16xf32>
    %57 = vector.broadcast %55 : vector<1x16xf32> to vector<16x16xf32>
    %58 = arith.addf %56, %57 : vector<16x16xf32>
    %cst_32 = arith.constant 0.000000e+00 : f32
    %59 = vector.broadcast %cst_32 : f32 to vector<16x16xf32>
    %60 = arith.cmpf ogt, %58, %59 : vector<16x16xf32>
    %cst_33 = arith.constant 2.000000e-01 : f32
    %61 = vector.broadcast %cst_33 : f32 to vector<16x16xf32>
    %62 = arith.mulf %61, %58 : vector<16x16xf32>
    %63 = arith.select %60, %58, %62 : vector<16x16xi1>, vector<16x16xf32>
    %cst_34 = arith.constant 0.000000e+00 : f32
    %64 = vector.broadcast %cst_34 : f32 to vector<16x16xf32>
    %65 = arith.cmpf ogt, %0, %64 : vector<16x16xf32>
    %cst_35 = arith.constant -1.000000e+30 : f32
    %66 = vector.broadcast %cst_35 : f32 to vector<16x16xf32>
    %67 = arith.select %65, %63, %66 : vector<16x16xi1>, vector<16x16xf32>
    %cst_36 = arith.constant dense<0xFF800000> : vector<16xf32>
    %68 = vector.multi_reduction <maximumf>, %67, %cst_36 [1] : vector<16x16xf32> to vector<16xf32>
    %69 = vector.shape_cast %68 : vector<16xf32> to vector<16x1xf32>
    %70 = vector.broadcast %69 : vector<16x1xf32> to vector<16x16xf32>
    %71 = arith.subf %67, %70 : vector<16x16xf32>
    %72 = math.exp %71 : vector<16x16xf32>
    %cst_37 = arith.constant dense<0.000000e+00> : vector<16xf32>
    %73 = vector.multi_reduction <add>, %72, %cst_37 [1] : vector<16x16xf32> to vector<16xf32>
    %74 = vector.shape_cast %73 : vector<16xf32> to vector<16x1xf32>
    %75 = tpu.reciprocal %74 {approx = true} : vector<16x1xf32> -> vector<16x1xf32>
    %76 = vector.broadcast %75 : vector<16x1xf32> to vector<16x16xf32>
    %77 = arith.mulf %72, %76 : vector<16x16xf32>
    %cst_38 = arith.constant dense<0.000000e+00> : vector<16x16xf32>
    %78 = tpu.matmul %77, %53, %cst_38 {dimension_numbers = #tpu.dot_dimension_numbers<[1], [0], [0], [1], [0, 0, 1, 1], [], []>} : vector<16x16xf32>, vector<16x16xf32>, vector<16x16xf32> -> vector<16x16xf32>
    %79 = arith.addf %52, %78 : vector<16x16xf32>
    %80 = vector.extract_strided_slice %17 {offsets = [0, 32], sizes = [16, 16], strides = [1, 1]} : vector<16x128xf32> to vector<16x16xf32>
    %81 = vector.extract_strided_slice %23 {offsets = [0, 2], sizes = [16, 1], strides = [1, 1]} : vector<16x8xf32> to vector<16x1xf32>
    %82 = vector.extract_strided_slice %24 {offsets = [2, 0], sizes = [1, 16], strides = [1, 1]} : vector<8x16xf32> to vector<1x16xf32>
    %83 = vector.broadcast %81 : vector<16x1xf32> to vector<16x16xf32>
    %84 = vector.broadcast %82 : vector<1x16xf32> to vector<16x16xf32>
    %85 = arith.addf %83, %84 : vector<16x16xf32>
    %cst_39 = arith.constant 0.000000e+00 : f32
    %86 = vector.broadcast %cst_39 : f32 to vector<16x16xf32>
    %87 = arith.cmpf ogt, %85, %86 : vector<16x16xf32>
    %cst_40 = arith.constant 2.000000e-01 : f32
    %88 = vector.broadcast %cst_40 : f32 to vector<16x16xf32>
    %89 = arith.mulf %88, %85 : vector<16x16xf32>
    %90 = arith.select %87, %85, %89 : vector<16x16xi1>, vector<16x16xf32>
    %cst_41 = arith.constant 0.000000e+00 : f32
    %91 = vector.broadcast %cst_41 : f32 to vector<16x16xf32>
    %92 = arith.cmpf ogt, %0, %91 : vector<16x16xf32>
    %cst_42 = arith.constant -1.000000e+30 : f32
    %93 = vector.broadcast %cst_42 : f32 to vector<16x16xf32>
    %94 = arith.select %92, %90, %93 : vector<16x16xi1>, vector<16x16xf32>
    %cst_43 = arith.constant dense<0xFF800000> : vector<16xf32>
    %95 = vector.multi_reduction <maximumf>, %94, %cst_43 [1] : vector<16x16xf32> to vector<16xf32>
    %96 = vector.shape_cast %95 : vector<16xf32> to vector<16x1xf32>
    %97 = vector.broadcast %96 : vector<16x1xf32> to vector<16x16xf32>
    %98 = arith.subf %94, %97 : vector<16x16xf32>
    %99 = math.exp %98 : vector<16x16xf32>
    %cst_44 = arith.constant dense<0.000000e+00> : vector<16xf32>
    %100 = vector.multi_reduction <add>, %99, %cst_44 [1] : vector<16x16xf32> to vector<16xf32>
    %101 = vector.shape_cast %100 : vector<16xf32> to vector<16x1xf32>
    %102 = tpu.reciprocal %101 {approx = true} : vector<16x1xf32> -> vector<16x1xf32>
    %103 = vector.broadcast %102 : vector<16x1xf32> to vector<16x16xf32>
    %104 = arith.mulf %99, %103 : vector<16x16xf32>
    %cst_45 = arith.constant dense<0.000000e+00> : vector<16x16xf32>
    %105 = tpu.matmul %104, %80, %cst_45 {dimension_numbers = #tpu.dot_dimension_numbers<[1], [0], [0], [1], [0, 0, 1, 1], [], []>} : vector<16x16xf32>, vector<16x16xf32>, vector<16x16xf32> -> vector<16x16xf32>
    %106 = arith.addf %79, %105 : vector<16x16xf32>
    %107 = vector.extract_strided_slice %17 {offsets = [0, 48], sizes = [16, 16], strides = [1, 1]} : vector<16x128xf32> to vector<16x16xf32>
    %108 = vector.extract_strided_slice %23 {offsets = [0, 3], sizes = [16, 1], strides = [1, 1]} : vector<16x8xf32> to vector<16x1xf32>
    %109 = vector.extract_strided_slice %24 {offsets = [3, 0], sizes = [1, 16], strides = [1, 1]} : vector<8x16xf32> to vector<1x16xf32>
    %110 = vector.broadcast %108 : vector<16x1xf32> to vector<16x16xf32>
    %111 = vector.broadcast %109 : vector<1x16xf32> to vector<16x16xf32>
    %112 = arith.addf %110, %111 : vector<16x16xf32>
    %cst_46 = arith.constant 0.000000e+00 : f32
    %113 = vector.broadcast %cst_46 : f32 to vector<16x16xf32>
    %114 = arith.cmpf ogt, %112, %113 : vector<16x16xf32>
    %cst_47 = arith.constant 2.000000e-01 : f32
    %115 = vector.broadcast %cst_47 : f32 to vector<16x16xf32>
    %116 = arith.mulf %115, %112 : vector<16x16xf32>
    %117 = arith.select %114, %112, %116 : vector<16x16xi1>, vector<16x16xf32>
    %cst_48 = arith.constant 0.000000e+00 : f32
    %118 = vector.broadcast %cst_48 : f32 to vector<16x16xf32>
    %119 = arith.cmpf ogt, %0, %118 : vector<16x16xf32>
    %cst_49 = arith.constant -1.000000e+30 : f32
    %120 = vector.broadcast %cst_49 : f32 to vector<16x16xf32>
    %121 = arith.select %119, %117, %120 : vector<16x16xi1>, vector<16x16xf32>
    %cst_50 = arith.constant dense<0xFF800000> : vector<16xf32>
    %122 = vector.multi_reduction <maximumf>, %121, %cst_50 [1] : vector<16x16xf32> to vector<16xf32>
    %123 = vector.shape_cast %122 : vector<16xf32> to vector<16x1xf32>
    %124 = vector.broadcast %123 : vector<16x1xf32> to vector<16x16xf32>
    %125 = arith.subf %121, %124 : vector<16x16xf32>
    %126 = math.exp %125 : vector<16x16xf32>
    %cst_51 = arith.constant dense<0.000000e+00> : vector<16xf32>
    %127 = vector.multi_reduction <add>, %126, %cst_51 [1] : vector<16x16xf32> to vector<16xf32>
    %128 = vector.shape_cast %127 : vector<16xf32> to vector<16x1xf32>
    %129 = tpu.reciprocal %128 {approx = true} : vector<16x1xf32> -> vector<16x1xf32>
    %130 = vector.broadcast %129 : vector<16x1xf32> to vector<16x16xf32>
    %131 = arith.mulf %126, %130 : vector<16x16xf32>
    %cst_52 = arith.constant dense<0.000000e+00> : vector<16x16xf32>
    %132 = tpu.matmul %131, %107, %cst_52 {dimension_numbers = #tpu.dot_dimension_numbers<[1], [0], [0], [1], [0, 0, 1, 1], [], []>} : vector<16x16xf32>, vector<16x16xf32>, vector<16x16xf32> -> vector<16x16xf32>
    %133 = arith.addf %106, %132 : vector<16x16xf32>
    %134 = vector.extract_strided_slice %17 {offsets = [0, 64], sizes = [16, 16], strides = [1, 1]} : vector<16x128xf32> to vector<16x16xf32>
    %135 = vector.extract_strided_slice %23 {offsets = [0, 4], sizes = [16, 1], strides = [1, 1]} : vector<16x8xf32> to vector<16x1xf32>
    %136 = vector.extract_strided_slice %24 {offsets = [4, 0], sizes = [1, 16], strides = [1, 1]} : vector<8x16xf32> to vector<1x16xf32>
    %137 = vector.broadcast %135 : vector<16x1xf32> to vector<16x16xf32>
    %138 = vector.broadcast %136 : vector<1x16xf32> to vector<16x16xf32>
    %139 = arith.addf %137, %138 : vector<16x16xf32>
    %cst_53 = arith.constant 0.000000e+00 : f32
    %140 = vector.broadcast %cst_53 : f32 to vector<16x16xf32>
    %141 = arith.cmpf ogt, %139, %140 : vector<16x16xf32>
    %cst_54 = arith.constant 2.000000e-01 : f32
    %142 = vector.broadcast %cst_54 : f32 to vector<16x16xf32>
    %143 = arith.mulf %142, %139 : vector<16x16xf32>
    %144 = arith.select %141, %139, %143 : vector<16x16xi1>, vector<16x16xf32>
    %cst_55 = arith.constant 0.000000e+00 : f32
    %145 = vector.broadcast %cst_55 : f32 to vector<16x16xf32>
    %146 = arith.cmpf ogt, %0, %145 : vector<16x16xf32>
    %cst_56 = arith.constant -1.000000e+30 : f32
    %147 = vector.broadcast %cst_56 : f32 to vector<16x16xf32>
    %148 = arith.select %146, %144, %147 : vector<16x16xi1>, vector<16x16xf32>
    %cst_57 = arith.constant dense<0xFF800000> : vector<16xf32>
    %149 = vector.multi_reduction <maximumf>, %148, %cst_57 [1] : vector<16x16xf32> to vector<16xf32>
    %150 = vector.shape_cast %149 : vector<16xf32> to vector<16x1xf32>
    %151 = vector.broadcast %150 : vector<16x1xf32> to vector<16x16xf32>
    %152 = arith.subf %148, %151 : vector<16x16xf32>
    %153 = math.exp %152 : vector<16x16xf32>
    %cst_58 = arith.constant dense<0.000000e+00> : vector<16xf32>
    %154 = vector.multi_reduction <add>, %153, %cst_58 [1] : vector<16x16xf32> to vector<16xf32>
    %155 = vector.shape_cast %154 : vector<16xf32> to vector<16x1xf32>
    %156 = tpu.reciprocal %155 {approx = true} : vector<16x1xf32> -> vector<16x1xf32>
    %157 = vector.broadcast %156 : vector<16x1xf32> to vector<16x16xf32>
    %158 = arith.mulf %153, %157 : vector<16x16xf32>
    %cst_59 = arith.constant dense<0.000000e+00> : vector<16x16xf32>
    %159 = tpu.matmul %158, %134, %cst_59 {dimension_numbers = #tpu.dot_dimension_numbers<[1], [0], [0], [1], [0, 0, 1, 1], [], []>} : vector<16x16xf32>, vector<16x16xf32>, vector<16x16xf32> -> vector<16x16xf32>
    %160 = arith.addf %133, %159 : vector<16x16xf32>
    %161 = vector.extract_strided_slice %17 {offsets = [0, 80], sizes = [16, 16], strides = [1, 1]} : vector<16x128xf32> to vector<16x16xf32>
    %162 = vector.extract_strided_slice %23 {offsets = [0, 5], sizes = [16, 1], strides = [1, 1]} : vector<16x8xf32> to vector<16x1xf32>
    %163 = vector.extract_strided_slice %24 {offsets = [5, 0], sizes = [1, 16], strides = [1, 1]} : vector<8x16xf32> to vector<1x16xf32>
    %164 = vector.broadcast %162 : vector<16x1xf32> to vector<16x16xf32>
    %165 = vector.broadcast %163 : vector<1x16xf32> to vector<16x16xf32>
    %166 = arith.addf %164, %165 : vector<16x16xf32>
    %cst_60 = arith.constant 0.000000e+00 : f32
    %167 = vector.broadcast %cst_60 : f32 to vector<16x16xf32>
    %168 = arith.cmpf ogt, %166, %167 : vector<16x16xf32>
    %cst_61 = arith.constant 2.000000e-01 : f32
    %169 = vector.broadcast %cst_61 : f32 to vector<16x16xf32>
    %170 = arith.mulf %169, %166 : vector<16x16xf32>
    %171 = arith.select %168, %166, %170 : vector<16x16xi1>, vector<16x16xf32>
    %cst_62 = arith.constant 0.000000e+00 : f32
    %172 = vector.broadcast %cst_62 : f32 to vector<16x16xf32>
    %173 = arith.cmpf ogt, %0, %172 : vector<16x16xf32>
    %cst_63 = arith.constant -1.000000e+30 : f32
    %174 = vector.broadcast %cst_63 : f32 to vector<16x16xf32>
    %175 = arith.select %173, %171, %174 : vector<16x16xi1>, vector<16x16xf32>
    %cst_64 = arith.constant dense<0xFF800000> : vector<16xf32>
    %176 = vector.multi_reduction <maximumf>, %175, %cst_64 [1] : vector<16x16xf32> to vector<16xf32>
    %177 = vector.shape_cast %176 : vector<16xf32> to vector<16x1xf32>
    %178 = vector.broadcast %177 : vector<16x1xf32> to vector<16x16xf32>
    %179 = arith.subf %175, %178 : vector<16x16xf32>
    %180 = math.exp %179 : vector<16x16xf32>
    %cst_65 = arith.constant dense<0.000000e+00> : vector<16xf32>
    %181 = vector.multi_reduction <add>, %180, %cst_65 [1] : vector<16x16xf32> to vector<16xf32>
    %182 = vector.shape_cast %181 : vector<16xf32> to vector<16x1xf32>
    %183 = tpu.reciprocal %182 {approx = true} : vector<16x1xf32> -> vector<16x1xf32>
    %184 = vector.broadcast %183 : vector<16x1xf32> to vector<16x16xf32>
    %185 = arith.mulf %180, %184 : vector<16x16xf32>
    %cst_66 = arith.constant dense<0.000000e+00> : vector<16x16xf32>
    %186 = tpu.matmul %185, %161, %cst_66 {dimension_numbers = #tpu.dot_dimension_numbers<[1], [0], [0], [1], [0, 0, 1, 1], [], []>} : vector<16x16xf32>, vector<16x16xf32>, vector<16x16xf32> -> vector<16x16xf32>
    %187 = arith.addf %160, %186 : vector<16x16xf32>
    %188 = vector.extract_strided_slice %17 {offsets = [0, 96], sizes = [16, 16], strides = [1, 1]} : vector<16x128xf32> to vector<16x16xf32>
    %189 = vector.extract_strided_slice %23 {offsets = [0, 6], sizes = [16, 1], strides = [1, 1]} : vector<16x8xf32> to vector<16x1xf32>
    %190 = vector.extract_strided_slice %24 {offsets = [6, 0], sizes = [1, 16], strides = [1, 1]} : vector<8x16xf32> to vector<1x16xf32>
    %191 = vector.broadcast %189 : vector<16x1xf32> to vector<16x16xf32>
    %192 = vector.broadcast %190 : vector<1x16xf32> to vector<16x16xf32>
    %193 = arith.addf %191, %192 : vector<16x16xf32>
    %cst_67 = arith.constant 0.000000e+00 : f32
    %194 = vector.broadcast %cst_67 : f32 to vector<16x16xf32>
    %195 = arith.cmpf ogt, %193, %194 : vector<16x16xf32>
    %cst_68 = arith.constant 2.000000e-01 : f32
    %196 = vector.broadcast %cst_68 : f32 to vector<16x16xf32>
    %197 = arith.mulf %196, %193 : vector<16x16xf32>
    %198 = arith.select %195, %193, %197 : vector<16x16xi1>, vector<16x16xf32>
    %cst_69 = arith.constant 0.000000e+00 : f32
    %199 = vector.broadcast %cst_69 : f32 to vector<16x16xf32>
    %200 = arith.cmpf ogt, %0, %199 : vector<16x16xf32>
    %cst_70 = arith.constant -1.000000e+30 : f32
    %201 = vector.broadcast %cst_70 : f32 to vector<16x16xf32>
    %202 = arith.select %200, %198, %201 : vector<16x16xi1>, vector<16x16xf32>
    %cst_71 = arith.constant dense<0xFF800000> : vector<16xf32>
    %203 = vector.multi_reduction <maximumf>, %202, %cst_71 [1] : vector<16x16xf32> to vector<16xf32>
    %204 = vector.shape_cast %203 : vector<16xf32> to vector<16x1xf32>
    %205 = vector.broadcast %204 : vector<16x1xf32> to vector<16x16xf32>
    %206 = arith.subf %202, %205 : vector<16x16xf32>
    %207 = math.exp %206 : vector<16x16xf32>
    %cst_72 = arith.constant dense<0.000000e+00> : vector<16xf32>
    %208 = vector.multi_reduction <add>, %207, %cst_72 [1] : vector<16x16xf32> to vector<16xf32>
    %209 = vector.shape_cast %208 : vector<16xf32> to vector<16x1xf32>
    %210 = tpu.reciprocal %209 {approx = true} : vector<16x1xf32> -> vector<16x1xf32>
    %211 = vector.broadcast %210 : vector<16x1xf32> to vector<16x16xf32>
    %212 = arith.mulf %207, %211 : vector<16x16xf32>
    %cst_73 = arith.constant dense<0.000000e+00> : vector<16x16xf32>
    %213 = tpu.matmul %212, %188, %cst_73 {dimension_numbers = #tpu.dot_dimension_numbers<[1], [0], [0], [1], [0, 0, 1, 1], [], []>} : vector<16x16xf32>, vector<16x16xf32>, vector<16x16xf32> -> vector<16x16xf32>
    %214 = arith.addf %187, %213 : vector<16x16xf32>
    %215 = vector.extract_strided_slice %17 {offsets = [0, 112], sizes = [16, 16], strides = [1, 1]} : vector<16x128xf32> to vector<16x16xf32>
    %216 = vector.extract_strided_slice %23 {offsets = [0, 7], sizes = [16, 1], strides = [1, 1]} : vector<16x8xf32> to vector<16x1xf32>
    %217 = vector.extract_strided_slice %24 {offsets = [7, 0], sizes = [1, 16], strides = [1, 1]} : vector<8x16xf32> to vector<1x16xf32>
    %218 = vector.broadcast %216 : vector<16x1xf32> to vector<16x16xf32>
    %219 = vector.broadcast %217 : vector<1x16xf32> to vector<16x16xf32>
    %220 = arith.addf %218, %219 : vector<16x16xf32>
    %cst_74 = arith.constant 0.000000e+00 : f32
    %221 = vector.broadcast %cst_74 : f32 to vector<16x16xf32>
    %222 = arith.cmpf ogt, %220, %221 : vector<16x16xf32>
    %cst_75 = arith.constant 2.000000e-01 : f32
    %223 = vector.broadcast %cst_75 : f32 to vector<16x16xf32>
    %224 = arith.mulf %223, %220 : vector<16x16xf32>
    %225 = arith.select %222, %220, %224 : vector<16x16xi1>, vector<16x16xf32>
    %cst_76 = arith.constant 0.000000e+00 : f32
    %226 = vector.broadcast %cst_76 : f32 to vector<16x16xf32>
    %227 = arith.cmpf ogt, %0, %226 : vector<16x16xf32>
    %cst_77 = arith.constant -1.000000e+30 : f32
    %228 = vector.broadcast %cst_77 : f32 to vector<16x16xf32>
    %229 = arith.select %227, %225, %228 : vector<16x16xi1>, vector<16x16xf32>
    %cst_78 = arith.constant dense<0xFF800000> : vector<16xf32>
    %230 = vector.multi_reduction <maximumf>, %229, %cst_78 [1] : vector<16x16xf32> to vector<16xf32>
    %231 = vector.shape_cast %230 : vector<16xf32> to vector<16x1xf32>
    %232 = vector.broadcast %231 : vector<16x1xf32> to vector<16x16xf32>
    %233 = arith.subf %229, %232 : vector<16x16xf32>
    %234 = math.exp %233 : vector<16x16xf32>
    %cst_79 = arith.constant dense<0.000000e+00> : vector<16xf32>
    %235 = vector.multi_reduction <add>, %234, %cst_79 [1] : vector<16x16xf32> to vector<16xf32>
    %236 = vector.shape_cast %235 : vector<16xf32> to vector<16x1xf32>
    %237 = tpu.reciprocal %236 {approx = true} : vector<16x1xf32> -> vector<16x1xf32>
    %238 = vector.broadcast %237 : vector<16x1xf32> to vector<16x16xf32>
    %239 = arith.mulf %234, %238 : vector<16x16xf32>
    %cst_80 = arith.constant dense<0.000000e+00> : vector<16x16xf32>
    %240 = tpu.matmul %239, %215, %cst_80 {dimension_numbers = #tpu.dot_dimension_numbers<[1], [0], [0], [1], [0, 0, 1, 1], [], []>} : vector<16x16xf32>, vector<16x16xf32>, vector<16x16xf32> -> vector<16x16xf32>
    %241 = arith.addf %214, %240 : vector<16x16xf32>
    %cst_81 = arith.constant 1.250000e-01 : f32
    %242 = vector.broadcast %cst_81 : f32 to vector<16x16xf32>
    %243 = arith.mulf %241, %242 : vector<16x16xf32>
    %c0_82 = arith.constant 0 : index
    %c0_83 = arith.constant 0 : index
    %c0_84 = arith.constant 0 : index
    %244 = vector.load %arg10[%c0_82, %c0_83, %c0_84] : memref<3x1x16xf32, #tpu.memory_space<vmem>>, vector<1x1x16xf32>
    %245 = vector.shape_cast %244 : vector<1x1x16xf32> to vector<1x16xf32>
    %246 = vector.broadcast %245 : vector<1x16xf32> to vector<16x16xf32>
    %247 = arith.addf %243, %246 : vector<16x16xf32>
    %248 = arith.truncf %247 : vector<16x16xf32> to vector<16x16xbf16>
    %c0_85 = arith.constant 0 : index
    %c0_86 = arith.constant 0 : index
    %c0_87 = arith.constant 0 : index
    %249 = vector.load %arg5[%c0_85, %c0_86, %c0_87] : memref<2x16x128xbf16, #tpu.memory_space<vmem>>, vector<1x16x128xbf16>
    %250 = vector.shape_cast %249 : vector<1x16x128xbf16> to vector<16x128xbf16>
    %cst_88 = arith.constant dense<0.000000e+00> : vector<16x128xf32>
    %251 = tpu.matmul %248, %250, %cst_88 {dimension_numbers = #tpu.dot_dimension_numbers<[1], [0], [0], [1], [0, 0, 1, 1], [], []>} : vector<16x16xbf16>, vector<16x128xbf16>, vector<16x128xf32> -> vector<16x128xf32>
    %252 = arith.truncf %251 : vector<16x128xf32> to vector<16x128xbf16>
    %cst_89 = arith.constant dense<0.000000e+00> : vector<16x128xf32>
    %253 = tpu.matmul %2, %252, %cst_89 {dimension_numbers = #tpu.dot_dimension_numbers<[1], [0], [0], [1], [0, 0, 1, 1], [], []>} : vector<16x16xbf16>, vector<16x128xbf16>, vector<16x128xf32> -> vector<16x128xf32>
    %c1 = arith.constant 1 : index
    %c0_90 = arith.constant 0 : index
    %c0_91 = arith.constant 0 : index
    %254 = vector.load %arg6[%c1, %c0_90, %c0_91] : memref<3x1x128xf32, #tpu.memory_space<vmem>>, vector<1x1x128xf32>
    %255 = vector.shape_cast %254 : vector<1x1x128xf32> to vector<1x128xf32>
    %256 = vector.broadcast %255 : vector<1x128xf32> to vector<16x128xf32>
    %257 = arith.addf %253, %256 : vector<16x128xf32>
    %cst_92 = arith.constant 0.000000e+00 : f32
    %258 = vector.broadcast %cst_92 : f32 to vector<16x128xf32>
    %259 = arith.maximumf %257, %258 : vector<16x128xf32>
    %260 = arith.truncf %259 : vector<16x128xf32> to vector<16x128xbf16>
    %c1_93 = arith.constant 1 : index
    %c0_94 = arith.constant 0 : index
    %c0_95 = arith.constant 0 : index
    %261 = vector.load %arg7[%c1_93, %c0_94, %c0_95] : memref<3x128x128xbf16, #tpu.memory_space<vmem>>, vector<1x128x128xbf16>
    %262 = vector.shape_cast %261 : vector<1x128x128xbf16> to vector<128x128xbf16>
    %cst_96 = arith.constant dense<0.000000e+00> : vector<16x128xf32>
    %263 = tpu.matmul %260, %262, %cst_96 {dimension_numbers = #tpu.dot_dimension_numbers<[1], [0], [0], [1], [0, 0, 1, 1], [], []>} : vector<16x128xbf16>, vector<128x128xbf16>, vector<16x128xf32> -> vector<16x128xf32>
    %c1_97 = arith.constant 1 : index
    %c0_98 = arith.constant 0 : index
    %c0_99 = arith.constant 0 : index
    %264 = vector.load %arg8[%c1_97, %c0_98, %c0_99] : memref<3x128x8xf32, #tpu.memory_space<vmem>>, vector<1x128x8xf32>
    %265 = vector.shape_cast %264 : vector<1x128x8xf32> to vector<128x8xf32>
    %cst_100 = arith.constant dense<0.000000e+00> : vector<16x8xf32>
    %266 = tpu.matmul %263, %265, %cst_100 {dimension_numbers = #tpu.dot_dimension_numbers<[1], [0], [0], [1], [0, 0, 1, 1], [], []>} : vector<16x128xf32>, vector<128x8xf32>, vector<16x8xf32> -> vector<16x8xf32>
    %c1_101 = arith.constant 1 : index
    %c0_102 = arith.constant 0 : index
    %c0_103 = arith.constant 0 : index
    %267 = vector.load %arg9[%c1_101, %c0_102, %c0_103] : memref<3x128x8xf32, #tpu.memory_space<vmem>>, vector<1x128x8xf32>
    %268 = vector.shape_cast %267 : vector<1x128x8xf32> to vector<128x8xf32>
    %cst_104 = arith.constant dense<0.000000e+00> : vector<16x8xf32>
    %269 = tpu.matmul %263, %268, %cst_104 {dimension_numbers = #tpu.dot_dimension_numbers<[1], [0], [0], [1], [0, 0, 1, 1], [], []>} : vector<16x128xf32>, vector<128x8xf32>, vector<16x8xf32> -> vector<16x8xf32>
    %270 = tpu.transpose %266, [1, 0] : vector<16x8xf32> -> vector<8x16xf32>
    %cst_105 = arith.constant 0.000000e+00 : f32
    %271 = vector.broadcast %cst_105 : f32 to vector<16x16xf32>
    %272 = vector.extract_strided_slice %263 {offsets = [0, 0], sizes = [16, 16], strides = [1, 1]} : vector<16x128xf32> to vector<16x16xf32>
    %273 = vector.extract_strided_slice %269 {offsets = [0, 0], sizes = [16, 1], strides = [1, 1]} : vector<16x8xf32> to vector<16x1xf32>
    %274 = vector.extract_strided_slice %270 {offsets = [0, 0], sizes = [1, 16], strides = [1, 1]} : vector<8x16xf32> to vector<1x16xf32>
    %275 = vector.broadcast %273 : vector<16x1xf32> to vector<16x16xf32>
    %276 = vector.broadcast %274 : vector<1x16xf32> to vector<16x16xf32>
    %277 = arith.addf %275, %276 : vector<16x16xf32>
    %cst_106 = arith.constant 0.000000e+00 : f32
    %278 = vector.broadcast %cst_106 : f32 to vector<16x16xf32>
    %279 = arith.cmpf ogt, %277, %278 : vector<16x16xf32>
    %cst_107 = arith.constant 2.000000e-01 : f32
    %280 = vector.broadcast %cst_107 : f32 to vector<16x16xf32>
    %281 = arith.mulf %280, %277 : vector<16x16xf32>
    %282 = arith.select %279, %277, %281 : vector<16x16xi1>, vector<16x16xf32>
    %cst_108 = arith.constant 0.000000e+00 : f32
    %283 = vector.broadcast %cst_108 : f32 to vector<16x16xf32>
    %284 = arith.cmpf ogt, %0, %283 : vector<16x16xf32>
    %cst_109 = arith.constant -1.000000e+30 : f32
    %285 = vector.broadcast %cst_109 : f32 to vector<16x16xf32>
    %286 = arith.select %284, %282, %285 : vector<16x16xi1>, vector<16x16xf32>
    %cst_110 = arith.constant dense<0xFF800000> : vector<16xf32>
    %287 = vector.multi_reduction <maximumf>, %286, %cst_110 [1] : vector<16x16xf32> to vector<16xf32>
    %288 = vector.shape_cast %287 : vector<16xf32> to vector<16x1xf32>
    %289 = vector.broadcast %288 : vector<16x1xf32> to vector<16x16xf32>
    %290 = arith.subf %286, %289 : vector<16x16xf32>
    %291 = math.exp %290 : vector<16x16xf32>
    %cst_111 = arith.constant dense<0.000000e+00> : vector<16xf32>
    %292 = vector.multi_reduction <add>, %291, %cst_111 [1] : vector<16x16xf32> to vector<16xf32>
    %293 = vector.shape_cast %292 : vector<16xf32> to vector<16x1xf32>
    %294 = tpu.reciprocal %293 {approx = true} : vector<16x1xf32> -> vector<16x1xf32>
    %295 = vector.broadcast %294 : vector<16x1xf32> to vector<16x16xf32>
    %296 = arith.mulf %291, %295 : vector<16x16xf32>
    %cst_112 = arith.constant dense<0.000000e+00> : vector<16x16xf32>
    %297 = tpu.matmul %296, %272, %cst_112 {dimension_numbers = #tpu.dot_dimension_numbers<[1], [0], [0], [1], [0, 0, 1, 1], [], []>} : vector<16x16xf32>, vector<16x16xf32>, vector<16x16xf32> -> vector<16x16xf32>
    %298 = arith.addf %271, %297 : vector<16x16xf32>
    %299 = vector.extract_strided_slice %263 {offsets = [0, 16], sizes = [16, 16], strides = [1, 1]} : vector<16x128xf32> to vector<16x16xf32>
    %300 = vector.extract_strided_slice %269 {offsets = [0, 1], sizes = [16, 1], strides = [1, 1]} : vector<16x8xf32> to vector<16x1xf32>
    %301 = vector.extract_strided_slice %270 {offsets = [1, 0], sizes = [1, 16], strides = [1, 1]} : vector<8x16xf32> to vector<1x16xf32>
    %302 = vector.broadcast %300 : vector<16x1xf32> to vector<16x16xf32>
    %303 = vector.broadcast %301 : vector<1x16xf32> to vector<16x16xf32>
    %304 = arith.addf %302, %303 : vector<16x16xf32>
    %cst_113 = arith.constant 0.000000e+00 : f32
    %305 = vector.broadcast %cst_113 : f32 to vector<16x16xf32>
    %306 = arith.cmpf ogt, %304, %305 : vector<16x16xf32>
    %cst_114 = arith.constant 2.000000e-01 : f32
    %307 = vector.broadcast %cst_114 : f32 to vector<16x16xf32>
    %308 = arith.mulf %307, %304 : vector<16x16xf32>
    %309 = arith.select %306, %304, %308 : vector<16x16xi1>, vector<16x16xf32>
    %cst_115 = arith.constant 0.000000e+00 : f32
    %310 = vector.broadcast %cst_115 : f32 to vector<16x16xf32>
    %311 = arith.cmpf ogt, %0, %310 : vector<16x16xf32>
    %cst_116 = arith.constant -1.000000e+30 : f32
    %312 = vector.broadcast %cst_116 : f32 to vector<16x16xf32>
    %313 = arith.select %311, %309, %312 : vector<16x16xi1>, vector<16x16xf32>
    %cst_117 = arith.constant dense<0xFF800000> : vector<16xf32>
    %314 = vector.multi_reduction <maximumf>, %313, %cst_117 [1] : vector<16x16xf32> to vector<16xf32>
    %315 = vector.shape_cast %314 : vector<16xf32> to vector<16x1xf32>
    %316 = vector.broadcast %315 : vector<16x1xf32> to vector<16x16xf32>
    %317 = arith.subf %313, %316 : vector<16x16xf32>
    %318 = math.exp %317 : vector<16x16xf32>
    %cst_118 = arith.constant dense<0.000000e+00> : vector<16xf32>
    %319 = vector.multi_reduction <add>, %318, %cst_118 [1] : vector<16x16xf32> to vector<16xf32>
    %320 = vector.shape_cast %319 : vector<16xf32> to vector<16x1xf32>
    %321 = tpu.reciprocal %320 {approx = true} : vector<16x1xf32> -> vector<16x1xf32>
    %322 = vector.broadcast %321 : vector<16x1xf32> to vector<16x16xf32>
    %323 = arith.mulf %318, %322 : vector<16x16xf32>
    %cst_119 = arith.constant dense<0.000000e+00> : vector<16x16xf32>
    %324 = tpu.matmul %323, %299, %cst_119 {dimension_numbers = #tpu.dot_dimension_numbers<[1], [0], [0], [1], [0, 0, 1, 1], [], []>} : vector<16x16xf32>, vector<16x16xf32>, vector<16x16xf32> -> vector<16x16xf32>
    %325 = arith.addf %298, %324 : vector<16x16xf32>
    %326 = vector.extract_strided_slice %263 {offsets = [0, 32], sizes = [16, 16], strides = [1, 1]} : vector<16x128xf32> to vector<16x16xf32>
    %327 = vector.extract_strided_slice %269 {offsets = [0, 2], sizes = [16, 1], strides = [1, 1]} : vector<16x8xf32> to vector<16x1xf32>
    %328 = vector.extract_strided_slice %270 {offsets = [2, 0], sizes = [1, 16], strides = [1, 1]} : vector<8x16xf32> to vector<1x16xf32>
    %329 = vector.broadcast %327 : vector<16x1xf32> to vector<16x16xf32>
    %330 = vector.broadcast %328 : vector<1x16xf32> to vector<16x16xf32>
    %331 = arith.addf %329, %330 : vector<16x16xf32>
    %cst_120 = arith.constant 0.000000e+00 : f32
    %332 = vector.broadcast %cst_120 : f32 to vector<16x16xf32>
    %333 = arith.cmpf ogt, %331, %332 : vector<16x16xf32>
    %cst_121 = arith.constant 2.000000e-01 : f32
    %334 = vector.broadcast %cst_121 : f32 to vector<16x16xf32>
    %335 = arith.mulf %334, %331 : vector<16x16xf32>
    %336 = arith.select %333, %331, %335 : vector<16x16xi1>, vector<16x16xf32>
    %cst_122 = arith.constant 0.000000e+00 : f32
    %337 = vector.broadcast %cst_122 : f32 to vector<16x16xf32>
    %338 = arith.cmpf ogt, %0, %337 : vector<16x16xf32>
    %cst_123 = arith.constant -1.000000e+30 : f32
    %339 = vector.broadcast %cst_123 : f32 to vector<16x16xf32>
    %340 = arith.select %338, %336, %339 : vector<16x16xi1>, vector<16x16xf32>
    %cst_124 = arith.constant dense<0xFF800000> : vector<16xf32>
    %341 = vector.multi_reduction <maximumf>, %340, %cst_124 [1] : vector<16x16xf32> to vector<16xf32>
    %342 = vector.shape_cast %341 : vector<16xf32> to vector<16x1xf32>
    %343 = vector.broadcast %342 : vector<16x1xf32> to vector<16x16xf32>
    %344 = arith.subf %340, %343 : vector<16x16xf32>
    %345 = math.exp %344 : vector<16x16xf32>
    %cst_125 = arith.constant dense<0.000000e+00> : vector<16xf32>
    %346 = vector.multi_reduction <add>, %345, %cst_125 [1] : vector<16x16xf32> to vector<16xf32>
    %347 = vector.shape_cast %346 : vector<16xf32> to vector<16x1xf32>
    %348 = tpu.reciprocal %347 {approx = true} : vector<16x1xf32> -> vector<16x1xf32>
    %349 = vector.broadcast %348 : vector<16x1xf32> to vector<16x16xf32>
    %350 = arith.mulf %345, %349 : vector<16x16xf32>
    %cst_126 = arith.constant dense<0.000000e+00> : vector<16x16xf32>
    %351 = tpu.matmul %350, %326, %cst_126 {dimension_numbers = #tpu.dot_dimension_numbers<[1], [0], [0], [1], [0, 0, 1, 1], [], []>} : vector<16x16xf32>, vector<16x16xf32>, vector<16x16xf32> -> vector<16x16xf32>
    %352 = arith.addf %325, %351 : vector<16x16xf32>
    %353 = vector.extract_strided_slice %263 {offsets = [0, 48], sizes = [16, 16], strides = [1, 1]} : vector<16x128xf32> to vector<16x16xf32>
    %354 = vector.extract_strided_slice %269 {offsets = [0, 3], sizes = [16, 1], strides = [1, 1]} : vector<16x8xf32> to vector<16x1xf32>
    %355 = vector.extract_strided_slice %270 {offsets = [3, 0], sizes = [1, 16], strides = [1, 1]} : vector<8x16xf32> to vector<1x16xf32>
    %356 = vector.broadcast %354 : vector<16x1xf32> to vector<16x16xf32>
    %357 = vector.broadcast %355 : vector<1x16xf32> to vector<16x16xf32>
    %358 = arith.addf %356, %357 : vector<16x16xf32>
    %cst_127 = arith.constant 0.000000e+00 : f32
    %359 = vector.broadcast %cst_127 : f32 to vector<16x16xf32>
    %360 = arith.cmpf ogt, %358, %359 : vector<16x16xf32>
    %cst_128 = arith.constant 2.000000e-01 : f32
    %361 = vector.broadcast %cst_128 : f32 to vector<16x16xf32>
    %362 = arith.mulf %361, %358 : vector<16x16xf32>
    %363 = arith.select %360, %358, %362 : vector<16x16xi1>, vector<16x16xf32>
    %cst_129 = arith.constant 0.000000e+00 : f32
    %364 = vector.broadcast %cst_129 : f32 to vector<16x16xf32>
    %365 = arith.cmpf ogt, %0, %364 : vector<16x16xf32>
    %cst_130 = arith.constant -1.000000e+30 : f32
    %366 = vector.broadcast %cst_130 : f32 to vector<16x16xf32>
    %367 = arith.select %365, %363, %366 : vector<16x16xi1>, vector<16x16xf32>
    %cst_131 = arith.constant dense<0xFF800000> : vector<16xf32>
    %368 = vector.multi_reduction <maximumf>, %367, %cst_131 [1] : vector<16x16xf32> to vector<16xf32>
    %369 = vector.shape_cast %368 : vector<16xf32> to vector<16x1xf32>
    %370 = vector.broadcast %369 : vector<16x1xf32> to vector<16x16xf32>
    %371 = arith.subf %367, %370 : vector<16x16xf32>
    %372 = math.exp %371 : vector<16x16xf32>
    %cst_132 = arith.constant dense<0.000000e+00> : vector<16xf32>
    %373 = vector.multi_reduction <add>, %372, %cst_132 [1] : vector<16x16xf32> to vector<16xf32>
    %374 = vector.shape_cast %373 : vector<16xf32> to vector<16x1xf32>
    %375 = tpu.reciprocal %374 {approx = true} : vector<16x1xf32> -> vector<16x1xf32>
    %376 = vector.broadcast %375 : vector<16x1xf32> to vector<16x16xf32>
    %377 = arith.mulf %372, %376 : vector<16x16xf32>
    %cst_133 = arith.constant dense<0.000000e+00> : vector<16x16xf32>
    %378 = tpu.matmul %377, %353, %cst_133 {dimension_numbers = #tpu.dot_dimension_numbers<[1], [0], [0], [1], [0, 0, 1, 1], [], []>} : vector<16x16xf32>, vector<16x16xf32>, vector<16x16xf32> -> vector<16x16xf32>
    %379 = arith.addf %352, %378 : vector<16x16xf32>
    %380 = vector.extract_strided_slice %263 {offsets = [0, 64], sizes = [16, 16], strides = [1, 1]} : vector<16x128xf32> to vector<16x16xf32>
    %381 = vector.extract_strided_slice %269 {offsets = [0, 4], sizes = [16, 1], strides = [1, 1]} : vector<16x8xf32> to vector<16x1xf32>
    %382 = vector.extract_strided_slice %270 {offsets = [4, 0], sizes = [1, 16], strides = [1, 1]} : vector<8x16xf32> to vector<1x16xf32>
    %383 = vector.broadcast %381 : vector<16x1xf32> to vector<16x16xf32>
    %384 = vector.broadcast %382 : vector<1x16xf32> to vector<16x16xf32>
    %385 = arith.addf %383, %384 : vector<16x16xf32>
    %cst_134 = arith.constant 0.000000e+00 : f32
    %386 = vector.broadcast %cst_134 : f32 to vector<16x16xf32>
    %387 = arith.cmpf ogt, %385, %386 : vector<16x16xf32>
    %cst_135 = arith.constant 2.000000e-01 : f32
    %388 = vector.broadcast %cst_135 : f32 to vector<16x16xf32>
    %389 = arith.mulf %388, %385 : vector<16x16xf32>
    %390 = arith.select %387, %385, %389 : vector<16x16xi1>, vector<16x16xf32>
    %cst_136 = arith.constant 0.000000e+00 : f32
    %391 = vector.broadcast %cst_136 : f32 to vector<16x16xf32>
    %392 = arith.cmpf ogt, %0, %391 : vector<16x16xf32>
    %cst_137 = arith.constant -1.000000e+30 : f32
    %393 = vector.broadcast %cst_137 : f32 to vector<16x16xf32>
    %394 = arith.select %392, %390, %393 : vector<16x16xi1>, vector<16x16xf32>
    %cst_138 = arith.constant dense<0xFF800000> : vector<16xf32>
    %395 = vector.multi_reduction <maximumf>, %394, %cst_138 [1] : vector<16x16xf32> to vector<16xf32>
    %396 = vector.shape_cast %395 : vector<16xf32> to vector<16x1xf32>
    %397 = vector.broadcast %396 : vector<16x1xf32> to vector<16x16xf32>
    %398 = arith.subf %394, %397 : vector<16x16xf32>
    %399 = math.exp %398 : vector<16x16xf32>
    %cst_139 = arith.constant dense<0.000000e+00> : vector<16xf32>
    %400 = vector.multi_reduction <add>, %399, %cst_139 [1] : vector<16x16xf32> to vector<16xf32>
    %401 = vector.shape_cast %400 : vector<16xf32> to vector<16x1xf32>
    %402 = tpu.reciprocal %401 {approx = true} : vector<16x1xf32> -> vector<16x1xf32>
    %403 = vector.broadcast %402 : vector<16x1xf32> to vector<16x16xf32>
    %404 = arith.mulf %399, %403 : vector<16x16xf32>
    %cst_140 = arith.constant dense<0.000000e+00> : vector<16x16xf32>
    %405 = tpu.matmul %404, %380, %cst_140 {dimension_numbers = #tpu.dot_dimension_numbers<[1], [0], [0], [1], [0, 0, 1, 1], [], []>} : vector<16x16xf32>, vector<16x16xf32>, vector<16x16xf32> -> vector<16x16xf32>
    %406 = arith.addf %379, %405 : vector<16x16xf32>
    %407 = vector.extract_strided_slice %263 {offsets = [0, 80], sizes = [16, 16], strides = [1, 1]} : vector<16x128xf32> to vector<16x16xf32>
    %408 = vector.extract_strided_slice %269 {offsets = [0, 5], sizes = [16, 1], strides = [1, 1]} : vector<16x8xf32> to vector<16x1xf32>
    %409 = vector.extract_strided_slice %270 {offsets = [5, 0], sizes = [1, 16], strides = [1, 1]} : vector<8x16xf32> to vector<1x16xf32>
    %410 = vector.broadcast %408 : vector<16x1xf32> to vector<16x16xf32>
    %411 = vector.broadcast %409 : vector<1x16xf32> to vector<16x16xf32>
    %412 = arith.addf %410, %411 : vector<16x16xf32>
    %cst_141 = arith.constant 0.000000e+00 : f32
    %413 = vector.broadcast %cst_141 : f32 to vector<16x16xf32>
    %414 = arith.cmpf ogt, %412, %413 : vector<16x16xf32>
    %cst_142 = arith.constant 2.000000e-01 : f32
    %415 = vector.broadcast %cst_142 : f32 to vector<16x16xf32>
    %416 = arith.mulf %415, %412 : vector<16x16xf32>
    %417 = arith.select %414, %412, %416 : vector<16x16xi1>, vector<16x16xf32>
    %cst_143 = arith.constant 0.000000e+00 : f32
    %418 = vector.broadcast %cst_143 : f32 to vector<16x16xf32>
    %419 = arith.cmpf ogt, %0, %418 : vector<16x16xf32>
    %cst_144 = arith.constant -1.000000e+30 : f32
    %420 = vector.broadcast %cst_144 : f32 to vector<16x16xf32>
    %421 = arith.select %419, %417, %420 : vector<16x16xi1>, vector<16x16xf32>
    %cst_145 = arith.constant dense<0xFF800000> : vector<16xf32>
    %422 = vector.multi_reduction <maximumf>, %421, %cst_145 [1] : vector<16x16xf32> to vector<16xf32>
    %423 = vector.shape_cast %422 : vector<16xf32> to vector<16x1xf32>
    %424 = vector.broadcast %423 : vector<16x1xf32> to vector<16x16xf32>
    %425 = arith.subf %421, %424 : vector<16x16xf32>
    %426 = math.exp %425 : vector<16x16xf32>
    %cst_146 = arith.constant dense<0.000000e+00> : vector<16xf32>
    %427 = vector.multi_reduction <add>, %426, %cst_146 [1] : vector<16x16xf32> to vector<16xf32>
    %428 = vector.shape_cast %427 : vector<16xf32> to vector<16x1xf32>
    %429 = tpu.reciprocal %428 {approx = true} : vector<16x1xf32> -> vector<16x1xf32>
    %430 = vector.broadcast %429 : vector<16x1xf32> to vector<16x16xf32>
    %431 = arith.mulf %426, %430 : vector<16x16xf32>
    %cst_147 = arith.constant dense<0.000000e+00> : vector<16x16xf32>
    %432 = tpu.matmul %431, %407, %cst_147 {dimension_numbers = #tpu.dot_dimension_numbers<[1], [0], [0], [1], [0, 0, 1, 1], [], []>} : vector<16x16xf32>, vector<16x16xf32>, vector<16x16xf32> -> vector<16x16xf32>
    %433 = arith.addf %406, %432 : vector<16x16xf32>
    %434 = vector.extract_strided_slice %263 {offsets = [0, 96], sizes = [16, 16], strides = [1, 1]} : vector<16x128xf32> to vector<16x16xf32>
    %435 = vector.extract_strided_slice %269 {offsets = [0, 6], sizes = [16, 1], strides = [1, 1]} : vector<16x8xf32> to vector<16x1xf32>
    %436 = vector.extract_strided_slice %270 {offsets = [6, 0], sizes = [1, 16], strides = [1, 1]} : vector<8x16xf32> to vector<1x16xf32>
    %437 = vector.broadcast %435 : vector<16x1xf32> to vector<16x16xf32>
    %438 = vector.broadcast %436 : vector<1x16xf32> to vector<16x16xf32>
    %439 = arith.addf %437, %438 : vector<16x16xf32>
    %cst_148 = arith.constant 0.000000e+00 : f32
    %440 = vector.broadcast %cst_148 : f32 to vector<16x16xf32>
    %441 = arith.cmpf ogt, %439, %440 : vector<16x16xf32>
    %cst_149 = arith.constant 2.000000e-01 : f32
    %442 = vector.broadcast %cst_149 : f32 to vector<16x16xf32>
    %443 = arith.mulf %442, %439 : vector<16x16xf32>
    %444 = arith.select %441, %439, %443 : vector<16x16xi1>, vector<16x16xf32>
    %cst_150 = arith.constant 0.000000e+00 : f32
    %445 = vector.broadcast %cst_150 : f32 to vector<16x16xf32>
    %446 = arith.cmpf ogt, %0, %445 : vector<16x16xf32>
    %cst_151 = arith.constant -1.000000e+30 : f32
    %447 = vector.broadcast %cst_151 : f32 to vector<16x16xf32>
    %448 = arith.select %446, %444, %447 : vector<16x16xi1>, vector<16x16xf32>
    %cst_152 = arith.constant dense<0xFF800000> : vector<16xf32>
    %449 = vector.multi_reduction <maximumf>, %448, %cst_152 [1] : vector<16x16xf32> to vector<16xf32>
    %450 = vector.shape_cast %449 : vector<16xf32> to vector<16x1xf32>
    %451 = vector.broadcast %450 : vector<16x1xf32> to vector<16x16xf32>
    %452 = arith.subf %448, %451 : vector<16x16xf32>
    %453 = math.exp %452 : vector<16x16xf32>
    %cst_153 = arith.constant dense<0.000000e+00> : vector<16xf32>
    %454 = vector.multi_reduction <add>, %453, %cst_153 [1] : vector<16x16xf32> to vector<16xf32>
    %455 = vector.shape_cast %454 : vector<16xf32> to vector<16x1xf32>
    %456 = tpu.reciprocal %455 {approx = true} : vector<16x1xf32> -> vector<16x1xf32>
    %457 = vector.broadcast %456 : vector<16x1xf32> to vector<16x16xf32>
    %458 = arith.mulf %453, %457 : vector<16x16xf32>
    %cst_154 = arith.constant dense<0.000000e+00> : vector<16x16xf32>
    %459 = tpu.matmul %458, %434, %cst_154 {dimension_numbers = #tpu.dot_dimension_numbers<[1], [0], [0], [1], [0, 0, 1, 1], [], []>} : vector<16x16xf32>, vector<16x16xf32>, vector<16x16xf32> -> vector<16x16xf32>
    %460 = arith.addf %433, %459 : vector<16x16xf32>
    %461 = vector.extract_strided_slice %263 {offsets = [0, 112], sizes = [16, 16], strides = [1, 1]} : vector<16x128xf32> to vector<16x16xf32>
    %462 = vector.extract_strided_slice %269 {offsets = [0, 7], sizes = [16, 1], strides = [1, 1]} : vector<16x8xf32> to vector<16x1xf32>
    %463 = vector.extract_strided_slice %270 {offsets = [7, 0], sizes = [1, 16], strides = [1, 1]} : vector<8x16xf32> to vector<1x16xf32>
    %464 = vector.broadcast %462 : vector<16x1xf32> to vector<16x16xf32>
    %465 = vector.broadcast %463 : vector<1x16xf32> to vector<16x16xf32>
    %466 = arith.addf %464, %465 : vector<16x16xf32>
    %cst_155 = arith.constant 0.000000e+00 : f32
    %467 = vector.broadcast %cst_155 : f32 to vector<16x16xf32>
    %468 = arith.cmpf ogt, %466, %467 : vector<16x16xf32>
    %cst_156 = arith.constant 2.000000e-01 : f32
    %469 = vector.broadcast %cst_156 : f32 to vector<16x16xf32>
    %470 = arith.mulf %469, %466 : vector<16x16xf32>
    %471 = arith.select %468, %466, %470 : vector<16x16xi1>, vector<16x16xf32>
    %cst_157 = arith.constant 0.000000e+00 : f32
    %472 = vector.broadcast %cst_157 : f32 to vector<16x16xf32>
    %473 = arith.cmpf ogt, %0, %472 : vector<16x16xf32>
    %cst_158 = arith.constant -1.000000e+30 : f32
    %474 = vector.broadcast %cst_158 : f32 to vector<16x16xf32>
    %475 = arith.select %473, %471, %474 : vector<16x16xi1>, vector<16x16xf32>
    %cst_159 = arith.constant dense<0xFF800000> : vector<16xf32>
    %476 = vector.multi_reduction <maximumf>, %475, %cst_159 [1] : vector<16x16xf32> to vector<16xf32>
    %477 = vector.shape_cast %476 : vector<16xf32> to vector<16x1xf32>
    %478 = vector.broadcast %477 : vector<16x1xf32> to vector<16x16xf32>
    %479 = arith.subf %475, %478 : vector<16x16xf32>
    %480 = math.exp %479 : vector<16x16xf32>
    %cst_160 = arith.constant dense<0.000000e+00> : vector<16xf32>
    %481 = vector.multi_reduction <add>, %480, %cst_160 [1] : vector<16x16xf32> to vector<16xf32>
    %482 = vector.shape_cast %481 : vector<16xf32> to vector<16x1xf32>
    %483 = tpu.reciprocal %482 {approx = true} : vector<16x1xf32> -> vector<16x1xf32>
    %484 = vector.broadcast %483 : vector<16x1xf32> to vector<16x16xf32>
    %485 = arith.mulf %480, %484 : vector<16x16xf32>
    %cst_161 = arith.constant dense<0.000000e+00> : vector<16x16xf32>
    %486 = tpu.matmul %485, %461, %cst_161 {dimension_numbers = #tpu.dot_dimension_numbers<[1], [0], [0], [1], [0, 0, 1, 1], [], []>} : vector<16x16xf32>, vector<16x16xf32>, vector<16x16xf32> -> vector<16x16xf32>
    %487 = arith.addf %460, %486 : vector<16x16xf32>
    %cst_162 = arith.constant 1.250000e-01 : f32
    %488 = vector.broadcast %cst_162 : f32 to vector<16x16xf32>
    %489 = arith.mulf %487, %488 : vector<16x16xf32>
    %c1_163 = arith.constant 1 : index
    %c0_164 = arith.constant 0 : index
    %c0_165 = arith.constant 0 : index
    %490 = vector.load %arg10[%c1_163, %c0_164, %c0_165] : memref<3x1x16xf32, #tpu.memory_space<vmem>>, vector<1x1x16xf32>
    %491 = vector.shape_cast %490 : vector<1x1x16xf32> to vector<1x16xf32>
    %492 = vector.broadcast %491 : vector<1x16xf32> to vector<16x16xf32>
    %493 = arith.addf %489, %492 : vector<16x16xf32>
    %494 = arith.truncf %493 : vector<16x16xf32> to vector<16x16xbf16>
    %c1_166 = arith.constant 1 : index
    %c0_167 = arith.constant 0 : index
    %c0_168 = arith.constant 0 : index
    %495 = vector.load %arg5[%c1_166, %c0_167, %c0_168] : memref<2x16x128xbf16, #tpu.memory_space<vmem>>, vector<1x16x128xbf16>
    %496 = vector.shape_cast %495 : vector<1x16x128xbf16> to vector<16x128xbf16>
    %cst_169 = arith.constant dense<0.000000e+00> : vector<16x128xf32>
    %497 = tpu.matmul %494, %496, %cst_169 {dimension_numbers = #tpu.dot_dimension_numbers<[1], [0], [0], [1], [0, 0, 1, 1], [], []>} : vector<16x16xbf16>, vector<16x128xbf16>, vector<16x128xf32> -> vector<16x128xf32>
    %498 = arith.truncf %497 : vector<16x128xf32> to vector<16x128xbf16>
    %cst_170 = arith.constant dense<0.000000e+00> : vector<16x128xf32>
    %499 = tpu.matmul %2, %498, %cst_170 {dimension_numbers = #tpu.dot_dimension_numbers<[1], [0], [0], [1], [0, 0, 1, 1], [], []>} : vector<16x16xbf16>, vector<16x128xbf16>, vector<16x128xf32> -> vector<16x128xf32>
    %c2 = arith.constant 2 : index
    %c0_171 = arith.constant 0 : index
    %c0_172 = arith.constant 0 : index
    %500 = vector.load %arg6[%c2, %c0_171, %c0_172] : memref<3x1x128xf32, #tpu.memory_space<vmem>>, vector<1x1x128xf32>
    %501 = vector.shape_cast %500 : vector<1x1x128xf32> to vector<1x128xf32>
    %502 = vector.broadcast %501 : vector<1x128xf32> to vector<16x128xf32>
    %503 = arith.addf %499, %502 : vector<16x128xf32>
    %cst_173 = arith.constant 0.000000e+00 : f32
    %504 = vector.broadcast %cst_173 : f32 to vector<16x128xf32>
    %505 = arith.maximumf %503, %504 : vector<16x128xf32>
    %506 = arith.truncf %505 : vector<16x128xf32> to vector<16x128xbf16>
    %c2_174 = arith.constant 2 : index
    %c0_175 = arith.constant 0 : index
    %c0_176 = arith.constant 0 : index
    %507 = vector.load %arg7[%c2_174, %c0_175, %c0_176] : memref<3x128x128xbf16, #tpu.memory_space<vmem>>, vector<1x128x128xbf16>
    %508 = vector.shape_cast %507 : vector<1x128x128xbf16> to vector<128x128xbf16>
    %cst_177 = arith.constant dense<0.000000e+00> : vector<16x128xf32>
    %509 = tpu.matmul %506, %508, %cst_177 {dimension_numbers = #tpu.dot_dimension_numbers<[1], [0], [0], [1], [0, 0, 1, 1], [], []>} : vector<16x128xbf16>, vector<128x128xbf16>, vector<16x128xf32> -> vector<16x128xf32>
    %c2_178 = arith.constant 2 : index
    %c0_179 = arith.constant 0 : index
    %c0_180 = arith.constant 0 : index
    %510 = vector.load %arg8[%c2_178, %c0_179, %c0_180] : memref<3x128x8xf32, #tpu.memory_space<vmem>>, vector<1x128x8xf32>
    %511 = vector.shape_cast %510 : vector<1x128x8xf32> to vector<128x8xf32>
    %cst_181 = arith.constant dense<0.000000e+00> : vector<16x8xf32>
    %512 = tpu.matmul %509, %511, %cst_181 {dimension_numbers = #tpu.dot_dimension_numbers<[1], [0], [0], [1], [0, 0, 1, 1], [], []>} : vector<16x128xf32>, vector<128x8xf32>, vector<16x8xf32> -> vector<16x8xf32>
    %c2_182 = arith.constant 2 : index
    %c0_183 = arith.constant 0 : index
    %c0_184 = arith.constant 0 : index
    %513 = vector.load %arg9[%c2_182, %c0_183, %c0_184] : memref<3x128x8xf32, #tpu.memory_space<vmem>>, vector<1x128x8xf32>
    %514 = vector.shape_cast %513 : vector<1x128x8xf32> to vector<128x8xf32>
    %cst_185 = arith.constant dense<0.000000e+00> : vector<16x8xf32>
    %515 = tpu.matmul %509, %514, %cst_185 {dimension_numbers = #tpu.dot_dimension_numbers<[1], [0], [0], [1], [0, 0, 1, 1], [], []>} : vector<16x128xf32>, vector<128x8xf32>, vector<16x8xf32> -> vector<16x8xf32>
    %516 = tpu.transpose %512, [1, 0] : vector<16x8xf32> -> vector<8x16xf32>
    %cst_186 = arith.constant 0.000000e+00 : f32
    %517 = vector.broadcast %cst_186 : f32 to vector<16x16xf32>
    %518 = vector.extract_strided_slice %509 {offsets = [0, 0], sizes = [16, 16], strides = [1, 1]} : vector<16x128xf32> to vector<16x16xf32>
    %519 = vector.extract_strided_slice %515 {offsets = [0, 0], sizes = [16, 1], strides = [1, 1]} : vector<16x8xf32> to vector<16x1xf32>
    %520 = vector.extract_strided_slice %516 {offsets = [0, 0], sizes = [1, 16], strides = [1, 1]} : vector<8x16xf32> to vector<1x16xf32>
    %521 = vector.broadcast %519 : vector<16x1xf32> to vector<16x16xf32>
    %522 = vector.broadcast %520 : vector<1x16xf32> to vector<16x16xf32>
    %523 = arith.addf %521, %522 : vector<16x16xf32>
    %cst_187 = arith.constant 0.000000e+00 : f32
    %524 = vector.broadcast %cst_187 : f32 to vector<16x16xf32>
    %525 = arith.cmpf ogt, %523, %524 : vector<16x16xf32>
    %cst_188 = arith.constant 2.000000e-01 : f32
    %526 = vector.broadcast %cst_188 : f32 to vector<16x16xf32>
    %527 = arith.mulf %526, %523 : vector<16x16xf32>
    %528 = arith.select %525, %523, %527 : vector<16x16xi1>, vector<16x16xf32>
    %cst_189 = arith.constant 0.000000e+00 : f32
    %529 = vector.broadcast %cst_189 : f32 to vector<16x16xf32>
    %530 = arith.cmpf ogt, %0, %529 : vector<16x16xf32>
    %cst_190 = arith.constant -1.000000e+30 : f32
    %531 = vector.broadcast %cst_190 : f32 to vector<16x16xf32>
    %532 = arith.select %530, %528, %531 : vector<16x16xi1>, vector<16x16xf32>
    %cst_191 = arith.constant dense<0xFF800000> : vector<16xf32>
    %533 = vector.multi_reduction <maximumf>, %532, %cst_191 [1] : vector<16x16xf32> to vector<16xf32>
    %534 = vector.shape_cast %533 : vector<16xf32> to vector<16x1xf32>
    %535 = vector.broadcast %534 : vector<16x1xf32> to vector<16x16xf32>
    %536 = arith.subf %532, %535 : vector<16x16xf32>
    %537 = math.exp %536 : vector<16x16xf32>
    %cst_192 = arith.constant dense<0.000000e+00> : vector<16xf32>
    %538 = vector.multi_reduction <add>, %537, %cst_192 [1] : vector<16x16xf32> to vector<16xf32>
    %539 = vector.shape_cast %538 : vector<16xf32> to vector<16x1xf32>
    %540 = tpu.reciprocal %539 {approx = true} : vector<16x1xf32> -> vector<16x1xf32>
    %541 = vector.broadcast %540 : vector<16x1xf32> to vector<16x16xf32>
    %542 = arith.mulf %537, %541 : vector<16x16xf32>
    %cst_193 = arith.constant dense<0.000000e+00> : vector<16x16xf32>
    %543 = tpu.matmul %542, %518, %cst_193 {dimension_numbers = #tpu.dot_dimension_numbers<[1], [0], [0], [1], [0, 0, 1, 1], [], []>} : vector<16x16xf32>, vector<16x16xf32>, vector<16x16xf32> -> vector<16x16xf32>
    %544 = arith.addf %517, %543 : vector<16x16xf32>
    %545 = vector.extract_strided_slice %509 {offsets = [0, 16], sizes = [16, 16], strides = [1, 1]} : vector<16x128xf32> to vector<16x16xf32>
    %546 = vector.extract_strided_slice %515 {offsets = [0, 1], sizes = [16, 1], strides = [1, 1]} : vector<16x8xf32> to vector<16x1xf32>
    %547 = vector.extract_strided_slice %516 {offsets = [1, 0], sizes = [1, 16], strides = [1, 1]} : vector<8x16xf32> to vector<1x16xf32>
    %548 = vector.broadcast %546 : vector<16x1xf32> to vector<16x16xf32>
    %549 = vector.broadcast %547 : vector<1x16xf32> to vector<16x16xf32>
    %550 = arith.addf %548, %549 : vector<16x16xf32>
    %cst_194 = arith.constant 0.000000e+00 : f32
    %551 = vector.broadcast %cst_194 : f32 to vector<16x16xf32>
    %552 = arith.cmpf ogt, %550, %551 : vector<16x16xf32>
    %cst_195 = arith.constant 2.000000e-01 : f32
    %553 = vector.broadcast %cst_195 : f32 to vector<16x16xf32>
    %554 = arith.mulf %553, %550 : vector<16x16xf32>
    %555 = arith.select %552, %550, %554 : vector<16x16xi1>, vector<16x16xf32>
    %cst_196 = arith.constant 0.000000e+00 : f32
    %556 = vector.broadcast %cst_196 : f32 to vector<16x16xf32>
    %557 = arith.cmpf ogt, %0, %556 : vector<16x16xf32>
    %cst_197 = arith.constant -1.000000e+30 : f32
    %558 = vector.broadcast %cst_197 : f32 to vector<16x16xf32>
    %559 = arith.select %557, %555, %558 : vector<16x16xi1>, vector<16x16xf32>
    %cst_198 = arith.constant dense<0xFF800000> : vector<16xf32>
    %560 = vector.multi_reduction <maximumf>, %559, %cst_198 [1] : vector<16x16xf32> to vector<16xf32>
    %561 = vector.shape_cast %560 : vector<16xf32> to vector<16x1xf32>
    %562 = vector.broadcast %561 : vector<16x1xf32> to vector<16x16xf32>
    %563 = arith.subf %559, %562 : vector<16x16xf32>
    %564 = math.exp %563 : vector<16x16xf32>
    %cst_199 = arith.constant dense<0.000000e+00> : vector<16xf32>
    %565 = vector.multi_reduction <add>, %564, %cst_199 [1] : vector<16x16xf32> to vector<16xf32>
    %566 = vector.shape_cast %565 : vector<16xf32> to vector<16x1xf32>
    %567 = tpu.reciprocal %566 {approx = true} : vector<16x1xf32> -> vector<16x1xf32>
    %568 = vector.broadcast %567 : vector<16x1xf32> to vector<16x16xf32>
    %569 = arith.mulf %564, %568 : vector<16x16xf32>
    %cst_200 = arith.constant dense<0.000000e+00> : vector<16x16xf32>
    %570 = tpu.matmul %569, %545, %cst_200 {dimension_numbers = #tpu.dot_dimension_numbers<[1], [0], [0], [1], [0, 0, 1, 1], [], []>} : vector<16x16xf32>, vector<16x16xf32>, vector<16x16xf32> -> vector<16x16xf32>
    %571 = arith.addf %544, %570 : vector<16x16xf32>
    %572 = vector.extract_strided_slice %509 {offsets = [0, 32], sizes = [16, 16], strides = [1, 1]} : vector<16x128xf32> to vector<16x16xf32>
    %573 = vector.extract_strided_slice %515 {offsets = [0, 2], sizes = [16, 1], strides = [1, 1]} : vector<16x8xf32> to vector<16x1xf32>
    %574 = vector.extract_strided_slice %516 {offsets = [2, 0], sizes = [1, 16], strides = [1, 1]} : vector<8x16xf32> to vector<1x16xf32>
    %575 = vector.broadcast %573 : vector<16x1xf32> to vector<16x16xf32>
    %576 = vector.broadcast %574 : vector<1x16xf32> to vector<16x16xf32>
    %577 = arith.addf %575, %576 : vector<16x16xf32>
    %cst_201 = arith.constant 0.000000e+00 : f32
    %578 = vector.broadcast %cst_201 : f32 to vector<16x16xf32>
    %579 = arith.cmpf ogt, %577, %578 : vector<16x16xf32>
    %cst_202 = arith.constant 2.000000e-01 : f32
    %580 = vector.broadcast %cst_202 : f32 to vector<16x16xf32>
    %581 = arith.mulf %580, %577 : vector<16x16xf32>
    %582 = arith.select %579, %577, %581 : vector<16x16xi1>, vector<16x16xf32>
    %cst_203 = arith.constant 0.000000e+00 : f32
    %583 = vector.broadcast %cst_203 : f32 to vector<16x16xf32>
    %584 = arith.cmpf ogt, %0, %583 : vector<16x16xf32>
    %cst_204 = arith.constant -1.000000e+30 : f32
    %585 = vector.broadcast %cst_204 : f32 to vector<16x16xf32>
    %586 = arith.select %584, %582, %585 : vector<16x16xi1>, vector<16x16xf32>
    %cst_205 = arith.constant dense<0xFF800000> : vector<16xf32>
    %587 = vector.multi_reduction <maximumf>, %586, %cst_205 [1] : vector<16x16xf32> to vector<16xf32>
    %588 = vector.shape_cast %587 : vector<16xf32> to vector<16x1xf32>
    %589 = vector.broadcast %588 : vector<16x1xf32> to vector<16x16xf32>
    %590 = arith.subf %586, %589 : vector<16x16xf32>
    %591 = math.exp %590 : vector<16x16xf32>
    %cst_206 = arith.constant dense<0.000000e+00> : vector<16xf32>
    %592 = vector.multi_reduction <add>, %591, %cst_206 [1] : vector<16x16xf32> to vector<16xf32>
    %593 = vector.shape_cast %592 : vector<16xf32> to vector<16x1xf32>
    %594 = tpu.reciprocal %593 {approx = true} : vector<16x1xf32> -> vector<16x1xf32>
    %595 = vector.broadcast %594 : vector<16x1xf32> to vector<16x16xf32>
    %596 = arith.mulf %591, %595 : vector<16x16xf32>
    %cst_207 = arith.constant dense<0.000000e+00> : vector<16x16xf32>
    %597 = tpu.matmul %596, %572, %cst_207 {dimension_numbers = #tpu.dot_dimension_numbers<[1], [0], [0], [1], [0, 0, 1, 1], [], []>} : vector<16x16xf32>, vector<16x16xf32>, vector<16x16xf32> -> vector<16x16xf32>
    %598 = arith.addf %571, %597 : vector<16x16xf32>
    %599 = vector.extract_strided_slice %509 {offsets = [0, 48], sizes = [16, 16], strides = [1, 1]} : vector<16x128xf32> to vector<16x16xf32>
    %600 = vector.extract_strided_slice %515 {offsets = [0, 3], sizes = [16, 1], strides = [1, 1]} : vector<16x8xf32> to vector<16x1xf32>
    %601 = vector.extract_strided_slice %516 {offsets = [3, 0], sizes = [1, 16], strides = [1, 1]} : vector<8x16xf32> to vector<1x16xf32>
    %602 = vector.broadcast %600 : vector<16x1xf32> to vector<16x16xf32>
    %603 = vector.broadcast %601 : vector<1x16xf32> to vector<16x16xf32>
    %604 = arith.addf %602, %603 : vector<16x16xf32>
    %cst_208 = arith.constant 0.000000e+00 : f32
    %605 = vector.broadcast %cst_208 : f32 to vector<16x16xf32>
    %606 = arith.cmpf ogt, %604, %605 : vector<16x16xf32>
    %cst_209 = arith.constant 2.000000e-01 : f32
    %607 = vector.broadcast %cst_209 : f32 to vector<16x16xf32>
    %608 = arith.mulf %607, %604 : vector<16x16xf32>
    %609 = arith.select %606, %604, %608 : vector<16x16xi1>, vector<16x16xf32>
    %cst_210 = arith.constant 0.000000e+00 : f32
    %610 = vector.broadcast %cst_210 : f32 to vector<16x16xf32>
    %611 = arith.cmpf ogt, %0, %610 : vector<16x16xf32>
    %cst_211 = arith.constant -1.000000e+30 : f32
    %612 = vector.broadcast %cst_211 : f32 to vector<16x16xf32>
    %613 = arith.select %611, %609, %612 : vector<16x16xi1>, vector<16x16xf32>
    %cst_212 = arith.constant dense<0xFF800000> : vector<16xf32>
    %614 = vector.multi_reduction <maximumf>, %613, %cst_212 [1] : vector<16x16xf32> to vector<16xf32>
    %615 = vector.shape_cast %614 : vector<16xf32> to vector<16x1xf32>
    %616 = vector.broadcast %615 : vector<16x1xf32> to vector<16x16xf32>
    %617 = arith.subf %613, %616 : vector<16x16xf32>
    %618 = math.exp %617 : vector<16x16xf32>
    %cst_213 = arith.constant dense<0.000000e+00> : vector<16xf32>
    %619 = vector.multi_reduction <add>, %618, %cst_213 [1] : vector<16x16xf32> to vector<16xf32>
    %620 = vector.shape_cast %619 : vector<16xf32> to vector<16x1xf32>
    %621 = tpu.reciprocal %620 {approx = true} : vector<16x1xf32> -> vector<16x1xf32>
    %622 = vector.broadcast %621 : vector<16x1xf32> to vector<16x16xf32>
    %623 = arith.mulf %618, %622 : vector<16x16xf32>
    %cst_214 = arith.constant dense<0.000000e+00> : vector<16x16xf32>
    %624 = tpu.matmul %623, %599, %cst_214 {dimension_numbers = #tpu.dot_dimension_numbers<[1], [0], [0], [1], [0, 0, 1, 1], [], []>} : vector<16x16xf32>, vector<16x16xf32>, vector<16x16xf32> -> vector<16x16xf32>
    %625 = arith.addf %598, %624 : vector<16x16xf32>
    %626 = vector.extract_strided_slice %509 {offsets = [0, 64], sizes = [16, 16], strides = [1, 1]} : vector<16x128xf32> to vector<16x16xf32>
    %627 = vector.extract_strided_slice %515 {offsets = [0, 4], sizes = [16, 1], strides = [1, 1]} : vector<16x8xf32> to vector<16x1xf32>
    %628 = vector.extract_strided_slice %516 {offsets = [4, 0], sizes = [1, 16], strides = [1, 1]} : vector<8x16xf32> to vector<1x16xf32>
    %629 = vector.broadcast %627 : vector<16x1xf32> to vector<16x16xf32>
    %630 = vector.broadcast %628 : vector<1x16xf32> to vector<16x16xf32>
    %631 = arith.addf %629, %630 : vector<16x16xf32>
    %cst_215 = arith.constant 0.000000e+00 : f32
    %632 = vector.broadcast %cst_215 : f32 to vector<16x16xf32>
    %633 = arith.cmpf ogt, %631, %632 : vector<16x16xf32>
    %cst_216 = arith.constant 2.000000e-01 : f32
    %634 = vector.broadcast %cst_216 : f32 to vector<16x16xf32>
    %635 = arith.mulf %634, %631 : vector<16x16xf32>
    %636 = arith.select %633, %631, %635 : vector<16x16xi1>, vector<16x16xf32>
    %cst_217 = arith.constant 0.000000e+00 : f32
    %637 = vector.broadcast %cst_217 : f32 to vector<16x16xf32>
    %638 = arith.cmpf ogt, %0, %637 : vector<16x16xf32>
    %cst_218 = arith.constant -1.000000e+30 : f32
    %639 = vector.broadcast %cst_218 : f32 to vector<16x16xf32>
    %640 = arith.select %638, %636, %639 : vector<16x16xi1>, vector<16x16xf32>
    %cst_219 = arith.constant dense<0xFF800000> : vector<16xf32>
    %641 = vector.multi_reduction <maximumf>, %640, %cst_219 [1] : vector<16x16xf32> to vector<16xf32>
    %642 = vector.shape_cast %641 : vector<16xf32> to vector<16x1xf32>
    %643 = vector.broadcast %642 : vector<16x1xf32> to vector<16x16xf32>
    %644 = arith.subf %640, %643 : vector<16x16xf32>
    %645 = math.exp %644 : vector<16x16xf32>
    %cst_220 = arith.constant dense<0.000000e+00> : vector<16xf32>
    %646 = vector.multi_reduction <add>, %645, %cst_220 [1] : vector<16x16xf32> to vector<16xf32>
    %647 = vector.shape_cast %646 : vector<16xf32> to vector<16x1xf32>
    %648 = tpu.reciprocal %647 {approx = true} : vector<16x1xf32> -> vector<16x1xf32>
    %649 = vector.broadcast %648 : vector<16x1xf32> to vector<16x16xf32>
    %650 = arith.mulf %645, %649 : vector<16x16xf32>
    %cst_221 = arith.constant dense<0.000000e+00> : vector<16x16xf32>
    %651 = tpu.matmul %650, %626, %cst_221 {dimension_numbers = #tpu.dot_dimension_numbers<[1], [0], [0], [1], [0, 0, 1, 1], [], []>} : vector<16x16xf32>, vector<16x16xf32>, vector<16x16xf32> -> vector<16x16xf32>
    %652 = arith.addf %625, %651 : vector<16x16xf32>
    %653 = vector.extract_strided_slice %509 {offsets = [0, 80], sizes = [16, 16], strides = [1, 1]} : vector<16x128xf32> to vector<16x16xf32>
    %654 = vector.extract_strided_slice %515 {offsets = [0, 5], sizes = [16, 1], strides = [1, 1]} : vector<16x8xf32> to vector<16x1xf32>
    %655 = vector.extract_strided_slice %516 {offsets = [5, 0], sizes = [1, 16], strides = [1, 1]} : vector<8x16xf32> to vector<1x16xf32>
    %656 = vector.broadcast %654 : vector<16x1xf32> to vector<16x16xf32>
    %657 = vector.broadcast %655 : vector<1x16xf32> to vector<16x16xf32>
    %658 = arith.addf %656, %657 : vector<16x16xf32>
    %cst_222 = arith.constant 0.000000e+00 : f32
    %659 = vector.broadcast %cst_222 : f32 to vector<16x16xf32>
    %660 = arith.cmpf ogt, %658, %659 : vector<16x16xf32>
    %cst_223 = arith.constant 2.000000e-01 : f32
    %661 = vector.broadcast %cst_223 : f32 to vector<16x16xf32>
    %662 = arith.mulf %661, %658 : vector<16x16xf32>
    %663 = arith.select %660, %658, %662 : vector<16x16xi1>, vector<16x16xf32>
    %cst_224 = arith.constant 0.000000e+00 : f32
    %664 = vector.broadcast %cst_224 : f32 to vector<16x16xf32>
    %665 = arith.cmpf ogt, %0, %664 : vector<16x16xf32>
    %cst_225 = arith.constant -1.000000e+30 : f32
    %666 = vector.broadcast %cst_225 : f32 to vector<16x16xf32>
    %667 = arith.select %665, %663, %666 : vector<16x16xi1>, vector<16x16xf32>
    %cst_226 = arith.constant dense<0xFF800000> : vector<16xf32>
    %668 = vector.multi_reduction <maximumf>, %667, %cst_226 [1] : vector<16x16xf32> to vector<16xf32>
    %669 = vector.shape_cast %668 : vector<16xf32> to vector<16x1xf32>
    %670 = vector.broadcast %669 : vector<16x1xf32> to vector<16x16xf32>
    %671 = arith.subf %667, %670 : vector<16x16xf32>
    %672 = math.exp %671 : vector<16x16xf32>
    %cst_227 = arith.constant dense<0.000000e+00> : vector<16xf32>
    %673 = vector.multi_reduction <add>, %672, %cst_227 [1] : vector<16x16xf32> to vector<16xf32>
    %674 = vector.shape_cast %673 : vector<16xf32> to vector<16x1xf32>
    %675 = tpu.reciprocal %674 {approx = true} : vector<16x1xf32> -> vector<16x1xf32>
    %676 = vector.broadcast %675 : vector<16x1xf32> to vector<16x16xf32>
    %677 = arith.mulf %672, %676 : vector<16x16xf32>
    %cst_228 = arith.constant dense<0.000000e+00> : vector<16x16xf32>
    %678 = tpu.matmul %677, %653, %cst_228 {dimension_numbers = #tpu.dot_dimension_numbers<[1], [0], [0], [1], [0, 0, 1, 1], [], []>} : vector<16x16xf32>, vector<16x16xf32>, vector<16x16xf32> -> vector<16x16xf32>
    %679 = arith.addf %652, %678 : vector<16x16xf32>
    %680 = vector.extract_strided_slice %509 {offsets = [0, 96], sizes = [16, 16], strides = [1, 1]} : vector<16x128xf32> to vector<16x16xf32>
    %681 = vector.extract_strided_slice %515 {offsets = [0, 6], sizes = [16, 1], strides = [1, 1]} : vector<16x8xf32> to vector<16x1xf32>
    %682 = vector.extract_strided_slice %516 {offsets = [6, 0], sizes = [1, 16], strides = [1, 1]} : vector<8x16xf32> to vector<1x16xf32>
    %683 = vector.broadcast %681 : vector<16x1xf32> to vector<16x16xf32>
    %684 = vector.broadcast %682 : vector<1x16xf32> to vector<16x16xf32>
    %685 = arith.addf %683, %684 : vector<16x16xf32>
    %cst_229 = arith.constant 0.000000e+00 : f32
    %686 = vector.broadcast %cst_229 : f32 to vector<16x16xf32>
    %687 = arith.cmpf ogt, %685, %686 : vector<16x16xf32>
    %cst_230 = arith.constant 2.000000e-01 : f32
    %688 = vector.broadcast %cst_230 : f32 to vector<16x16xf32>
    %689 = arith.mulf %688, %685 : vector<16x16xf32>
    %690 = arith.select %687, %685, %689 : vector<16x16xi1>, vector<16x16xf32>
    %cst_231 = arith.constant 0.000000e+00 : f32
    %691 = vector.broadcast %cst_231 : f32 to vector<16x16xf32>
    %692 = arith.cmpf ogt, %0, %691 : vector<16x16xf32>
    %cst_232 = arith.constant -1.000000e+30 : f32
    %693 = vector.broadcast %cst_232 : f32 to vector<16x16xf32>
    %694 = arith.select %692, %690, %693 : vector<16x16xi1>, vector<16x16xf32>
    %cst_233 = arith.constant dense<0xFF800000> : vector<16xf32>
    %695 = vector.multi_reduction <maximumf>, %694, %cst_233 [1] : vector<16x16xf32> to vector<16xf32>
    %696 = vector.shape_cast %695 : vector<16xf32> to vector<16x1xf32>
    %697 = vector.broadcast %696 : vector<16x1xf32> to vector<16x16xf32>
    %698 = arith.subf %694, %697 : vector<16x16xf32>
    %699 = math.exp %698 : vector<16x16xf32>
    %cst_234 = arith.constant dense<0.000000e+00> : vector<16xf32>
    %700 = vector.multi_reduction <add>, %699, %cst_234 [1] : vector<16x16xf32> to vector<16xf32>
    %701 = vector.shape_cast %700 : vector<16xf32> to vector<16x1xf32>
    %702 = tpu.reciprocal %701 {approx = true} : vector<16x1xf32> -> vector<16x1xf32>
    %703 = vector.broadcast %702 : vector<16x1xf32> to vector<16x16xf32>
    %704 = arith.mulf %699, %703 : vector<16x16xf32>
    %cst_235 = arith.constant dense<0.000000e+00> : vector<16x16xf32>
    %705 = tpu.matmul %704, %680, %cst_235 {dimension_numbers = #tpu.dot_dimension_numbers<[1], [0], [0], [1], [0, 0, 1, 1], [], []>} : vector<16x16xf32>, vector<16x16xf32>, vector<16x16xf32> -> vector<16x16xf32>
    %706 = arith.addf %679, %705 : vector<16x16xf32>
    %707 = vector.extract_strided_slice %509 {offsets = [0, 112], sizes = [16, 16], strides = [1, 1]} : vector<16x128xf32> to vector<16x16xf32>
    %708 = vector.extract_strided_slice %515 {offsets = [0, 7], sizes = [16, 1], strides = [1, 1]} : vector<16x8xf32> to vector<16x1xf32>
    %709 = vector.extract_strided_slice %516 {offsets = [7, 0], sizes = [1, 16], strides = [1, 1]} : vector<8x16xf32> to vector<1x16xf32>
    %710 = vector.broadcast %708 : vector<16x1xf32> to vector<16x16xf32>
    %711 = vector.broadcast %709 : vector<1x16xf32> to vector<16x16xf32>
    %712 = arith.addf %710, %711 : vector<16x16xf32>
    %cst_236 = arith.constant 0.000000e+00 : f32
    %713 = vector.broadcast %cst_236 : f32 to vector<16x16xf32>
    %714 = arith.cmpf ogt, %712, %713 : vector<16x16xf32>
    %cst_237 = arith.constant 2.000000e-01 : f32
    %715 = vector.broadcast %cst_237 : f32 to vector<16x16xf32>
    %716 = arith.mulf %715, %712 : vector<16x16xf32>
    %717 = arith.select %714, %712, %716 : vector<16x16xi1>, vector<16x16xf32>
    %cst_238 = arith.constant 0.000000e+00 : f32
    %718 = vector.broadcast %cst_238 : f32 to vector<16x16xf32>
    %719 = arith.cmpf ogt, %0, %718 : vector<16x16xf32>
    %cst_239 = arith.constant -1.000000e+30 : f32
    %720 = vector.broadcast %cst_239 : f32 to vector<16x16xf32>
    %721 = arith.select %719, %717, %720 : vector<16x16xi1>, vector<16x16xf32>
    %cst_240 = arith.constant dense<0xFF800000> : vector<16xf32>
    %722 = vector.multi_reduction <maximumf>, %721, %cst_240 [1] : vector<16x16xf32> to vector<16xf32>
    %723 = vector.shape_cast %722 : vector<16xf32> to vector<16x1xf32>
    %724 = vector.broadcast %723 : vector<16x1xf32> to vector<16x16xf32>
    %725 = arith.subf %721, %724 : vector<16x16xf32>
    %726 = math.exp %725 : vector<16x16xf32>
    %cst_241 = arith.constant dense<0.000000e+00> : vector<16xf32>
    %727 = vector.multi_reduction <add>, %726, %cst_241 [1] : vector<16x16xf32> to vector<16xf32>
    %728 = vector.shape_cast %727 : vector<16xf32> to vector<16x1xf32>
    %729 = tpu.reciprocal %728 {approx = true} : vector<16x1xf32> -> vector<16x1xf32>
    %730 = vector.broadcast %729 : vector<16x1xf32> to vector<16x16xf32>
    %731 = arith.mulf %726, %730 : vector<16x16xf32>
    %cst_242 = arith.constant dense<0.000000e+00> : vector<16x16xf32>
    %732 = tpu.matmul %731, %707, %cst_242 {dimension_numbers = #tpu.dot_dimension_numbers<[1], [0], [0], [1], [0, 0, 1, 1], [], []>} : vector<16x16xf32>, vector<16x16xf32>, vector<16x16xf32> -> vector<16x16xf32>
    %733 = arith.addf %706, %732 : vector<16x16xf32>
    %cst_243 = arith.constant 1.250000e-01 : f32
    %734 = vector.broadcast %cst_243 : f32 to vector<16x16xf32>
    %735 = arith.mulf %733, %734 : vector<16x16xf32>
    %c2_244 = arith.constant 2 : index
    %c0_245 = arith.constant 0 : index
    %c0_246 = arith.constant 0 : index
    %736 = vector.load %arg10[%c2_244, %c0_245, %c0_246] : memref<3x1x16xf32, #tpu.memory_space<vmem>>, vector<1x1x16xf32>
    %737 = vector.shape_cast %736 : vector<1x1x16xf32> to vector<1x16xf32>
    %738 = vector.broadcast %737 : vector<1x16xf32> to vector<16x16xf32>
    %739 = arith.addf %735, %738 : vector<16x16xf32>
    %c0_247 = arith.constant 0 : index
    %c0_248 = arith.constant 0 : index
    %740 = vector.load %arg11[%c0_247, %c0_248] : memref<16x7xf32, #tpu.memory_space<vmem>>, vector<16x7xf32>
    %cst_249 = arith.constant dense<0.000000e+00> : vector<16x7xf32>
    %741 = tpu.matmul %739, %740, %cst_249 {dimension_numbers = #tpu.dot_dimension_numbers<[1], [0], [0], [1], [0, 0, 1, 1], [], []>} : vector<16x16xf32>, vector<16x7xf32>, vector<16x7xf32> -> vector<16x7xf32>
    %c0_250 = arith.constant 0 : index
    %c0_251 = arith.constant 0 : index
    %742 = vector.load %arg12[%c0_250, %c0_251] : memref<1x7xf32, #tpu.memory_space<vmem>>, vector<1x7xf32>
    %743 = vector.broadcast %742 : vector<1x7xf32> to vector<16x7xf32>
    %744 = arith.addf %741, %743 : vector<16x7xf32>
    %c0_252 = arith.constant 0 : index
    %c0_253 = arith.constant 0 : index
    %745 = vector.load %arg13[%c0_252, %c0_253] : memref<16x7xf32, #tpu.memory_space<vmem>>, vector<16x7xf32>
    tpu.vector_store %arg13[%c0_252, %c0_253], %744 {strides = array<i32>} : memref<16x7xf32, #tpu.memory_space<vmem>>, vector<16x7xf32>,
    return
  }
  func.func @transform_0(%arg0: i32) -> (i32, i32) {
    %c0_i32 = arith.constant 0 : i32
    %c0_i32_0 = arith.constant 0 : i32
    %c0_i32_1 = arith.constant 0 : i32
    return %c0_i32, %c0_i32_0 : i32, i32
  }
  func.func @transform_1(%arg0: i32) -> (i32, i32) {
    %c0_i32 = arith.constant 0 : i32
    %c0_i32_0 = arith.constant 0 : i32
    %c0_i32_1 = arith.constant 0 : i32
    return %c0_i32, %c0_i32_0 : i32, i32
  }
  func.func @transform_2(%arg0: i32) -> (i32, i32) {
    %c0_i32 = arith.constant 0 : i32
    %c0_i32_0 = arith.constant 0 : i32
    %c0_i32_1 = arith.constant 0 : i32
    return %c0_i32, %c0_i32_0 : i32, i32
  }
  func.func @transform_3(%arg0: i32) -> (i32, i32) {
    %c0_i32 = arith.constant 0 : i32
    %c0_i32_0 = arith.constant 0 : i32
    %c0_i32_1 = arith.constant 0 : i32
    return %c0_i32, %c0_i32_0 : i32, i32
  }
  func.func @transform_4(%arg0: i32) -> (i32, i32, i32) {
    %c0_i32 = arith.constant 0 : i32
    %c0_i32_0 = arith.constant 0 : i32
    %c0_i32_1 = arith.constant 0 : i32
    %c0_i32_2 = arith.constant 0 : i32
    return %c0_i32, %c0_i32_0, %c0_i32_1 : i32, i32, i32
  }
  func.func @transform_5(%arg0: i32) -> (i32, i32, i32) {
    %c0_i32 = arith.constant 0 : i32
    %c0_i32_0 = arith.constant 0 : i32
    %c0_i32_1 = arith.constant 0 : i32
    %c0_i32_2 = arith.constant 0 : i32
    return %c0_i32, %c0_i32_0, %c0_i32_1 : i32, i32, i32
  }
  func.func @transform_6(%arg0: i32) -> (i32, i32, i32) {
    %c0_i32 = arith.constant 0 : i32
    %c0_i32_0 = arith.constant 0 : i32
    %c0_i32_1 = arith.constant 0 : i32
    %c0_i32_2 = arith.constant 0 : i32
    return %c0_i32, %c0_i32_0, %c0_i32_1 : i32, i32, i32
  }
  func.func @transform_7(%arg0: i32) -> (i32, i32, i32) {
    %c0_i32 = arith.constant 0 : i32
    %c0_i32_0 = arith.constant 0 : i32
    %c0_i32_1 = arith.constant 0 : i32
    %c0_i32_2 = arith.constant 0 : i32
    return %c0_i32, %c0_i32_0, %c0_i32_1 : i32, i32, i32
  }
  func.func @transform_8(%arg0: i32) -> (i32, i32, i32) {
    %c0_i32 = arith.constant 0 : i32
    %c0_i32_0 = arith.constant 0 : i32
    %c0_i32_1 = arith.constant 0 : i32
    %c0_i32_2 = arith.constant 0 : i32
    return %c0_i32, %c0_i32_0, %c0_i32_1 : i32, i32, i32
  }
  func.func @transform_9(%arg0: i32) -> (i32, i32, i32) {
    %c0_i32 = arith.constant 0 : i32
    %c0_i32_0 = arith.constant 0 : i32
    %c0_i32_1 = arith.constant 0 : i32
    %c0_i32_2 = arith.constant 0 : i32
    return %c0_i32, %c0_i32_0, %c0_i32_1 : i32, i32, i32
  }
  func.func @transform_10(%arg0: i32) -> (i32, i32) {
    %c0_i32 = arith.constant 0 : i32
    %c0_i32_0 = arith.constant 0 : i32
    %c0_i32_1 = arith.constant 0 : i32
    return %c0_i32, %c0_i32_0 : i32, i32
  }
  func.func @transform_11(%arg0: i32) -> (i32, i32) {
    %c0_i32 = arith.constant 0 : i32
    %c0_i32_0 = arith.constant 0 : i32
    %c0_i32_1 = arith.constant 0 : i32
    return %c0_i32, %c0_i32_0 : i32, i32
  }
  func.func @transform_12(%arg0: i32) -> (i32, i32) {
    %c0_i32 = arith.constant 0 : i32
    %c0_i32_0 = arith.constant 0 : i32
    %c0_i32_1 = arith.constant 0 : i32
    return %c0_i32, %c0_i32_0 : i32, i32
  }
}

</mosaic_0001>

<llo_original>
// kernel: mas_forward.1
$region0: #{mas_forward.1}
  #allocation0 [shape = 'u32[]', space=smem, size = 0x4, offset = 0x4, fixed_abs, tag = 'smem constant byte address 0x4 - core index']
  #allocation1 [shape = 'u32[72,128]{1,0:T(1,128)}', space=vmem, size = 0x9000, scoped, tag = 'internal scratch']
  %s0 = inlined_call_operand.hbm [shape: bf16[16,1433], index: 0, kind: input, shape index: {}]
  %s1 = inlined_call_operand.vmem [shape: f32[16,16], index: 1, kind: input, shape index: {}]
  %s2 = inlined_call_operand.vmem [shape: f32[16,16], index: 2, kind: input, shape index: {}]
  %s3 = inlined_call_operand.vmem [shape: bf16[1433,128], index: 3, kind: input, shape index: {}]
  %s4 = inlined_call_operand.vmem [shape: bf16[2,16,128], index: 4, kind: input, shape index: {}]
  %s5 = inlined_call_operand.vmem [shape: f32[3,1,128], index: 5, kind: input, shape index: {}]
  %s6 = inlined_call_operand.hbm [shape: bf16[3,128,128], index: 6, kind: input, shape index: {}]
  %s7 = inlined_call_operand.vmem [shape: f32[3,128,8], index: 7, kind: input, shape index: {}]
  %s8 = inlined_call_operand.vmem [shape: f32[3,128,8], index: 8, kind: input, shape index: {}]
  %s9 = inlined_call_operand.vmem [shape: f32[3,1,16], index: 9, kind: input, shape index: {}]
  %s10 = inlined_call_operand.vmem [shape: f32[16,7], index: 10, kind: input, shape index: {}]
  %s11 = inlined_call_operand.vmem [shape: f32[1,7], index: 11, kind: input, shape index: {}]
  %s12 = inlined_call_operand.vmem [shape: f32[16,7], index: 12, kind: output, shape index: {}]
  %s13 = sld [smem:[#allocation0]]
  $region66: #{mas_forward.1} parent=0
    _
  %s15 = ssub.s32 1, %s13
  %s16 = scalar_select 0, %s15, %s13
  $region1: #{mas_forward.1} parent=0
    #allocation2 [shape = 'u8[49152]{0}', space=vmem, size = 0xc000, scoped, tag = 'input window, operand 0, single buffered']
    #allocation3 [shape = 's32[1]{0}', space=sflag, size = 0x4, scoped, tag = 'scoped memory for mas_forward.1']
    #allocation4 [shape = 'u8[98304]{0}', space=vmem, size = 0x18000, scoped, tag = 'input window, operand 6, single buffered']
    #allocation5 [shape = 's32[1]{0}', space=sflag, size = 0x4, scoped, tag = 'scoped memory for mas_forward.1']
    %17 = vsyncpa [#allocation3], 0
    %18 = vsyncpa [#allocation5], 0
    // Predicated region
    $region2: #{mas_forward.1} parent=1 // pred_check
      _
    $region3: #{mas_forward.1} parent=1 // pred_check_branch
      %20 = sbr.rel (0) target = $region5
    $region4: #{mas_forward.1} parent=1 // pred_region
      %22 = vsyncadd [#allocation3], 0
      %s23 = sshll.u32 %s0, 4
      %s24 = int_to_ptr.hbm [resolvable:$true] %s23
      %s25 = sshll.u32 [#allocation2], 4
      %s26 = int_to_ptr.vmem [resolvable:$true] %s25
      %31 = dma.hbm_to_vmem [thread:$0]  %s24, 1536, %s26, [#allocation3], 768, 768, 48
    $region5: #{mas_forward.1} parent=1 // pred_fallthru
      _
    // Predicated region
    $region6: #{mas_forward.1} parent=1 // pred_check
      _
    $region7: #{mas_forward.1} parent=1 // pred_check_branch
      %33 = sbr.rel (0) target = $region9
    $region8: #{mas_forward.1} parent=1 // pred_region
      _
    $region9: #{mas_forward.1} parent=1 // pred_fallthru
      _
    // Predicated region
    $region10: #{mas_forward.1} parent=1 // pred_check
      _
    $region11: #{mas_forward.1} parent=1 // pred_check_branch
      %35 = sbr.rel (0) target = $region13
    $region12: #{mas_forward.1} parent=1 // pred_region
      _
    $region13: #{mas_forward.1} parent=1 // pred_fallthru
      _
    // Predicated region
    $region14: #{mas_forward.1} parent=1 // pred_check
      _
    $region15: #{mas_forward.1} parent=1 // pred_check_branch
      %37 = sbr.rel (0) target = $region17
    $region16: #{mas_forward.1} parent=1 // pred_region
      _
    $region17: #{mas_forward.1} parent=1 // pred_fallthru
      _
    // Predicated region
    $region18: #{mas_forward.1} parent=1 // pred_check
      _
    $region19: #{mas_forward.1} parent=1 // pred_check_branch
      %39 = sbr.rel (0) target = $region21
    $region20: #{mas_forward.1} parent=1 // pred_region
      _
    $region21: #{mas_forward.1} parent=1 // pred_fallthru
      _
    // Predicated region
    $region22: #{mas_forward.1} parent=1 // pred_check
      _
    $region23: #{mas_forward.1} parent=1 // pred_check_branch
      %41 = sbr.rel (0) target = $region25
    $region24: #{mas_forward.1} parent=1 // pred_region
      _
    $region25: #{mas_forward.1} parent=1 // pred_fallthru
      _
    // Predicated region
    $region26: #{mas_forward.1} parent=1 // pred_check
      _
    $region27: #{mas_forward.1} parent=1 // pred_check_branch
      %43 = sbr.rel (0) target = $region29
    $region28: #{mas_forward.1} parent=1 // pred_region
      %45 = vsyncadd [#allocation5], 0
      %s46 = sshll.u32 %s6, 4
      %s47 = int_to_ptr.hbm [resolvable:$true] %s46
      %s48 = sshll.u32 [#allocation4], 4
      %s49 = int_to_ptr.vmem [resolvable:$true] %s48
      %54 = dma.hbm_to_vmem [thread:$0]  %s47, 3072, %s49, [#allocation5], 64, 64, 4
    $region29: #{mas_forward.1} parent=1 // pred_fallthru
      _
    // Predicated region
    $region30: #{mas_forward.1} parent=1 // pred_check
      _
    $region31: #{mas_forward.1} parent=1 // pred_check_branch
      %56 = sbr.rel (0) target = $region33
    $region32: #{mas_forward.1} parent=1 // pred_region
      _
    $region33: #{mas_forward.1} parent=1 // pred_fallthru
      _
    // Predicated region
    $region34: #{mas_forward.1} parent=1 // pred_check
      _
    $region35: #{mas_forward.1} parent=1 // pred_check_branch
      %58 = sbr.rel (0) target = $region37
    $region36: #{mas_forward.1} parent=1 // pred_region
      _
    $region37: #{mas_forward.1} parent=1 // pred_fallthru
      _
    // Predicated region
    $region38: #{mas_forward.1} parent=1 // pred_check
      _
    $region39: #{mas_forward.1} parent=1 // pred_check_branch
      %60 = sbr.rel (0) target = $region41
    $region40: #{mas_forward.1} parent=1 // pred_region
      _
    $region41: #{mas_forward.1} parent=1 // pred_fallthru
      _
    // Predicated region
    $region42: #{mas_forward.1} parent=1 // pred_check
      _
    $region43: #{mas_forward.1} parent=1 // pred_check_branch
      %62 = sbr.rel (0) target = $region45
    $region44: #{mas_forward.1} parent=1 // pred_region
      _
    $region45: #{mas_forward.1} parent=1 // pred_fallthru
      _
    // Predicated region
    $region46: #{mas_forward.1} parent=1 // pred_check
      _
    $region47: #{mas_forward.1} parent=1 // pred_check_branch
      %64 = sbr.rel (0) target = $region49
    $region48: #{mas_forward.1} parent=1 // pred_region
      _
    $region49: #{mas_forward.1} parent=1 // pred_fallthru
      _
    // Predicated region
    $region50: #{mas_forward.1} parent=1 // pred_check
      _
    $region51: #{mas_forward.1} parent=1 // pred_check_branch
      %66 = sbr.rel (0) target = $region53
    $region52: #{mas_forward.1} parent=1 // pred_region
      %68 = dma.done [#allocation3], 1536
    $region53: #{mas_forward.1} parent=1 // pred_fallthru
      _
    // Predicated region
    $region54: #{mas_forward.1} parent=1 // pred_check
      _
    $region55: #{mas_forward.1} parent=1 // pred_check_branch
      %70 = sbr.rel (0) target = $region57
    $region56: #{mas_forward.1} parent=1 // pred_region
      %72 = dma.done [#allocation5], 3072
    $region57: #{mas_forward.1} parent=1 // pred_fallthru
      _
    %v74 = vld [vmem:[%s1] sm:$0xff]
    %v75 = vld [vmem:[%s1 + $0x8] sm:$0xff]
    %v76 = vld [vmem:[%s2] sm:$0xff]
    %v77 = vld [vmem:[%s2 + $0x8] sm:$0xff]
    %v78 = vpack.c.bf16 %v77, %v76
    %v79 = vld [vmem:[#allocation2] sm:$0xff]
    %v80 = vld [vmem:[#allocation2 + $0x8] sm:$0xff]
    %v81 = vld [vmem:[#allocation2 + $0x10] sm:$0xff]
    %v82 = vld [vmem:[#allocation2 + $0x18] sm:$0xff]
    %v83 = vld [vmem:[#allocation2 + $0x20] sm:$0xff]
    %v84 = vld [vmem:[#allocation2 + $0x28] sm:$0xff]
    %v85 = vld [vmem:[#allocation2 + $0x30] sm:$0xff]
    %v86 = vld [vmem:[#allocation2 + $0x38] sm:$0xff]
    %v87 = vld [vmem:[#allocation2 + $0x40] sm:$0xff]
    %v88 = vld [vmem:[#allocation2 + $0x48] sm:$0xff]
    %v89 = vld [vmem:[#allocation2 + $0x50] sm:$0xff]
    %v90 = vld [vmem:[#allocation2 + $0x58] sm:$0xff]
    %v91 = vld [vmem:[%s3] sm:$0xf]
    %v92 = vld [vmem:[%s3 + $0x4] sm:$0xf]
    %v93 = vld [vmem:[%s3 + $0x8] sm:$0xf]
    %v94 = vld [vmem:[%s3 + $0xc] sm:$0xf]
    %v95 = vld [vmem:[%s3 + $0x10] sm:$0xf]
    %v96 = vld [vmem:[%s3 + $0x14] sm:$0xf]
    %v97 = vld [vmem:[%s3 + $0x18] sm:$0xf]
    %v98 = vld [vmem:[%s3 + $0x1c] sm:$0xf]
    %v99 = vld [vmem:[%s3 + $0x20] sm:$0xf]
    %v100 = vld [vmem:[%s3 + $0x24] sm:$0xf]
    %v101 = vld [vmem:[%s3 + $0x28] sm:$0xf]
    %v102 = vld [vmem:[%s3 + $0x2c] sm:$0xf]
    %v103 = vld [vmem:[%s3 + $0x30] sm:$0xf]
    %v104 = vld [vmem:[%s3 + $0x34] sm:$0xf]
    %v105 = vld [vmem:[%s3 + $0x38] sm:$0xf]
    %v106 = vld [vmem:[%s3 + $0x3c] sm:$0xf]
    %v107 = vld [vmem:[%s3 + $0x40] sm:$0xf]
    %v108 = vld [vmem:[%s3 + $0x44] sm:$0xf]
    %v109 = vld [vmem:[%s3 + $0x48] sm:$0xf]
    %v110 = vld [vmem:[%s3 + $0x4c] sm:$0xf]
    %v111 = vld [vmem:[%s3 + $0x50] sm:$0xf]
    %v112 = vld [vmem:[%s3 + $0x54] sm:$0xf]
    %v113 = vld [vmem:[%s3 + $0x58] sm:$0xf]
    %v114 = vld [vmem:[%s3 + $0x5c] sm:$0xf]
    %v115 = vld [vmem:[%s3 + $0x60] sm:$0xf]
    %v116 = vld [vmem:[%s3 + $0x64] sm:$0xf]
    %v117 = vld [vmem:[%s3 + $0x68] sm:$0xf]
    %v118 = vld [vmem:[%s3 + $0x6c] sm:$0xf]
    %v119 = vld [vmem:[%s3 + $0x70] sm:$0xf]
    %v120 = vld [vmem:[%s3 + $0x74] sm:$0xf]
    %v121 = vld [vmem:[%s3 + $0x78] sm:$0xf]
    %v122 = vld [vmem:[%s3 + $0x7c] sm:$0xf]
    %v123 = vld [vmem:[%s3 + $0x80] sm:$0xf]
    %v124 = vld [vmem:[%s3 + $0x84] sm:$0xf]
    %v125 = vld [vmem:[%s3 + $0x88] sm:$0xf]
    %v126 = vld [vmem:[%s3 + $0x8c] sm:$0xf]
    %v127 = vld [vmem:[%s3 + $0x90] sm:$0xf]
    %v128 = vld [vmem:[%s3 + $0x94] sm:$0xf]
    %v129 = vld [vmem:[%s3 + $0x98] sm:$0xf]
    %v130 = vld [vmem:[%s3 + $0x9c] sm:$0xf]
    %v131 = vld [vmem:[%s3 + $0xa0] sm:$0xf]
    %v132 = vld [vmem:[%s3 + $0xa4] sm:$0xf]
    %v133 = vld [vmem:[%s3 + $0xa8] sm:$0xf]
    %v134 = vld [vmem:[%s3 + $0xac] sm:$0xf]
    %v135 = vld [vmem:[%s3 + $0xb0] sm:$0xf]
    %v136 = vld [vmem:[%s3 + $0xb4] sm:$0xf]
    %v137 = vld [vmem:[%s3 + $0xb8] sm:$0xf]
    %v138 = vld [vmem:[%s3 + $0xbc] sm:$0xf]
    %v139 = vld [vmem:[%s3 + $0xc0] sm:$0xf]
    %v140 = vld [vmem:[%s3 + $0xc4] sm:$0xf]
    %v141 = vld [vmem:[%s3 + $0xc8] sm:$0xf]
    %v142 = vld [vmem:[%s3 + $0xcc] sm:$0xf]
    %v143 = vld [vmem:[%s3 + $0xd0] sm:$0xf]
    %v144 = vld [vmem:[%s3 + $0xd4] sm:$0xf]
    %v145 = vld [vmem:[%s3 + $0xd8] sm:$0xf]
    %v146 = vld [vmem:[%s3 + $0xdc] sm:$0xf]
    %v147 = vld [vmem:[%s3 + $0xe0] sm:$0xf]
    %v148 = vld [vmem:[%s3 + $0xe4] sm:$0xf]
    %v149 = vld [vmem:[%s3 + $0xe8] sm:$0xf]
    %v150 = vld [vmem:[%s3 + $0xec] sm:$0xf]
    %v151 = vld [vmem:[%s3 + $0xf0] sm:$0xf]
    %v152 = vld [vmem:[%s3 + $0xf4] sm:$0xf]
    %v153 = vld [vmem:[%s3 + $0xf8] sm:$0xf]
    %v154 = vld [vmem:[%s3 + $0xfc] sm:$0xf]
    %v155 = vld [vmem:[%s3 + $0x100] sm:$0xf]
    %v156 = vld [vmem:[%s3 + $0x104] sm:$0xf]
    %v157 = vld [vmem:[%s3 + $0x108] sm:$0xf]
    %v158 = vld [vmem:[%s3 + $0x10c] sm:$0xf]
    %v159 = vld [vmem:[%s3 + $0x110] sm:$0xf]
    %v160 = vld [vmem:[%s3 + $0x114] sm:$0xf]
    %v161 = vld [vmem:[%s3 + $0x118] sm:$0xf]
    %v162 = vld [vmem:[%s3 + $0x11c] sm:$0xf]
    %v163 = vld [vmem:[%s3 + $0x120] sm:$0xf]
    %v164 = vld [vmem:[%s3 + $0x124] sm:$0xf]
    %v165 = vld [vmem:[%s3 + $0x128] sm:$0xf]
    %v166 = vld [vmem:[%s3 + $0x12c] sm:$0xf]
    %v167 = vld [vmem:[%s3 + $0x130] sm:$0xf]
    %v168 = vld [vmem:[%s3 + $0x134] sm:$0xf]
    %v169 = vld [vmem:[%s3 + $0x138] sm:$0xf]
    %v170 = vld [vmem:[%s3 + $0x13c] sm:$0xf]
    %v171 = vld [vmem:[%s3 + $0x140] sm:$0xf]
    %v172 = vld [vmem:[%s3 + $0x144] sm:$0xf]
    %v173 = vld [vmem:[%s3 + $0x148] sm:$0xf]
    %v174 = vld [vmem:[%s3 + $0x14c] sm:$0xf]
    %v175 = vld [vmem:[%s3 + $0x150] sm:$0xf]
    %v176 = vld [vmem:[%s3 + $0x154] sm:$0xf]
    %v177 = vld [vmem:[%s3 + $0x158] sm:$0xf]
    %v178 = vld [vmem:[%s3 + $0x15c] sm:$0xf]
    %v179 = vld [vmem:[%s3 + $0x160] sm:$0xf]
    %v180 = vld [vmem:[%s3 + $0x164] sm:$0xf]
    %v181 = vld [vmem:[%s3 + $0x168] sm:$0xf]
    %v182 = vld [vmem:[%s3 + $0x16c] sm:$0xf]
    %v183 = vld [vmem:[%s3 + $0x170] sm:$0xf]
    %v184 = vld [vmem:[%s3 + $0x174] sm:$0xf]
    %v185 = vld [vmem:[%s3 + $0x178] sm:$0xf]
    %v186 = vld [vmem:[%s3 + $0x17c] sm:$0xf]
    %v187 = vld [vmem:[%s3 + $0x180] sm:$0xf]
    %v188 = vld [vmem:[%s3 + $0x184] sm:$0xf]
    %v189 = vld [vmem:[%s3 + $0x188] sm:$0xf]
    %v190 = vld [vmem:[%s3 + $0x18c] sm:$0xf]
    %v191 = vld [vmem:[%s3 + $0x190] sm:$0xf]
    %v192 = vld [vmem:[%s3 + $0x194] sm:$0xf]
    %v193 = vld [vmem:[%s3 + $0x198] sm:$0xf]
    %v194 = vld [vmem:[%s3 + $0x19c] sm:$0xf]
    %v195 = vld [vmem:[%s3 + $0x1a0] sm:$0xf]
    %v196 = vld [vmem:[%s3 + $0x1a4] sm:$0xf]
    %v197 = vld [vmem:[%s3 + $0x1a8] sm:$0xf]
    %v198 = vld [vmem:[%s3 + $0x1ac] sm:$0xf]
    %v199 = vld [vmem:[%s3 + $0x1b0] sm:$0xf]
    %v200 = vld [vmem:[%s3 + $0x1b4] sm:$0xf]
    %v201 = vld [vmem:[%s3 + $0x1b8] sm:$0xf]
    %v202 = vld [vmem:[%s3 + $0x1bc] sm:$0xf]
    %v203 = vld [vmem:[%s3 + $0x1c0] sm:$0xf]
    %v204 = vld [vmem:[%s3 + $0x1c4] sm:$0xf]
    %v205 = vld [vmem:[%s3 + $0x1c8] sm:$0xf]
    %v206 = vld [vmem:[%s3 + $0x1cc] sm:$0xf]
    %v207 = vld [vmem:[%s3 + $0x1d0] sm:$0xf]
    %v208 = vld [vmem:[%s3 + $0x1d4] sm:$0xf]
    %v209 = vld [vmem:[%s3 + $0x1d8] sm:$0xf]
    %v210 = vld [vmem:[%s3 + $0x1dc] sm:$0xf]
    %v211 = vld [vmem:[%s3 + $0x1e0] sm:$0xf]
    %v212 = vld [vmem:[%s3 + $0x1e4] sm:$0xf]
    %v213 = vld [vmem:[%s3 + $0x1e8] sm:$0xf]
    %v214 = vld [vmem:[%s3 + $0x1ec] sm:$0xf]
    %v215 = vld [vmem:[%s3 + $0x1f0] sm:$0xf]
    %v216 = vld [vmem:[%s3 + $0x1f4] sm:$0xf]
    %v217 = vld [vmem:[%s3 + $0x1f8] sm:$0xf]
    %v218 = vld [vmem:[%s3 + $0x1fc] sm:$0xf]
    %v219 = vld [vmem:[%s3 + $0x200] sm:$0xf]
    %v220 = vld [vmem:[%s3 + $0x204] sm:$0xf]
    %v221 = vld [vmem:[%s3 + $0x208] sm:$0xf]
    %v222 = vld [vmem:[%s3 + $0x20c] sm:$0xf]
    %v223 = vld [vmem:[%s3 + $0x210] sm:$0xf]
    %v224 = vld [vmem:[%s3 + $0x214] sm:$0xf]
    %v225 = vld [vmem:[%s3 + $0x218] sm:$0xf]
    %v226 = vld [vmem:[%s3 + $0x21c] sm:$0xf]
    %v227 = vld [vmem:[%s3 + $0x220] sm:$0xf]
    %v228 = vld [vmem:[%s3 + $0x224] sm:$0xf]
    %v229 = vld [vmem:[%s3 + $0x228] sm:$0xf]
    %v230 = vld [vmem:[%s3 + $0x22c] sm:$0xf]
    %v231 = vld [vmem:[%s3 + $0x230] sm:$0xf]
    %v232 = vld [vmem:[%s3 + $0x234] sm:$0xf]
    %v233 = vld [vmem:[%s3 + $0x238] sm:$0xf]
    %v234 = vld [vmem:[%s3 + $0x23c] sm:$0xf]
    %v235 = vld [vmem:[%s3 + $0x240] sm:$0xf]
    %v236 = vld [vmem:[%s3 + $0x244] sm:$0xf]
    %v237 = vld [vmem:[%s3 + $0x248] sm:$0xf]
    %v238 = vld [vmem:[%s3 + $0x24c] sm:$0xf]
    %v239 = vld [vmem:[%s3 + $0x250] sm:$0xf]
    %v240 = vld [vmem:[%s3 + $0x254] sm:$0xf]
    %v241 = vld [vmem:[%s3 + $0x258] sm:$0xf]
    %v242 = vld [vmem:[%s3 + $0x25c] sm:$0xf]
    %v243 = vld [vmem:[%s3 + $0x260] sm:$0xf]
    %v244 = vld [vmem:[%s3 + $0x264] sm:$0xf]
    %v245 = vld [vmem:[%s3 + $0x268] sm:$0xf]
    %v246 = vld [vmem:[%s3 + $0x26c] sm:$0xf]
    %v247 = vld [vmem:[%s3 + $0x270] sm:$0xf]
    %v248 = vld [vmem:[%s3 + $0x274] sm:$0xf]
    %v249 = vld [vmem:[%s3 + $0x278] sm:$0xf]
    %v250 = vld [vmem:[%s3 + $0x27c] sm:$0xf]
    %v251 = vld [vmem:[%s3 + $0x280] sm:$0xf]
    %v252 = vld [vmem:[%s3 + $0x284] sm:$0xf]
    %v253 = vld [vmem:[%s3 + $0x288] sm:$0xf]
    %v254 = vld [vmem:[%s3 + $0x28c] sm:$0xf]
    %v255 = vld [vmem:[%s3 + $0x290] sm:$0xf]
    %v256 = vld [vmem:[%s3 + $0x294] sm:$0xf]
    %v257 = vld [vmem:[%s3 + $0x298] sm:$0xf]
    %v258 = vld [vmem:[%s3 + $0x29c] sm:$0xf]
    %v259 = vld [vmem:[%s3 + $0x2a0] sm:$0xf]
    %v260 = vld [vmem:[%s3 + $0x2a4] sm:$0xf]
    %v261 = vld [vmem:[%s3 + $0x2a8] sm:$0xf]
    %v262 = vld [vmem:[%s3 + $0x2ac] sm:$0xf]
    %v263 = vld [vmem:[%s3 + $0x2b0] sm:$0xf]
    %v264 = vld [vmem:[%s3 + $0x2b4] sm:$0xf]
    %v265 = vld [vmem:[%s3 + $0x2b8] sm:$0xf]
    %v266 = vld [vmem:[%s3 + $0x2bc] sm:$0xf]
    %v267 = vld [vmem:[%s3 + $0x2c0] sm:$0xf]
    %v268 = vld [vmem:[%s3 + $0x2c4] sm:$0xf]
    %v269 = vld [vmem:[%s3 + $0x2c8] sm:$0xf]
    %v270 = vld [vmem:[%s3 + $0x2cc] sm:$0x1]
    %v283 = vunpack.c.l.b16 %v79
    %v284 = vunpack.c.h.b16 %v79
    %v285 = vunpack.c.l.b16 %v80
    %v286 = vunpack.c.h.b16 %v80
    %v287 = vunpack.c.l.b16 %v81
    %v288 = vunpack.c.h.b16 %v81
    %v289 = vunpack.c.l.b16 %v82
    %v290 = vunpack.c.h.b16 %v82
    %v291 = vunpack.c.l.b16 %v83
    %v292 = vunpack.c.h.b16 %v83
    %v293 = vunpack.c.l.b16 %v84
    %v294 = vunpack.c.h.b16 %v84
    %v295 = vunpack.c.l.b16 %v85
    %v296 = vunpack.c.h.b16 %v85
    %v297 = vunpack.c.l.b16 %v86
    %v298 = vunpack.c.h.b16 %v86
    %v299 = vunpack.c.l.b16 %v87
    %v300 = vunpack.c.h.b16 %v87
    %v301 = vunpack.c.l.b16 %v88
    %v302 = vunpack.c.h.b16 %v88
    %v303 = vunpack.c.l.b16 %v89
    %v304 = vunpack.c.h.b16 %v89
    %v305 = vunpack.c.l.b16 %v90
    %v306 = vunpack.c.h.b16 %v90
    %v307 = vpack.c.b16 %v295, %v283
    %v308 = vpack.c.b16 %v296, %v284
    %v309 = vpack.c.b16 %v297, %v285
    %v310 = vpack.c.b16 %v298, %v286
    %v311 = vpack.c.b16 %v299, %v287
    %v312 = vpack.c.b16 %v300, %v288
    %v313 = vpack.c.b16 %v301, %v289
    %v314 = vpack.c.b16 %v302, %v290
    %v315 = vpack.c.b16 %v303, %v291
    %v316 = vpack.c.b16 %v304, %v292
    %v317 = vpack.c.b16 %v305, %v293
    %v318 = vpack.c.b16 %v306, %v294
    %v510 = vunpack.c.l.b16 %v91
    %v511 = vunpack.c.l.b16 %v92
    %v512 = vunpack.c.l.b16 %v93
    %v513 = vunpack.c.l.b16 %v94
    %v514 = vunpack.c.l.b16 %v95
    %v515 = vunpack.c.l.b16 %v96
    %v516 = vunpack.c.l.b16 %v97
    %v517 = vunpack.c.l.b16 %v98
    %v518 = vunpack.c.l.b16 %v99
    %v519 = vunpack.c.l.b16 %v100
    %v520 = vunpack.c.l.b16 %v101
    %v521 = vunpack.c.l.b16 %v102
    %v522 = vunpack.c.l.b16 %v103
    %v523 = vunpack.c.l.b16 %v104
    %v524 = vunpack.c.l.b16 %v105
    %v525 = vunpack.c.l.b16 %v106
    %v526 = vunpack.c.l.b16 %v107
    %v527 = vunpack.c.l.b16 %v108
    %v528 = vunpack.c.l.b16 %v109
    %v529 = vunpack.c.l.b16 %v110
    %v530 = vunpack.c.l.b16 %v111
    %v531 = vunpack.c.l.b16 %v112
    %v532 = vunpack.c.l.b16 %v113
    %v533 = vunpack.c.l.b16 %v114
    %v534 = vunpack.c.l.b16 %v115
    %v535 = vunpack.c.l.b16 %v116
    %v536 = vunpack.c.l.b16 %v117
    %v537 = vunpack.c.l.b16 %v118
    %v538 = vunpack.c.l.b16 %v119
    %v539 = vunpack.c.l.b16 %v120
    %v540 = vunpack.c.l.b16 %v121
    %v541 = vunpack.c.l.b16 %v122
    %v542 = vunpack.c.l.b16 %v123
    %v543 = vunpack.c.l.b16 %v124
    %v544 = vunpack.c.l.b16 %v125
    %v545 = vunpack.c.l.b16 %v126
    %v546 = vunpack.c.l.b16 %v127
    %v547 = vunpack.c.l.b16 %v128
    %v548 = vunpack.c.l.b16 %v129
    %v549 = vunpack.c.l.b16 %v130
    %v550 = vunpack.c.l.b16 %v131
    %v551 = vunpack.c.l.b16 %v132
    %v552 = vunpack.c.l.b16 %v133
    %v553 = vunpack.c.l.b16 %v134
    %v554 = vunpack.c.l.b16 %v135
    %v555 = vunpack.c.l.b16 %v136
    %v556 = vunpack.c.l.b16 %v137
    %v557 = vunpack.c.l.b16 %v138
    %v558 = vunpack.c.l.b16 %v139
    %v559 = vunpack.c.l.b16 %v140
    %v560 = vunpack.c.l.b16 %v141
    %v561 = vunpack.c.l.b16 %v142
    %v562 = vunpack.c.l.b16 %v143
    %v563 = vunpack.c.l.b16 %v144
    %v564 = vunpack.c.l.b16 %v145
    %v565 = vunpack.c.l.b16 %v146
    %v566 = vunpack.c.l.b16 %v147
    %v567 = vunpack.c.l.b16 %v148
    %v568 = vunpack.c.l.b16 %v149
    %v569 = vunpack.c.l.b16 %v150
    %v570 = vunpack.c.l.b16 %v151
    %v571 = vunpack.c.l.b16 %v152
    %v572 = vunpack.c.l.b16 %v153
    %v573 = vunpack.c.l.b16 %v154
    %v574 = vunpack.c.l.b16 %v155
    %v575 = vunpack.c.l.b16 %v156
    %v576 = vunpack.c.l.b16 %v157
    %v577 = vunpack.c.l.b16 %v158
    %v578 = vunpack.c.l.b16 %v159
    %v579 = vunpack.c.l.b16 %v160
    %v580 = vunpack.c.l.b16 %v161
    %v581 = vunpack.c.l.b16 %v162
    %v582 = vunpack.c.l.b16 %v163
    %v583 = vunpack.c.l.b16 %v164
    %v584 = vunpack.c.l.b16 %v165
    %v585 = vunpack.c.l.b16 %v166
    %v586 = vunpack.c.l.b16 %v167
    %v587 = vunpack.c.l.b16 %v168
    %v588 = vunpack.c.l.b16 %v169
    %v589 = vunpack.c.l.b16 %v170
    %v590 = vunpack.c.l.b16 %v171
    %v591 = vunpack.c.l.b16 %v172
    %v592 = vunpack.c.l.b16 %v173
    %v593 = vunpack.c.l.b16 %v174
    %v594 = vunpack.c.l.b16 %v175
    %v595 = vunpack.c.l.b16 %v176
    %v596 = vunpack.c.l.b16 %v177
    %v597 = vunpack.c.l.b16 %v178
    %v598 = vunpack.c.l.b16 %v179
    %v599 = vunpack.c.l.b16 %v180
    %v600 = vunpack.c.l.b16 %v181
    %v601 = vunpack.c.l.b16 %v182
    %v602 = vunpack.c.l.b16 %v183
    %v603 = vunpack.c.l.b16 %v184
    %v604 = vunpack.c.l.b16 %v185
    %v605 = vunpack.c.l.b16 %v186
    %v606 = vunpack.c.l.b16 %v187
    %v607 = vunpack.c.l.b16 %v188
    %v608 = vunpack.c.l.b16 %v189
    %v609 = vunpack.c.l.b16 %v190
    %v610 = vunpack.c.l.b16 %v191
    %v611 = vunpack.c.l.b16 %v192
    %v612 = vunpack.c.l.b16 %v193
    %v613 = vunpack.c.l.b16 %v194
    %v614 = vunpack.c.l.b16 %v195
    %v615 = vunpack.c.l.b16 %v196
    %v616 = vunpack.c.l.b16 %v197
    %v617 = vunpack.c.l.b16 %v198
    %v618 = vunpack.c.l.b16 %v199
    %v619 = vunpack.c.l.b16 %v200
    %v620 = vunpack.c.l.b16 %v201
    %v621 = vunpack.c.l.b16 %v202
    %v622 = vunpack.c.l.b16 %v203
    %v623 = vunpack.c.l.b16 %v204
    %v624 = vunpack.c.l.b16 %v205
    %v625 = vunpack.c.l.b16 %v206
    %v626 = vunpack.c.l.b16 %v207
    %v627 = vunpack.c.l.b16 %v208
    %v628 = vunpack.c.l.b16 %v209
    %v629 = vunpack.c.l.b16 %v210
    %v630 = vunpack.c.l.b16 %v211
    %v631 = vunpack.c.l.b16 %v212
    %v632 = vunpack.c.l.b16 %v213
    %v633 = vunpack.c.l.b16 %v214
    %v634 = vunpack.c.l.b16 %v215
    %v635 = vunpack.c.l.b16 %v216
    %v636 = vunpack.c.l.b16 %v217
    %v637 = vunpack.c.l.b16 %v218
    %v638 = vunpack.c.l.b16 %v219
    %v639 = vunpack.c.l.b16 %v220
    %v640 = vunpack.c.l.b16 %v221
    %v641 = vunpack.c.l.b16 %v222
    %v642 = vunpack.c.l.b16 %v223
    %v643 = vunpack.c.l.b16 %v224
    %v644 = vunpack.c.l.b16 %v225
    %v645 = vunpack.c.l.b16 %v226
    %v646 = vunpack.c.l.b16 %v227
    %v647 = vunpack.c.l.b16 %v228
    %v648 = vunpack.c.l.b16 %v229
    %v649 = vunpack.c.l.b16 %v230
    %v650 = vunpack.c.l.b16 %v231
    %v651 = vunpack.c.l.b16 %v232
    %v652 = vunpack.c.l.b16 %v233
    %v653 = vunpack.c.l.b16 %v234
    %v654 = vunpack.c.l.b16 %v235
    %v655 = vunpack.c.l.b16 %v236
    %v656 = vunpack.c.l.b16 %v237
    %v657 = vunpack.c.l.b16 %v238
    %v658 = vunpack.c.l.b16 %v239
    %v659 = vunpack.c.l.b16 %v240
    %v660 = vunpack.c.l.b16 %v241
    %v661 = vunpack.c.l.b16 %v242
    %v662 = vunpack.c.l.b16 %v243
    %v663 = vunpack.c.l.b16 %v244
    %v664 = vunpack.c.l.b16 %v245
    %v665 = vunpack.c.l.b16 %v246
    %v666 = vunpack.c.l.b16 %v247
    %v667 = vunpack.c.l.b16 %v248
    %v668 = vunpack.c.l.b16 %v249
    %v669 = vunpack.c.l.b16 %v250
    %v670 = vunpack.c.l.b16 %v251
    %v671 = vunpack.c.l.b16 %v252
    %v672 = vunpack.c.l.b16 %v253
    %v673 = vunpack.c.l.b16 %v254
    %v674 = vunpack.c.l.b16 %v255
    %v675 = vunpack.c.l.b16 %v256
    %v676 = vunpack.c.l.b16 %v257
    %v677 = vunpack.c.l.b16 %v258
    %v678 = vunpack.c.l.b16 %v259
    %v679 = vunpack.c.l.b16 %v260
    %v680 = vunpack.c.l.b16 %v261
    %v681 = vunpack.c.l.b16 %v262
    %v682 = vunpack.c.l.b16 %v263
    %v683 = vunpack.c.l.b16 %v264
    %v684 = vunpack.c.l.b16 %v265
    %v685 = vunpack.c.l.b16 %v266
    %v686 = vunpack.c.l.b16 %v267
    %v687 = vunpack.c.l.b16 %v268
    %v688 = vunpack.c.l.b16 %v269
    %v689 = vunpack.c.l.b16 %v270
    %v690 = vpack.c.b16 %v511, %v510
    %v691 = vpack.c.b16 %v513, %v512
    %v692 = vpack.c.b16 %v515, %v514
    %v693 = vpack.c.b16 %v517, %v516
    %v694 = vpack.c.b16 %v519, %v518
    %v695 = vpack.c.b16 %v521, %v520
    %v696 = vpack.c.b16 %v523, %v522
    %v697 = vpack.c.b16 %v525, %v524
    %v698 = vpack.c.b16 %v527, %v526
    %v699 = vpack.c.b16 %v529, %v528
    %v700 = vpack.c.b16 %v531, %v530
    %v701 = vpack.c.b16 %v533, %v532
    %v702 = vpack.c.b16 %v535, %v534
    %v703 = vpack.c.b16 %v537, %v536
    %v704 = vpack.c.b16 %v539, %v538
    %v705 = vpack.c.b16 %v541, %v540
    %v706 = vpack.c.b16 %v543, %v542
    %v707 = vpack.c.b16 %v545, %v544
    %v708 = vpack.c.b16 %v547, %v546
    %v709 = vpack.c.b16 %v549, %v548
    %v710 = vpack.c.b16 %v551, %v550
    %v711 = vpack.c.b16 %v553, %v552
    %v712 = vpack.c.b16 %v555, %v554
    %v713 = vpack.c.b16 %v557, %v556
    %v714 = vpack.c.b16 %v559, %v558
    %v715 = vpack.c.b16 %v561, %v560
    %v716 = vpack.c.b16 %v563, %v562
    %v717 = vpack.c.b16 %v565, %v564
    %v718 = vpack.c.b16 %v567, %v566
    %v719 = vpack.c.b16 %v569, %v568
    %v720 = vpack.c.b16 %v571, %v570
    %v721 = vpack.c.b16 %v573, %v572
    %v722 = vpack.c.b16 %v575, %v574
    %v723 = vpack.c.b16 %v577, %v576
    %v724 = vpack.c.b16 %v579, %v578
    %v725 = vpack.c.b16 %v581, %v580
    %v726 = vpack.c.b16 %v583, %v582
    %v727 = vpack.c.b16 %v585, %v584
    %v728 = vpack.c.b16 %v587, %v586
    %v729 = vpack.c.b16 %v589, %v588
    %v730 = vpack.c.b16 %v591, %v590
    %v731 = vpack.c.b16 %v593, %v592
    %v732 = vpack.c.b16 %v595, %v594
    %v733 = vpack.c.b16 %v597, %v596
    %v734 = vpack.c.b16 %v599, %v598
    %v735 = vpack.c.b16 %v601, %v600
    %v736 = vpack.c.b16 %v603, %v602
    %v737 = vpack.c.b16 %v605, %v604
    %v738 = vpack.c.b16 %v607, %v606
    %v739 = vpack.c.b16 %v609, %v608
    %v740 = vpack.c.b16 %v611, %v610
    %v741 = vpack.c.b16 %v613, %v612
    %v742 = vpack.c.b16 %v615, %v614
    %v743 = vpack.c.b16 %v617, %v616
    %v744 = vpack.c.b16 %v619, %v618
    %v745 = vpack.c.b16 %v621, %v620
    %v746 = vpack.c.b16 %v623, %v622
    %v747 = vpack.c.b16 %v625, %v624
    %v748 = vpack.c.b16 %v627, %v626
    %v749 = vpack.c.b16 %v629, %v628
    %v750 = vpack.c.b16 %v631, %v630
    %v751 = vpack.c.b16 %v633, %v632
    %v752 = vpack.c.b16 %v635, %v634
    %v753 = vpack.c.b16 %v637, %v636
    %v754 = vpack.c.b16 %v639, %v638
    %v755 = vpack.c.b16 %v641, %v640
    %v756 = vpack.c.b16 %v643, %v642
    %v757 = vpack.c.b16 %v645, %v644
    %v758 = vpack.c.b16 %v647, %v646
    %v759 = vpack.c.b16 %v649, %v648
    %v760 = vpack.c.b16 %v651, %v650
    %v761 = vpack.c.b16 %v653, %v652
    %v762 = vpack.c.b16 %v655, %v654
    %v763 = vpack.c.b16 %v657, %v656
    %v764 = vpack.c.b16 %v659, %v658
    %v765 = vpack.c.b16 %v661, %v660
    %v766 = vpack.c.b16 %v663, %v662
    %v767 = vpack.c.b16 %v665, %v664
    %v768 = vpack.c.b16 %v667, %v666
    %v769 = vpack.c.b16 %v669, %v668
    %v770 = vpack.c.b16 %v671, %v670
    %v771 = vpack.c.b16 %v673, %v672
    %v772 = vpack.c.b16 %v675, %v674
    %v773 = vpack.c.b16 %v677, %v676
    %v774 = vpack.c.b16 %v679, %v678
    %v775 = vpack.c.b16 %v681, %v680
    %v776 = vpack.c.b16 %v683, %v682
    %v777 = vpack.c.b16 %v685, %v684
    %v778 = vpack.c.b16 %v687, %v686
    %v779 = vpack.c.b16 %v689, %v688
    %vm869 = vcmask 203776
    %v871 = vsel %vm869, %v318, 0
    %vm873 = vcmask 1043456
    %vm874 = vcmask 1044480
    %v875 = vsel %vm873, 4294967295, 65535
    %v876 = vsel %vm874, %v875, 0
    %v878 = vand.u32 %v779, %v876
    %880 = vmatpush.bf16.msra.mxu0 %v697
    %881 = vmatpush.bf16.msra.mxu0 %v696
    %882 = vmatpush.bf16.msra.mxu0 %v695
    %883 = vmatpush.bf16.msra.mxu0 %v694
    %884 = vmatpush.bf16.msra.mxu0 %v693
    %885 = vmatpush.bf16.msra.mxu0 %v692
    %886 = vmatpush.bf16.msra.mxu0 %v691
    %887 = vmatpush.bf16.msra.mxu0 %v690
    %888 = vmatmul.bf16.gmra.mxu0 %v307
    %v889 = vpop.f32.mrf.mxu0
    %v890 = vadd.f32 0.0, %v889
    %v891 = vpop.f32.mrf.mxu0
    %v892 = vadd.f32 0.0, %v891
    %893 = vdwg.mxu0
    %894 = vmatpush.bf16.msra.mxu0 %v705
    %895 = vmatpush.bf16.msra.mxu0 %v704
    %896 = vmatpush.bf16.msra.mxu0 %v703
    %897 = vmatpush.bf16.msra.mxu0 %v702
    %898 = vmatpush.bf16.msra.mxu0 %v701
    %899 = vmatpush.bf16.msra.mxu0 %v700
    %900 = vmatpush.bf16.msra.mxu0 %v699
    %901 = vmatpush.bf16.msra.mxu0 %v698
    %902 = vmatmul.bf16.gmra.mxu0 %v308
    %v903 = vpop.f32.mrf.mxu0
    %v904 = vadd.f32 %v890, %v903
    %v905 = vpop.f32.mrf.mxu0
    %v906 = vadd.f32 %v892, %v905
    %907 = vdwg.mxu0
    %908 = vmatpush.bf16.msra.mxu0 %v713
    %909 = vmatpush.bf16.msra.mxu0 %v712
    %910 = vmatpush.bf16.msra.mxu0 %v711
    %911 = vmatpush.bf16.msra.mxu0 %v710
    %912 = vmatpush.bf16.msra.mxu0 %v709
    %913 = vmatpush.bf16.msra.mxu0 %v708
    %914 = vmatpush.bf16.msra.mxu0 %v707
    %915 = vmatpush.bf16.msra.mxu0 %v706
    %916 = vmatmul.bf16.gmra.mxu0 %v309
    %v917 = vpop.f32.mrf.mxu0
    %v918 = vadd.f32 %v904, %v917
    %v919 = vpop.f32.mrf.mxu0
    %v920 = vadd.f32 %v906, %v919
    %921 = vdwg.mxu0
    %922 = vmatpush.bf16.msra.mxu0 %v721
    %923 = vmatpush.bf16.msra.mxu0 %v720
    %924 = vmatpush.bf16.msra.mxu0 %v719
    %925 = vmatpush.bf16.msra.mxu0 %v718
    %926 = vmatpush.bf16.msra.mxu0 %v717
    %927 = vmatpush.bf16.msra.mxu0 %v716
    %928 = vmatpush.bf16.msra.mxu0 %v715
    %929 = vmatpush.bf16.msra.mxu0 %v714
    %930 = vmatmul.bf16.gmra.mxu0 %v310
    %v931 = vpop.f32.mrf.mxu0
    %v932 = vadd.f32 %v918, %v931
    %v933 = vpop.f32.mrf.mxu0
    %v934 = vadd.f32 %v920, %v933
    %935 = vdwg.mxu0
    %936 = vmatpush.bf16.msra.mxu0 %v729
    %937 = vmatpush.bf16.msra.mxu0 %v728
    %938 = vmatpush.bf16.msra.mxu0 %v727
    %939 = vmatpush.bf16.msra.mxu0 %v726
    %940 = vmatpush.bf16.msra.mxu0 %v725
    %941 = vmatpush.bf16.msra.mxu0 %v724
    %942 = vmatpush.bf16.msra.mxu0 %v723
    %943 = vmatpush.bf16.msra.mxu0 %v722
    %944 = vmatmul.bf16.gmra.mxu0 %v311
    %v945 = vpop.f32.mrf.mxu0
    %v946 = vadd.f32 %v932, %v945
    %v947 = vpop.f32.mrf.mxu0
    %v948 = vadd.f32 %v934, %v947
    %949 = vdwg.mxu0
    %950 = vmatpush.bf16.msra.mxu0 %v737
    %951 = vmatpush.bf16.msra.mxu0 %v736
    %952 = vmatpush.bf16.msra.mxu0 %v735
    %953 = vmatpush.bf16.msra.mxu0 %v734
    %954 = vmatpush.bf16.msra.mxu0 %v733
    %955 = vmatpush.bf16.msra.mxu0 %v732
    %956 = vmatpush.bf16.msra.mxu0 %v731
    %957 = vmatpush.bf16.msra.mxu0 %v730
    %958 = vmatmul.bf16.gmra.mxu0 %v312
    %v959 = vpop.f32.mrf.mxu0
    %v960 = vadd.f32 %v946, %v959
    %v961 = vpop.f32.mrf.mxu0
    %v962 = vadd.f32 %v948, %v961
    %963 = vdwg.mxu0
    %964 = vmatpush.bf16.msra.mxu0 %v745
    %965 = vmatpush.bf16.msra.mxu0 %v744
    %966 = vmatpush.bf16.msra.mxu0 %v743
    %967 = vmatpush.bf16.msra.mxu0 %v742
    %968 = vmatpush.bf16.msra.mxu0 %v741
    %969 = vmatpush.bf16.msra.mxu0 %v740
    %970 = vmatpush.bf16.msra.mxu0 %v739
    %971 = vmatpush.bf16.msra.mxu0 %v738
    %972 = vmatmul.bf16.gmra.mxu0 %v313
    %v973 = vpop.f32.mrf.mxu0
    %v974 = vadd.f32 %v960, %v973
    %v975 = vpop.f32.mrf.mxu0
    %v976 = vadd.f32 %v962, %v975
    %977 = vdwg.mxu0
    %978 = vmatpush.bf16.msra.mxu0 %v753
    %979 = vmatpush.bf16.msra.mxu0 %v752
    %980 = vmatpush.bf16.msra.mxu0 %v751
    %981 = vmatpush.bf16.msra.mxu0 %v750
    %982 = vmatpush.bf16.msra.mxu0 %v749
    %983 = vmatpush.bf16.msra.mxu0 %v748
    %984 = vmatpush.bf16.msra.mxu0 %v747
    %985 = vmatpush.bf16.msra.mxu0 %v746
    %986 = vmatmul.bf16.gmra.mxu0 %v314
    %v987 = vpop.f32.mrf.mxu0
    %v988 = vadd.f32 %v974, %v987
    %v989 = vpop.f32.mrf.mxu0
    %v990 = vadd.f32 %v976, %v989
    %991 = vdwg.mxu0
    %992 = vmatpush.bf16.msra.mxu0 %v761
    %993 = vmatpush.bf16.msra.mxu0 %v760
    %994 = vmatpush.bf16.msra.mxu0 %v759
    %995 = vmatpush.bf16.msra.mxu0 %v758
    %996 = vmatpush.bf16.msra.mxu0 %v757
    %997 = vmatpush.bf16.msra.mxu0 %v756
    %998 = vmatpush.bf16.msra.mxu0 %v755
    %999 = vmatpush.bf16.msra.mxu0 %v754
    %1000 = vmatmul.bf16.gmra.mxu0 %v315
    %v1001 = vpop.f32.mrf.mxu0
    %v1002 = vadd.f32 %v988, %v1001
    %v1003 = vpop.f32.mrf.mxu0
    %v1004 = vadd.f32 %v990, %v1003
    %1005 = vdwg.mxu0
    %1006 = vmatpush.bf16.msra.mxu0 %v769
    %1007 = vmatpush.bf16.msra.mxu0 %v768
    %1008 = vmatpush.bf16.msra.mxu0 %v767
    %1009 = vmatpush.bf16.msra.mxu0 %v766
    %1010 = vmatpush.bf16.msra.mxu0 %v765
    %1011 = vmatpush.bf16.msra.mxu0 %v764
    %1012 = vmatpush.bf16.msra.mxu0 %v763
    %1013 = vmatpush.bf16.msra.mxu0 %v762
    %1014 = vmatmul.bf16.gmra.mxu0 %v316
    %v1015 = vpop.f32.mrf.mxu0
    %v1016 = vadd.f32 %v1002, %v1015
    %v1017 = vpop.f32.mrf.mxu0
    %v1018 = vadd.f32 %v1004, %v1017
    %1019 = vdwg.mxu0
    %1020 = vmatpush.bf16.msra.mxu0 %v777
    %1021 = vmatpush.bf16.msra.mxu0 %v776
    %1022 = vmatpush.bf16.msra.mxu0 %v775
    %1023 = vmatpush.bf16.msra.mxu0 %v774
    %1024 = vmatpush.bf16.msra.mxu0 %v773
    %1025 = vmatpush.bf16.msra.mxu0 %v772
    %1026 = vmatpush.bf16.msra.mxu0 %v771
    %1027 = vmatpush.bf16.msra.mxu0 %v770
    %1028 = vmatmul.bf16.gmra.mxu0 %v317
    %v1029 = vpop.f32.mrf.mxu0
    %v1030 = vadd.f32 %v1016, %v1029
    %v1031 = vpop.f32.mrf.mxu0
    %v1032 = vadd.f32 %v1018, %v1031
    %1033 = vdwg.mxu0
    %1034 = vmatpush.bf16.msra.mxu0 0
    %1035 = vmatpush.bf16.msra.mxu0 0
    %1036 = vmatpush.bf16.msra.mxu0 0
    %1037 = vmatpush.bf16.msra.mxu0 0
    %1038 = vmatpush.bf16.msra.mxu0 0
    %1039 = vmatpush.bf16.msra.mxu0 0
    %1040 = vmatpush.bf16.msra.mxu0 %v878
    %1041 = vmatpush.bf16.msra.mxu0 %v778
    %1042 = vmatmul.bf16.gmra.mxu0 %v871
    %v1043 = vpop.f32.mrf.mxu0
    %v1044 = vadd.f32 %v1030, %v1043
    %v1045 = vpop.f32.mrf.mxu0
    %v1046 = vadd.f32 %v1032, %v1045
    %1047 = vdwg.mxu0
    %v1048 = vpack.c.bf16 %v1046, %v1044
    %v1049 = vld [vmem:[%s5] sm:$0x1]
    %v1051 = vperm.slane %v1049, 0
    %vm1053 = vcmask 130048
    %v1055 = vsel %vm1053, %v78, 0
    %1057 = vmatpush.bf16.msra.mxu0 0
    %1058 = vmatpush.bf16.msra.mxu0 0
    %1059 = vmatpush.bf16.msra.mxu0 0
    %1060 = vmatpush.bf16.msra.mxu0 0
    %1061 = vmatpush.bf16.msra.mxu0 0
    %1062 = vmatpush.bf16.msra.mxu0 0
    %1063 = vmatpush.bf16.msra.mxu0 0
    %1064 = vmatpush.bf16.msra.mxu0 %v1048
    %1065 = vmatmul.bf16.gmra.mxu0 %v1055
    %v1066 = vpop.f32.mrf.mxu0
    %v1067 = vadd.f32 %v1051, %v1066
    %v1068 = vpop.f32.mrf.mxu0
    %v1069 = vadd.f32 %v1051, %v1068
    %1070 = vdwg.mxu0
    %v1071 = vmax.f32 %v1067, 0.0
    %v1072 = vmax.f32 %v1069, 0.0
    %v1073 = vpack.c.bf16 %v1072, %v1071
    %v1074 = vld [vmem:[#allocation4] sm:$0xf]
    %v1075 = vld [vmem:[#allocation4 + $0x4] sm:$0xf]
    %v1076 = vld [vmem:[#allocation4 + $0x8] sm:$0xf]
    %v1077 = vld [vmem:[#allocation4 + $0xc] sm:$0xf]
    %v1078 = vld [vmem:[#allocation4 + $0x10] sm:$0xf]
    %v1079 = vld [vmem:[#allocation4 + $0x14] sm:$0xf]
    %v1080 = vld [vmem:[#allocation4 + $0x18] sm:$0xf]
    %v1081 = vld [vmem:[#allocation4 + $0x1c] sm:$0xf]
    %v1082 = vld [vmem:[#allocation4 + $0x20] sm:$0xf]
    %v1083 = vld [vmem:[#allocation4 + $0x24] sm:$0xf]
    %v1084 = vld [vmem:[#allocation4 + $0x28] sm:$0xf]
    %v1085 = vld [vmem:[#allocation4 + $0x2c] sm:$0xf]
    %v1086 = vld [vmem:[#allocation4 + $0x30] sm:$0xf]
    %v1087 = vld [vmem:[#allocation4 + $0x34] sm:$0xf]
    %v1088 = vld [vmem:[#allocation4 + $0x38] sm:$0xf]
    %v1089 = vld [vmem:[#allocation4 + $0x3c] sm:$0xf]
    %v1106 = vunpack.c.l.b16 %v1074
    %v1107 = vunpack.c.l.b16 %v1075
    %v1108 = vunpack.c.l.b16 %v1076
    %v1109 = vunpack.c.l.b16 %v1077
    %v1110 = vunpack.c.l.b16 %v1078
    %v1111 = vunpack.c.l.b16 %v1079
    %v1112 = vunpack.c.l.b16 %v1080
    %v1113 = vunpack.c.l.b16 %v1081
    %v1114 = vunpack.c.l.b16 %v1082
    %v1115 = vunpack.c.l.b16 %v1083
    %v1116 = vunpack.c.l.b16 %v1084
    %v1117 = vunpack.c.l.b16 %v1085
    %v1118 = vunpack.c.l.b16 %v1086
    %v1119 = vunpack.c.l.b16 %v1087
    %v1120 = vunpack.c.l.b16 %v1088
    %v1121 = vunpack.c.l.b16 %v1089
    %v1122 = vpack.c.b16 %v1107, %v1106
    %v1123 = vpack.c.b16 %v1109, %v1108
    %v1124 = vpack.c.b16 %v1111, %v1110
    %v1125 = vpack.c.b16 %v1113, %v1112
    %v1126 = vpack.c.b16 %v1115, %v1114
    %v1127 = vpack.c.b16 %v1117, %v1116
    %v1128 = vpack.c.b16 %v1119, %v1118
    %v1129 = vpack.c.b16 %v1121, %v1120
    %1138 = vmatpush.bf16.msra.mxu0 %v1129
    %1139 = vmatpush.bf16.msra.mxu0 %v1128
    %1140 = vmatpush.bf16.msra.mxu0 %v1127
    %1141 = vmatpush.bf16.msra.mxu0 %v1126
    %1142 = vmatpush.bf16.msra.mxu0 %v1125
    %1143 = vmatpush.bf16.msra.mxu0 %v1124
    %1144 = vmatpush.bf16.msra.mxu0 %v1123
    %1145 = vmatpush.bf16.msra.mxu0 %v1122
    %1146 = vmatmul.bf16.gmra.mxu0 %v1073
    %v1147 = vpop.f32.mrf.mxu0
    %v1148 = vadd.f32 0.0, %v1147
    %v1149 = vpop.f32.mrf.mxu0
    %v1150 = vadd.f32 0.0, %v1149
    %1151 = vdwg.mxu0
    %v1152 = vld [vmem:[%s7] sm:$0xff]
    %v1153 = vld [vmem:[%s7 + $0x8] sm:$0xff]
    %v1154 = vld [vmem:[%s7 + $0x10] sm:$0xff]
    %v1155 = vld [vmem:[%s7 + $0x18] sm:$0xff]
    %v1156 = vld [vmem:[%s7 + $0x20] sm:$0xff]
    %v1157 = vld [vmem:[%s7 + $0x28] sm:$0xff]
    %v1158 = vld [vmem:[%s7 + $0x30] sm:$0xff]
    %v1159 = vld [vmem:[%s7 + $0x38] sm:$0xff]
    %v1160 = vld [vmem:[%s7 + $0x40] sm:$0xff]
    %v1161 = vld [vmem:[%s7 + $0x48] sm:$0xff]
    %v1162 = vld [vmem:[%s7 + $0x50] sm:$0xff]
    %v1163 = vld [vmem:[%s7 + $0x58] sm:$0xff]
    %v1164 = vld [vmem:[%s7 + $0x60] sm:$0xff]
    %v1165 = vld [vmem:[%s7 + $0x68] sm:$0xff]
    %v1166 = vld [vmem:[%s7 + $0x70] sm:$0xff]
    %v1167 = vld [vmem:[%s7 + $0x78] sm:$0xff]
    %1168 = vmatpush.msra.mxu0 %v1167
    %1169 = vmatpush.msra.mxu0 %v1166
    %1170 = vmatpush.msra.mxu0 %v1165
    %1171 = vmatpush.msra.mxu0 %v1164
    %1172 = vmatpush.msra.mxu0 %v1163
    %1173 = vmatpush.msra.mxu0 %v1162
    %1174 = vmatpush.msra.mxu0 %v1161
    %1175 = vmatpush.msra.mxu0 %v1160
    %1176 = vmatpush.msra.mxu0 %v1159
    %1177 = vmatpush.msra.mxu0 %v1158
    %1178 = vmatpush.msra.mxu0 %v1157
    %1179 = vmatpush.msra.mxu0 %v1156
    %1180 = vmatpush.msra.mxu0 %v1155
    %1181 = vmatpush.msra.mxu0 %v1154
    %1182 = vmatpush.msra.mxu0 %v1153
    %1183 = vmatpush.msra.mxu0 %v1152
    %1184 = vmatmul.f32.gmra.mxu0 %v1148
    %v1185 = vpop.f32.mrf.mxu0
    %v1186 = vadd.f32 0.0, %v1185
    %1187 = vmatmul.f32.gmra.mxu0 %v1150
    %v1188 = vpop.f32.mrf.mxu0
    %v1189 = vadd.f32 0.0, %v1188
    %1190 = vdwg.mxu0
    %v1191 = vld [vmem:[%s8] sm:$0xff]
    %v1192 = vld [vmem:[%s8 + $0x8] sm:$0xff]
    %v1193 = vld [vmem:[%s8 + $0x10] sm:$0xff]
    %v1194 = vld [vmem:[%s8 + $0x18] sm:$0xff]
    %v1195 = vld [vmem:[%s8 + $0x20] sm:$0xff]
    %v1196 = vld [vmem:[%s8 + $0x28] sm:$0xff]
    %v1197 = vld [vmem:[%s8 + $0x30] sm:$0xff]
    %v1198 = vld [vmem:[%s8 + $0x38] sm:$0xff]
    %v1199 = vld [vmem:[%s8 + $0x40] sm:$0xff]
    %v1200 = vld [vmem:[%s8 + $0x48] sm:$0xff]
    %v1201 = vld [vmem:[%s8 + $0x50] sm:$0xff]
    %v1202 = vld [vmem:[%s8 + $0x58] sm:$0xff]
    %v1203 = vld [vmem:[%s8 + $0x60] sm:$0xff]
    %v1204 = vld [vmem:[%s8 + $0x68] sm:$0xff]
    %v1205 = vld [vmem:[%s8 + $0x70] sm:$0xff]
    %v1206 = vld [vmem:[%s8 + $0x78] sm:$0xff]
    %1207 = vmatpush.msra.mxu0 %v1206
    %1208 = vmatpush.msra.mxu0 %v1205
    %1209 = vmatpush.msra.mxu0 %v1204
    %1210 = vmatpush.msra.mxu0 %v1203
    %1211 = vmatpush.msra.mxu0 %v1202
    %1212 = vmatpush.msra.mxu0 %v1201
    %1213 = vmatpush.msra.mxu0 %v1200
    %1214 = vmatpush.msra.mxu0 %v1199
    %1215 = vmatpush.msra.mxu0 %v1198
    %1216 = vmatpush.msra.mxu0 %v1197
    %1217 = vmatpush.msra.mxu0 %v1196
    %1218 = vmatpush.msra.mxu0 %v1195
    %1219 = vmatpush.msra.mxu0 %v1194
    %1220 = vmatpush.msra.mxu0 %v1193
    %1221 = vmatpush.msra.mxu0 %v1192
    %1222 = vmatpush.msra.mxu0 %v1191
    %1223 = vmatmul.f32.gmra.mxu0 %v1148
    %v1224 = vpop.f32.mrf.mxu0
    %v1225 = vadd.f32 0.0, %v1224
    %1226 = vmatmul.f32.gmra.mxu0 %v1150
    %v1227 = vpop.f32.mrf.mxu0
    %v1228 = vadd.f32 0.0, %v1227
    %1229 = vdwg.mxu0
    %1230 = vxpose.xlu0.b32.start [1/16] %v1186, 128
    %1231 = vxpose.xlu0.b32.cont [2/16] %v1189, 128
    %1232 = vxpose.xlu0.b32.cont [3/16] 0.0, 128
    %1233 = vxpose.xlu0.b32.cont [4/16] 0.0, 128
    %1234 = vxpose.xlu0.b32.cont [5/16] 0.0, 128
    %1235 = vxpose.xlu0.b32.cont [6/16] 0.0, 128
    %1236 = vxpose.xlu0.b32.cont [7/16] 0.0, 128
    %1237 = vxpose.xlu0.b32.cont [8/16] 0.0, 128
    %1238 = vxpose.xlu0.b32.cont [9/16] 0.0, 128
    %1239 = vxpose.xlu0.b32.cont [10/16] 0.0, 128
    %1240 = vxpose.xlu0.b32.cont [11/16] 0.0, 128
    %1241 = vxpose.xlu0.b32.cont [12/16] 0.0, 128
    %1242 = vxpose.xlu0.b32.cont [13/16] 0.0, 128
    %1243 = vxpose.xlu0.b32.cont [14/16] 0.0, 128
    %1244 = vxpose.xlu0.b32.cont [15/16] 0.0, 128
    %1245 = vxpose.xlu0.b32.end [16/16] 0.0, 128
    %v1246 = vpop.trf.xlu0
    %v1247 = vpop.trf.xlu0
    %v1248 = vpop.trf.xlu0
    %v1249 = vpop.trf.xlu0
    %v1250 = vpop.trf.xlu0
    %v1251 = vpop.trf.xlu0
    %v1252 = vpop.trf.xlu0
    %v1253 = vpop.trf.xlu0
    %v1254 = vpop.trf.xlu0
    %v1255 = vpop.trf.xlu0
    %v1256 = vpop.trf.xlu0
    %v1257 = vpop.trf.xlu0
    %v1258 = vpop.trf.xlu0
    %v1259 = vpop.trf.xlu0
    %v1260 = vpop.trf.xlu0
    %v1261 = vpop.trf.xlu0
    %1263 = vset.pattern.permute.xlu0 0
    %1264 = vperm.xlu0 %1263, %v1225
    %v1265 = vpop.permute.xlu0 %1264
    %1268 = vset.pattern.permute.xlu0 0
    %1269 = vperm.xlu0 %1268, %v1228
    %v1270 = vpop.permute.xlu0 %1269
    %v1272 = vperm.slane %v1246, 0
    %v1273 = vadd.f32 %v1265, %v1272
    %v1274 = vadd.f32 %v1270, %v1272
    %vm1275 = vcmp.gt.f32.partialorder %v1273, 0.0
    %vm1276 = vcmp.gt.f32.partialorder %v1274, 0.0
    %v1277 = vmul.f32 %v1273, 0.2
    %v1278 = vmul.f32 %v1274, 0.2
    %v1279 = vsel %vm1275, %v1273, %v1277
    %v1280 = vsel %vm1276, %v1274, %v1278
    %vm1281 = vcmp.gt.f32.partialorder %v74, 0.0
    %vm1282 = vcmp.gt.f32.partialorder %v75, 0.0
    %v1283 = vsel %vm1281, %v1279, -1e+30
    %v1284 = vsel %vm1282, %v1280, -1e+30
    %v1285 = vsel %vm1053, %v1283, -inf
    %1286 = vmax.xlane.f32.xlu0 %v1285
    %v1287 = vpop.xlane.xlu0 %1286
    %v1288 = vsel %vm1053, %v1284, -inf
    %1289 = vmax.xlane.f32.xlu0 %v1288
    %v1290 = vpop.xlane.xlu0 %1289
    %v1291 = vsub.f32 %v1283, %v1287
    %v1292 = vsub.f32 %v1284, %v1290
    %v1293 = vmul.f32 %v1291, 1.442695
    %v1294 = vpow.pop %v1293
    %v1295 = vmul.f32 %v1292, 1.442695
    %v1296 = vpow.pop %v1295
    %v1297 = vsel %vm1053, %v1294, 0.0
    %1298 = vadd.xlane.f32.xlu0 %v1297
    %v1299 = vpop.xlane.xlu0 %1298
    %v1300 = vsel %vm1053, %v1296, 0.0
    %1301 = vadd.xlane.f32.xlu0 %v1300
    %v1302 = vpop.xlane.xlu0 %1301
    %v1303 = vrcp.pop %v1299
    %v1304 = vrcp.pop %v1302
    %v1305 = vmul.f32 %v1294, %v1303
    %v1306 = vmul.f32 %v1296, %v1304
    %1307 = vset.pattern.permute.xlu0 1
    %1308 = vperm.xlu0 %1307, %v1225
    %v1309 = vpop.permute.xlu0 %1308
    %1311 = vset.pattern.permute.xlu0 1
    %1312 = vperm.xlu0 %1311, %v1228
    %v1313 = vpop.permute.xlu0 %1312
    %v1315 = vperm.slane %v1246, 1
    %v1316 = vadd.f32 %v1309, %v1315
    %v1317 = vadd.f32 %v1313, %v1315
    %vm1318 = vcmp.gt.f32.partialorder %v1316, 0.0
    %vm1319 = vcmp.gt.f32.partialorder %v1317, 0.0
    %v1320 = vmul.f32 %v1316, 0.2
    %v1321 = vmul.f32 %v1317, 0.2
    %v1322 = vsel %vm1318, %v1316, %v1320
    %v1323 = vsel %vm1319, %v1317, %v1321
    %v1324 = vsel %vm1281, %v1322, -1e+30
    %v1325 = vsel %vm1282, %v1323, -1e+30
    %v1326 = vsel %vm1053, %v1324, -inf
    %1327 = vmax.xlane.f32.xlu0 %v1326
    %v1328 = vpop.xlane.xlu0 %1327
    %v1329 = vsel %vm1053, %v1325, -inf
    %1330 = vmax.xlane.f32.xlu0 %v1329
    %v1331 = vpop.xlane.xlu0 %1330
    %v1332 = vsub.f32 %v1324, %v1328
    %v1333 = vsub.f32 %v1325, %v1331
    %v1334 = vmul.f32 %v1332, 1.442695
    %v1335 = vpow.pop %v1334
    %v1336 = vmul.f32 %v1333, 1.442695
    %v1337 = vpow.pop %v1336
    %v1338 = vsel %vm1053, %v1335, 0.0
    %1339 = vadd.xlane.f32.xlu0 %v1338
    %v1340 = vpop.xlane.xlu0 %1339
    %v1341 = vsel %vm1053, %v1337, 0.0
    %1342 = vadd.xlane.f32.xlu0 %v1341
    %v1343 = vpop.xlane.xlu0 %1342
    %v1344 = vrcp.pop %v1340
    %v1345 = vrcp.pop %v1343
    %v1346 = vmul.f32 %v1335, %v1344
    %v1347 = vmul.f32 %v1337, %v1345
    %1350 = vrot.lane.b32.xlu0 %v1148, 112
    %v1351 = vpop.permute.xlu0 %1350
    %1352 = vrot.lane.b32.xlu0 %v1150, 112
    %v1353 = vpop.permute.xlu0 %1352
    %v1357 = vsel %vm1053, %v1346, 0
    %v1360 = vsel %vm1053, %v1347, 0
    %1362 = vmatpush.msra.mxu0 0.0
    %1363 = vmatpush.msra.mxu0 0.0
    %1364 = vmatpush.msra.mxu0 0.0
    %1365 = vmatpush.msra.mxu0 0.0
    %1366 = vmatpush.msra.mxu0 0.0
    %1367 = vmatpush.msra.mxu0 0.0
    %1368 = vmatpush.msra.mxu0 0.0
    %1369 = vmatpush.msra.mxu0 0.0
    %1370 = vmatpush.msra.mxu0 0.0
    %1371 = vmatpush.msra.mxu0 0.0
    %1372 = vmatpush.msra.mxu0 0.0
    %1373 = vmatpush.msra.mxu0 0.0
    %1374 = vmatpush.msra.mxu0 0.0
    %1375 = vmatpush.msra.mxu0 0.0
    %1376 = vmatpush.msra.mxu0 %v1353
    %1377 = vmatpush.msra.mxu0 %v1351
    %1378 = vmatmul.f32.gmra.mxu0 %v1357
    %v1379 = vpop.f32.mrf.mxu0
    %v1380 = vadd.f32 0.0, %v1379
    %1381 = vmatmul.f32.gmra.mxu0 %v1360
    %v1382 = vpop.f32.mrf.mxu0
    %v1383 = vadd.f32 0.0, %v1382
    %1384 = vdwg.mxu0
    %v1386 = vsel %vm1053, %v1305, 0
    %v1389 = vsel %vm1053, %v1306, 0
    %1391 = vmatpush.msra.mxu0 0.0
    %1392 = vmatpush.msra.mxu0 0.0
    %1393 = vmatpush.msra.mxu0 0.0
    %1394 = vmatpush.msra.mxu0 0.0
    %1395 = vmatpush.msra.mxu0 0.0
    %1396 = vmatpush.msra.mxu0 0.0
    %1397 = vmatpush.msra.mxu0 0.0
    %1398 = vmatpush.msra.mxu0 0.0
    %1399 = vmatpush.msra.mxu0 0.0
    %1400 = vmatpush.msra.mxu0 0.0
    %1401 = vmatpush.msra.mxu0 0.0
    %1402 = vmatpush.msra.mxu0 0.0
    %1403 = vmatpush.msra.mxu0 0.0
    %1404 = vmatpush.msra.mxu0 0.0
    %1405 = vmatpush.msra.mxu0 %v1150
    %1406 = vmatpush.msra.mxu0 %v1148
    %1407 = vmatmul.f32.gmra.mxu0 %v1386
    %v1408 = vpop.f32.mrf.mxu0
    %v1409 = vadd.f32 %v1380, %v1408
    %1410 = vmatmul.f32.gmra.mxu0 %v1389
    %v1411 = vpop.f32.mrf.mxu0
    %v1412 = vadd.f32 %v1383, %v1411
    %1413 = vdwg.mxu0
    %1414 = vset.pattern.permute.xlu0 2
    %1415 = vperm.xlu0 %1414, %v1225
    %v1416 = vpop.permute.xlu0 %1415
    %1418 = vset.pattern.permute.xlu0 2
    %1419 = vperm.xlu0 %1418, %v1228
    %v1420 = vpop.permute.xlu0 %1419
    %v1422 = vperm.slane %v1246, 2
    %v1423 = vadd.f32 %v1416, %v1422
    %v1424 = vadd.f32 %v1420, %v1422
    %vm1425 = vcmp.gt.f32.partialorder %v1423, 0.0
    %vm1426 = vcmp.gt.f32.partialorder %v1424, 0.0
    %v1427 = vmul.f32 %v1423, 0.2
    %v1428 = vmul.f32 %v1424, 0.2
    %v1429 = vsel %vm1425, %v1423, %v1427
    %v1430 = vsel %vm1426, %v1424, %v1428
    %v1431 = vsel %vm1281, %v1429, -1e+30
    %v1432 = vsel %vm1282, %v1430, -1e+30
    %v1433 = vsel %vm1053, %v1431, -inf
    %1434 = vmax.xlane.f32.xlu0 %v1433
    %v1435 = vpop.xlane.xlu0 %1434
    %v1436 = vsel %vm1053, %v1432, -inf
    %1437 = vmax.xlane.f32.xlu0 %v1436
    %v1438 = vpop.xlane.xlu0 %1437
    %v1439 = vsub.f32 %v1431, %v1435
    %v1440 = vsub.f32 %v1432, %v1438
    %v1441 = vmul.f32 %v1439, 1.442695
    %v1442 = vpow.pop %v1441
    %v1443 = vmul.f32 %v1440, 1.442695
    %v1444 = vpow.pop %v1443
    %v1445 = vsel %vm1053, %v1442, 0.0
    %1446 = vadd.xlane.f32.xlu0 %v1445
    %v1447 = vpop.xlane.xlu0 %1446
    %v1448 = vsel %vm1053, %v1444, 0.0
    %1449 = vadd.xlane.f32.xlu0 %v1448
    %v1450 = vpop.xlane.xlu0 %1449
    %v1451 = vrcp.pop %v1447
    %v1452 = vrcp.pop %v1450
    %v1453 = vmul.f32 %v1442, %v1451
    %v1454 = vmul.f32 %v1444, %v1452
    %1455 = vrot.lane.b32.xlu0 %v1148, 96
    %v1456 = vpop.permute.xlu0 %1455
    %1457 = vrot.lane.b32.xlu0 %v1150, 96
    %v1458 = vpop.permute.xlu0 %1457
    %v1462 = vsel %vm1053, %v1453, 0
    %v1465 = vsel %vm1053, %v1454, 0
    %1467 = vmatpush.msra.mxu0 0.0
    %1468 = vmatpush.msra.mxu0 0.0
    %1469 = vmatpush.msra.mxu0 0.0
    %1470 = vmatpush.msra.mxu0 0.0
    %1471 = vmatpush.msra.mxu0 0.0
    %1472 = vmatpush.msra.mxu0 0.0
    %1473 = vmatpush.msra.mxu0 0.0
    %1474 = vmatpush.msra.mxu0 0.0
    %1475 = vmatpush.msra.mxu0 0.0
    %1476 = vmatpush.msra.mxu0 0.0
    %1477 = vmatpush.msra.mxu0 0.0
    %1478 = vmatpush.msra.mxu0 0.0
    %1479 = vmatpush.msra.mxu0 0.0
    %1480 = vmatpush.msra.mxu0 0.0
    %1481 = vmatpush.msra.mxu0 %v1458
    %1482 = vmatpush.msra.mxu0 %v1456
    %1483 = vmatmul.f32.gmra.mxu0 %v1462
    %v1484 = vpop.f32.mrf.mxu0
    %v1485 = vadd.f32 0.0, %v1484
    %1486 = vmatmul.f32.gmra.mxu0 %v1465
    %v1487 = vpop.f32.mrf.mxu0
    %v1488 = vadd.f32 0.0, %v1487
    %1489 = vdwg.mxu0
    %v1490 = vadd.f32 %v1409, %v1485
    %v1491 = vadd.f32 %v1412, %v1488
    %1492 = vset.pattern.permute.xlu0 3
    %1493 = vperm.xlu0 %1492, %v1225
    %v1494 = vpop.permute.xlu0 %1493
    %1496 = vset.pattern.permute.xlu0 3
    %1497 = vperm.xlu0 %1496, %v1228
    %v1498 = vpop.permute.xlu0 %1497
    %v1500 = vperm.slane %v1246, 3
    %v1501 = vadd.f32 %v1494, %v1500
    %v1502 = vadd.f32 %v1498, %v1500
    %vm1503 = vcmp.gt.f32.partialorder %v1501, 0.0
    %vm1504 = vcmp.gt.f32.partialorder %v1502, 0.0
    %v1505 = vmul.f32 %v1501, 0.2
    %v1506 = vmul.f32 %v1502, 0.2
    %v1507 = vsel %vm1503, %v1501, %v1505
    %v1508 = vsel %vm1504, %v1502, %v1506
    %v1509 = vsel %vm1281, %v1507, -1e+30
    %v1510 = vsel %vm1282, %v1508, -1e+30
    %v1511 = vsel %vm1053, %v1509, -inf
    %1512 = vmax.xlane.f32.xlu0 %v1511
    %v1513 = vpop.xlane.xlu0 %1512
    %v1514 = vsel %vm1053, %v1510, -inf
    %1515 = vmax.xlane.f32.xlu0 %v1514
    %v1516 = vpop.xlane.xlu0 %1515
    %v1517 = vsub.f32 %v1509, %v1513
    %v1518 = vsub.f32 %v1510, %v1516
    %v1519 = vmul.f32 %v1517, 1.442695
    %v1520 = vpow.pop %v1519
    %v1521 = vmul.f32 %v1518, 1.442695
    %v1522 = vpow.pop %v1521
    %v1523 = vsel %vm1053, %v1520, 0.0
    %1524 = vadd.xlane.f32.xlu0 %v1523
    %v1525 = vpop.xlane.xlu0 %1524
    %v1526 = vsel %vm1053, %v1522, 0.0
    %1527 = vadd.xlane.f32.xlu0 %v1526
    %v1528 = vpop.xlane.xlu0 %1527
    %v1529 = vrcp.pop %v1525
    %v1530 = vrcp.pop %v1528
    %v1531 = vmul.f32 %v1520, %v1529
    %v1532 = vmul.f32 %v1522, %v1530
    %1533 = vrot.lane.b32.xlu0 %v1148, 80
    %v1534 = vpop.permute.xlu0 %1533
    %1535 = vrot.lane.b32.xlu0 %v1150, 80
    %v1536 = vpop.permute.xlu0 %1535
    %v1540 = vsel %vm1053, %v1531, 0
    %v1543 = vsel %vm1053, %v1532, 0
    %1545 = vmatpush.msra.mxu0 0.0
    %1546 = vmatpush.msra.mxu0 0.0
    %1547 = vmatpush.msra.mxu0 0.0
    %1548 = vmatpush.msra.mxu0 0.0
    %1549 = vmatpush.msra.mxu0 0.0
    %1550 = vmatpush.msra.mxu0 0.0
    %1551 = vmatpush.msra.mxu0 0.0
    %1552 = vmatpush.msra.mxu0 0.0
    %1553 = vmatpush.msra.mxu0 0.0
    %1554 = vmatpush.msra.mxu0 0.0
    %1555 = vmatpush.msra.mxu0 0.0
    %1556 = vmatpush.msra.mxu0 0.0
    %1557 = vmatpush.msra.mxu0 0.0
    %1558 = vmatpush.msra.mxu0 0.0
    %1559 = vmatpush.msra.mxu0 %v1536
    %1560 = vmatpush.msra.mxu0 %v1534
    %1561 = vmatmul.f32.gmra.mxu0 %v1540
    %v1562 = vpop.f32.mrf.mxu0
    %v1563 = vadd.f32 0.0, %v1562
    %1564 = vmatmul.f32.gmra.mxu0 %v1543
    %v1565 = vpop.f32.mrf.mxu0
    %v1566 = vadd.f32 0.0, %v1565
    %1567 = vdwg.mxu0
    %v1568 = vadd.f32 %v1490, %v1563
    %v1569 = vadd.f32 %v1491, %v1566
    %1570 = vset.pattern.permute.xlu0 4
    %1571 = vperm.xlu0 %1570, %v1225
    %v1572 = vpop.permute.xlu0 %1571
    %1574 = vset.pattern.permute.xlu0 4
    %1575 = vperm.xlu0 %1574, %v1228
    %v1576 = vpop.permute.xlu0 %1575
    %v1578 = vperm.slane %v1246, 4
    %v1579 = vadd.f32 %v1572, %v1578
    %v1580 = vadd.f32 %v1576, %v1578
    %vm1581 = vcmp.gt.f32.partialorder %v1579, 0.0
    %vm1582 = vcmp.gt.f32.partialorder %v1580, 0.0
    %v1583 = vmul.f32 %v1579, 0.2
    %v1584 = vmul.f32 %v1580, 0.2
    %v1585 = vsel %vm1581, %v1579, %v1583
    %v1586 = vsel %vm1582, %v1580, %v1584
    %v1587 = vsel %vm1281, %v1585, -1e+30
    %v1588 = vsel %vm1282, %v1586, -1e+30
    %v1589 = vsel %vm1053, %v1587, -inf
    %1590 = vmax.xlane.f32.xlu0 %v1589
    %v1591 = vpop.xlane.xlu0 %1590
    %v1592 = vsel %vm1053, %v1588, -inf
    %1593 = vmax.xlane.f32.xlu0 %v1592
    %v1594 = vpop.xlane.xlu0 %1593
    %v1595 = vsub.f32 %v1587, %v1591
    %v1596 = vsub.f32 %v1588, %v1594
    %v1597 = vmul.f32 %v1595, 1.442695
    %v1598 = vpow.pop %v1597
    %v1599 = vmul.f32 %v1596, 1.442695
    %v1600 = vpow.pop %v1599
    %v1601 = vsel %vm1053, %v1598, 0.0
    %1602 = vadd.xlane.f32.xlu0 %v1601
    %v1603 = vpop.xlane.xlu0 %1602
    %v1604 = vsel %vm1053, %v1600, 0.0
    %1605 = vadd.xlane.f32.xlu0 %v1604
    %v1606 = vpop.xlane.xlu0 %1605
    %v1607 = vrcp.pop %v1603
    %v1608 = vrcp.pop %v1606
    %v1609 = vmul.f32 %v1598, %v1607
    %v1610 = vmul.f32 %v1600, %v1608
    %1611 = vrot.lane.b32.xlu0 %v1148, 64
    %v1612 = vpop.permute.xlu0 %1611
    %1613 = vrot.lane.b32.xlu0 %v1150, 64
    %v1614 = vpop.permute.xlu0 %1613
    %v1618 = vsel %vm1053, %v1609, 0
    %v1621 = vsel %vm1053, %v1610, 0
    %1623 = vmatpush.msra.mxu0 0.0
    %1624 = vmatpush.msra.mxu0 0.0
    %1625 = vmatpush.msra.mxu0 0.0
    %1626 = vmatpush.msra.mxu0 0.0
    %1627 = vmatpush.msra.mxu0 0.0
    %1628 = vmatpush.msra.mxu0 0.0
    %1629 = vmatpush.msra.mxu0 0.0
    %1630 = vmatpush.msra.mxu0 0.0
    %1631 = vmatpush.msra.mxu0 0.0
    %1632 = vmatpush.msra.mxu0 0.0
    %1633 = vmatpush.msra.mxu0 0.0
    %1634 = vmatpush.msra.mxu0 0.0
    %1635 = vmatpush.msra.mxu0 0.0
    %1636 = vmatpush.msra.mxu0 0.0
    %1637 = vmatpush.msra.mxu0 %v1614
    %1638 = vmatpush.msra.mxu0 %v1612
    %1639 = vmatmul.f32.gmra.mxu0 %v1618
    %v1640 = vpop.f32.mrf.mxu0
    %v1641 = vadd.f32 0.0, %v1640
    %1642 = vmatmul.f32.gmra.mxu0 %v1621
    %v1643 = vpop.f32.mrf.mxu0
    %v1644 = vadd.f32 0.0, %v1643
    %1645 = vdwg.mxu0
    %v1646 = vadd.f32 %v1568, %v1641
    %v1647 = vadd.f32 %v1569, %v1644
    %1648 = vset.pattern.permute.xlu0 5
    %1649 = vperm.xlu0 %1648, %v1225
    %v1650 = vpop.permute.xlu0 %1649
    %1652 = vset.pattern.permute.xlu0 5
    %1653 = vperm.xlu0 %1652, %v1228
    %v1654 = vpop.permute.xlu0 %1653
    %v1656 = vperm.slane %v1246, 5
    %v1657 = vadd.f32 %v1650, %v1656
    %v1658 = vadd.f32 %v1654, %v1656
    %vm1659 = vcmp.gt.f32.partialorder %v1657, 0.0
    %vm1660 = vcmp.gt.f32.partialorder %v1658, 0.0
    %v1661 = vmul.f32 %v1657, 0.2
    %v1662 = vmul.f32 %v1658, 0.2
    %v1663 = vsel %vm1659, %v1657, %v1661
    %v1664 = vsel %vm1660, %v1658, %v1662
    %v1665 = vsel %vm1281, %v1663, -1e+30
    %v1666 = vsel %vm1282, %v1664, -1e+30
    %v1667 = vsel %vm1053, %v1665, -inf
    %1668 = vmax.xlane.f32.xlu0 %v1667
    %v1669 = vpop.xlane.xlu0 %1668
    %v1670 = vsel %vm1053, %v1666, -inf
    %1671 = vmax.xlane.f32.xlu0 %v1670
    %v1672 = vpop.xlane.xlu0 %1671
    %v1673 = vsub.f32 %v1665, %v1669
    %v1674 = vsub.f32 %v1666, %v1672
    %v1675 = vmul.f32 %v1673, 1.442695
    %v1676 = vpow.pop %v1675
    %v1677 = vmul.f32 %v1674, 1.442695
    %v1678 = vpow.pop %v1677
    %v1679 = vsel %vm1053, %v1676, 0.0
    %1680 = vadd.xlane.f32.xlu0 %v1679
    %v1681 = vpop.xlane.xlu0 %1680
    %v1682 = vsel %vm1053, %v1678, 0.0
    %1683 = vadd.xlane.f32.xlu0 %v1682
    %v1684 = vpop.xlane.xlu0 %1683
    %v1685 = vrcp.pop %v1681
    %v1686 = vrcp.pop %v1684
    %v1687 = vmul.f32 %v1676, %v1685
    %v1688 = vmul.f32 %v1678, %v1686
    %1689 = vrot.lane.b32.xlu0 %v1148, 48
    %v1690 = vpop.permute.xlu0 %1689
    %1691 = vrot.lane.b32.xlu0 %v1150, 48
    %v1692 = vpop.permute.xlu0 %1691
    %v1696 = vsel %vm1053, %v1687, 0
    %v1699 = vsel %vm1053, %v1688, 0
    %1701 = vmatpush.msra.mxu0 0.0
    %1702 = vmatpush.msra.mxu0 0.0
    %1703 = vmatpush.msra.mxu0 0.0
    %1704 = vmatpush.msra.mxu0 0.0
    %1705 = vmatpush.msra.mxu0 0.0
    %1706 = vmatpush.msra.mxu0 0.0
    %1707 = vmatpush.msra.mxu0 0.0
    %1708 = vmatpush.msra.mxu0 0.0
    %1709 = vmatpush.msra.mxu0 0.0
    %1710 = vmatpush.msra.mxu0 0.0
    %1711 = vmatpush.msra.mxu0 0.0
    %1712 = vmatpush.msra.mxu0 0.0
    %1713 = vmatpush.msra.mxu0 0.0
    %1714 = vmatpush.msra.mxu0 0.0
    %1715 = vmatpush.msra.mxu0 %v1692
    %1716 = vmatpush.msra.mxu0 %v1690
    %1717 = vmatmul.f32.gmra.mxu0 %v1696
    %v1718 = vpop.f32.mrf.mxu0
    %v1719 = vadd.f32 0.0, %v1718
    %1720 = vmatmul.f32.gmra.mxu0 %v1699
    %v1721 = vpop.f32.mrf.mxu0
    %v1722 = vadd.f32 0.0, %v1721
    %1723 = vdwg.mxu0
    %v1724 = vadd.f32 %v1646, %v1719
    %v1725 = vadd.f32 %v1647, %v1722
    %1726 = vset.pattern.permute.xlu0 6
    %1727 = vperm.xlu0 %1726, %v1225
    %v1728 = vpop.permute.xlu0 %1727
    %1730 = vset.pattern.permute.xlu0 6
    %1731 = vperm.xlu0 %1730, %v1228
    %v1732 = vpop.permute.xlu0 %1731
    %v1734 = vperm.slane %v1246, 6
    %v1735 = vadd.f32 %v1728, %v1734
    %v1736 = vadd.f32 %v1732, %v1734
    %vm1737 = vcmp.gt.f32.partialorder %v1735, 0.0
    %vm1738 = vcmp.gt.f32.partialorder %v1736, 0.0
    %v1739 = vmul.f32 %v1735, 0.2
    %v1740 = vmul.f32 %v1736, 0.2
    %v1741 = vsel %vm1737, %v1735, %v1739
    %v1742 = vsel %vm1738, %v1736, %v1740
    %v1743 = vsel %vm1281, %v1741, -1e+30
    %v1744 = vsel %vm1282, %v1742, -1e+30
    %v1745 = vsel %vm1053, %v1743, -inf
    %1746 = vmax.xlane.f32.xlu0 %v1745
    %v1747 = vpop.xlane.xlu0 %1746
    %v1748 = vsel %vm1053, %v1744, -inf
    %1749 = vmax.xlane.f32.xlu0 %v1748
    %v1750 = vpop.xlane.xlu0 %1749
    %v1751 = vsub.f32 %v1743, %v1747
    %v1752 = vsub.f32 %v1744, %v1750
    %v1753 = vmul.f32 %v1751, 1.442695
    %v1754 = vpow.pop %v1753
    %v1755 = vmul.f32 %v1752, 1.442695
    %v1756 = vpow.pop %v1755
    %v1757 = vsel %vm1053, %v1754, 0.0
    %1758 = vadd.xlane.f32.xlu0 %v1757
    %v1759 = vpop.xlane.xlu0 %1758
    %v1760 = vsel %vm1053, %v1756, 0.0
    %1761 = vadd.xlane.f32.xlu0 %v1760
    %v1762 = vpop.xlane.xlu0 %1761
    %v1763 = vrcp.pop %v1759
    %v1764 = vrcp.pop %v1762
    %v1765 = vmul.f32 %v1754, %v1763
    %v1766 = vmul.f32 %v1756, %v1764
    %1767 = vrot.lane.b32.xlu0 %v1148, 32
    %v1768 = vpop.permute.xlu0 %1767
    %1769 = vrot.lane.b32.xlu0 %v1150, 32
    %v1770 = vpop.permute.xlu0 %1769
    %v1774 = vsel %vm1053, %v1765, 0
    %v1777 = vsel %vm1053, %v1766, 0
    %1779 = vmatpush.msra.mxu0 0.0
    %1780 = vmatpush.msra.mxu0 0.0
    %1781 = vmatpush.msra.mxu0 0.0
    %1782 = vmatpush.msra.mxu0 0.0
    %1783 = vmatpush.msra.mxu0 0.0
    %1784 = vmatpush.msra.mxu0 0.0
    %1785 = vmatpush.msra.mxu0 0.0
    %1786 = vmatpush.msra.mxu0 0.0
    %1787 = vmatpush.msra.mxu0 0.0
    %1788 = vmatpush.msra.mxu0 0.0
    %1789 = vmatpush.msra.mxu0 0.0
    %1790 = vmatpush.msra.mxu0 0.0
    %1791 = vmatpush.msra.mxu0 0.0
    %1792 = vmatpush.msra.mxu0 0.0
    %1793 = vmatpush.msra.mxu0 %v1770
    %1794 = vmatpush.msra.mxu0 %v1768
    %1795 = vmatmul.f32.gmra.mxu0 %v1774
    %v1796 = vpop.f32.mrf.mxu0
    %v1797 = vadd.f32 0.0, %v1796
    %1798 = vmatmul.f32.gmra.mxu0 %v1777
    %v1799 = vpop.f32.mrf.mxu0
    %v1800 = vadd.f32 0.0, %v1799
    %1801 = vdwg.mxu0
    %v1802 = vadd.f32 %v1724, %v1797
    %v1803 = vadd.f32 %v1725, %v1800
    %1804 = vset.pattern.permute.xlu0 7
    %1805 = vperm.xlu0 %1804, %v1225
    %v1806 = vpop.permute.xlu0 %1805
    %1808 = vset.pattern.permute.xlu0 7
    %1809 = vperm.xlu0 %1808, %v1228
    %v1810 = vpop.permute.xlu0 %1809
    %v1812 = vperm.slane %v1246, 7
    %v1813 = vadd.f32 %v1806, %v1812
    %v1814 = vadd.f32 %v1810, %v1812
    %vm1815 = vcmp.gt.f32.partialorder %v1813, 0.0
    %vm1816 = vcmp.gt.f32.partialorder %v1814, 0.0
    %v1817 = vmul.f32 %v1813, 0.2
    %v1818 = vmul.f32 %v1814, 0.2
    %v1819 = vsel %vm1815, %v1813, %v1817
    %v1820 = vsel %vm1816, %v1814, %v1818
    %v1821 = vsel %vm1281, %v1819, -1e+30
    %v1822 = vsel %vm1282, %v1820, -1e+30
    %v1823 = vsel %vm1053, %v1821, -inf
    %1824 = vmax.xlane.f32.xlu0 %v1823
    %v1825 = vpop.xlane.xlu0 %1824
    %v1826 = vsel %vm1053, %v1822, -inf
    %1827 = vmax.xlane.f32.xlu0 %v1826
    %v1828 = vpop.xlane.xlu0 %1827
    %v1829 = vsub.f32 %v1821, %v1825
    %v1830 = vsub.f32 %v1822, %v1828
    %v1831 = vmul.f32 %v1829, 1.442695
    %v1832 = vpow.pop %v1831
    %v1833 = vmul.f32 %v1830, 1.442695
    %v1834 = vpow.pop %v1833
    %v1835 = vsel %vm1053, %v1832, 0.0
    %1836 = vadd.xlane.f32.xlu0 %v1835
    %v1837 = vpop.xlane.xlu0 %1836
    %v1838 = vsel %vm1053, %v1834, 0.0
    %1839 = vadd.xlane.f32.xlu0 %v1838
    %v1840 = vpop.xlane.xlu0 %1839
    %v1841 = vrcp.pop %v1837
    %v1842 = vrcp.pop %v1840
    %v1843 = vmul.f32 %v1832, %v1841
    %v1844 = vmul.f32 %v1834, %v1842
    %1845 = vrot.lane.b32.xlu0 %v1148, 16
    %v1846 = vpop.permute.xlu0 %1845
    %1847 = vrot.lane.b32.xlu0 %v1150, 16
    %v1848 = vpop.permute.xlu0 %1847
    %v1852 = vsel %vm1053, %v1843, 0
    %v1855 = vsel %vm1053, %v1844, 0
    %1857 = vmatpush.msra.mxu0 0.0
    %1858 = vmatpush.msra.mxu0 0.0
    %1859 = vmatpush.msra.mxu0 0.0
    %1860 = vmatpush.msra.mxu0 0.0
    %1861 = vmatpush.msra.mxu0 0.0
    %1862 = vmatpush.msra.mxu0 0.0
    %1863 = vmatpush.msra.mxu0 0.0
    %1864 = vmatpush.msra.mxu0 0.0
    %1865 = vmatpush.msra.mxu0 0.0
    %1866 = vmatpush.msra.mxu0 0.0
    %1867 = vmatpush.msra.mxu0 0.0
    %1868 = vmatpush.msra.mxu0 0.0
    %1869 = vmatpush.msra.mxu0 0.0
    %1870 = vmatpush.msra.mxu0 0.0
    %1871 = vmatpush.msra.mxu0 %v1848
    %1872 = vmatpush.msra.mxu0 %v1846
    %1873 = vmatmul.f32.gmra.mxu0 %v1852
    %v1874 = vpop.f32.mrf.mxu0
    %v1875 = vadd.f32 0.0, %v1874
    %1876 = vmatmul.f32.gmra.mxu0 %v1855
    %v1877 = vpop.f32.mrf.mxu0
    %v1878 = vadd.f32 0.0, %v1877
    %1879 = vdwg.mxu0
    %v1880 = vadd.f32 %v1802, %v1875
    %v1881 = vadd.f32 %v1803, %v1878
    %v1882 = vmul.f32 %v1880, 0.125
    %v1883 = vmul.f32 %v1881, 0.125
    %v1884 = vld [vmem:[%s9] sm:$0x1]
    %v1886 = vperm.slane %v1884, 0
    %v1888 = vadd.f32 %v1882, %v1886
    %v1889 = vadd.f32 %v1883, %v1886
    %v1890 = vpack.c.bf16 %v1889, %v1888
    %v1891 = vld [vmem:[%s4] sm:$0xf]
    %v1892 = vld [vmem:[%s4 + $0x4] sm:$0xf]
    %v1895 = vunpack.c.l.b16 %v1891
    %v1896 = vunpack.c.l.b16 %v1892
    %v1897 = vpack.c.b16 %v1896, %v1895
    %v1900 = vsel %vm1053, %v1890, 0
    %1902 = vmatpush.bf16.msra.mxu0 0
    %1903 = vmatpush.bf16.msra.mxu0 0
    %1904 = vmatpush.bf16.msra.mxu0 0
    %1905 = vmatpush.bf16.msra.mxu0 0
    %1906 = vmatpush.bf16.msra.mxu0 0
    %1907 = vmatpush.bf16.msra.mxu0 0
    %1908 = vmatpush.bf16.msra.mxu0 0
    %1909 = vmatpush.bf16.msra.mxu0 %v1897
    %1910 = vmatmul.bf16.gmra.mxu0 %v1900
    %v1911 = vpop.f32.mrf.mxu0
    %v1912 = vadd.f32 0.0, %v1911
    %v1913 = vpop.f32.mrf.mxu0
    %v1914 = vadd.f32 0.0, %v1913
    %1915 = vdwg.mxu0
    %v1916 = vpack.c.bf16 %v1914, %v1912
    %s1917 = scalar_lea.vmem %s5, 1
    %v1918 = vld [vmem:[%s1917] sm:$0x1]
    %v1920 = vperm.slane %v1918, 0
    %1922 = vmatpush.bf16.msra.mxu0 0
    %1923 = vmatpush.bf16.msra.mxu0 0
    %1924 = vmatpush.bf16.msra.mxu0 0
    %1925 = vmatpush.bf16.msra.mxu0 0
    %1926 = vmatpush.bf16.msra.mxu0 0
    %1927 = vmatpush.bf16.msra.mxu0 0
    %1928 = vmatpush.bf16.msra.mxu0 0
    %1929 = vmatpush.bf16.msra.mxu0 %v1916
    %1930 = vmatmul.bf16.gmra.mxu0 %v1055
    %v1931 = vpop.f32.mrf.mxu0
    %v1932 = vadd.f32 %v1920, %v1931
    %v1933 = vpop.f32.mrf.mxu0
    %v1934 = vadd.f32 %v1920, %v1933
    %1935 = vdwg.mxu0
    %v1936 = vmax.f32 %v1932, 0.0
    %v1937 = vmax.f32 %v1934, 0.0
    %v1938 = vpack.c.bf16 %v1937, %v1936
    %s1939 = scalar_lea.vmem [#allocation4], 64
    %v1940 = vld [vmem:[%s1939] sm:$0xf]
    %v1941 = vld [vmem:[%s1939 + $0x4] sm:$0xf]
    %v1942 = vld [vmem:[%s1939 + $0x8] sm:$0xf]
    %v1943 = vld [vmem:[%s1939 + $0xc] sm:$0xf]
    %v1944 = vld [vmem:[%s1939 + $0x10] sm:$0xf]
    %v1945 = vld [vmem:[%s1939 + $0x14] sm:$0xf]
    %v1946 = vld [vmem:[%s1939 + $0x18] sm:$0xf]
    %v1947 = vld [vmem:[%s1939 + $0x1c] sm:$0xf]
    %v1948 = vld [vmem:[%s1939 + $0x20] sm:$0xf]
    %v1949 = vld [vmem:[%s1939 + $0x24] sm:$0xf]
    %v1950 = vld [vmem:[%s1939 + $0x28] sm:$0xf]
    %v1951 = vld [vmem:[%s1939 + $0x2c] sm:$0xf]
    %v1952 = vld [vmem:[%s1939 + $0x30] sm:$0xf]
    %v1953 = vld [vmem:[%s1939 + $0x34] sm:$0xf]
    %v1954 = vld [vmem:[%s1939 + $0x38] sm:$0xf]
    %v1955 = vld [vmem:[%s1939 + $0x3c] sm:$0xf]
    %v1972 = vunpack.c.l.b16 %v1940
    %v1973 = vunpack.c.l.b16 %v1941
    %v1974 = vunpack.c.l.b16 %v1942
    %v1975 = vunpack.c.l.b16 %v1943
    %v1976 = vunpack.c.l.b16 %v1944
    %v1977 = vunpack.c.l.b16 %v1945
    %v1978 = vunpack.c.l.b16 %v1946
    %v1979 = vunpack.c.l.b16 %v1947
    %v1980 = vunpack.c.l.b16 %v1948
    %v1981 = vunpack.c.l.b16 %v1949
    %v1982 = vunpack.c.l.b16 %v1950
    %v1983 = vunpack.c.l.b16 %v1951
    %v1984 = vunpack.c.l.b16 %v1952
    %v1985 = vunpack.c.l.b16 %v1953
    %v1986 = vunpack.c.l.b16 %v1954
    %v1987 = vunpack.c.l.b16 %v1955
    %v1988 = vpack.c.b16 %v1973, %v1972
    %v1989 = vpack.c.b16 %v1975, %v1974
    %v1990 = vpack.c.b16 %v1977, %v1976
    %v1991 = vpack.c.b16 %v1979, %v1978
    %v1992 = vpack.c.b16 %v1981, %v1980
    %v1993 = vpack.c.b16 %v1983, %v1982
    %v1994 = vpack.c.b16 %v1985, %v1984
    %v1995 = vpack.c.b16 %v1987, %v1986
    %2004 = vmatpush.bf16.msra.mxu0 %v1995
    %2005 = vmatpush.bf16.msra.mxu0 %v1994
    %2006 = vmatpush.bf16.msra.mxu0 %v1993
    %2007 = vmatpush.bf16.msra.mxu0 %v1992
    %2008 = vmatpush.bf16.msra.mxu0 %v1991
    %2009 = vmatpush.bf16.msra.mxu0 %v1990
    %2010 = vmatpush.bf16.msra.mxu0 %v1989
    %2011 = vmatpush.bf16.msra.mxu0 %v1988
    %2012 = vmatmul.bf16.gmra.mxu0 %v1938
    %v2013 = vpop.f32.mrf.mxu0
    %v2014 = vadd.f32 0.0, %v2013
    %v2015 = vpop.f32.mrf.mxu0
    %v2016 = vadd.f32 0.0, %v2015
    %2017 = vdwg.mxu0
    %s2018 = scalar_lea.vmem %s7, 128
    %v2019 = vld [vmem:[%s2018] sm:$0xff]
    %v2020 = vld [vmem:[%s2018 + $0x8] sm:$0xff]
    %v2021 = vld [vmem:[%s2018 + $0x10] sm:$0xff]
    %v2022 = vld [vmem:[%s2018 + $0x18] sm:$0xff]
    %v2023 = vld [vmem:[%s2018 + $0x20] sm:$0xff]
    %v2024 = vld [vmem:[%s2018 + $0x28] sm:$0xff]
    %v2025 = vld [vmem:[%s2018 + $0x30] sm:$0xff]
    %v2026 = vld [vmem:[%s2018 + $0x38] sm:$0xff]
    %v2027 = vld [vmem:[%s2018 + $0x40] sm:$0xff]
    %v2028 = vld [vmem:[%s2018 + $0x48] sm:$0xff]
    %v2029 = vld [vmem:[%s2018 + $0x50] sm:$0xff]
    %v2030 = vld [vmem:[%s2018 + $0x58] sm:$0xff]
    %v2031 = vld [vmem:[%s2018 + $0x60] sm:$0xff]
    %v2032 = vld [vmem:[%s2018 + $0x68] sm:$0xff]
    %v2033 = vld [vmem:[%s2018 + $0x70] sm:$0xff]
    %v2034 = vld [vmem:[%s2018 + $0x78] sm:$0xff]
    %2035 = vmatpush.msra.mxu0 %v2034
    %2036 = vmatpush.msra.mxu0 %v2033
    %2037 = vmatpush.msra.mxu0 %v2032
    %2038 = vmatpush.msra.mxu0 %v2031
    %2039 = vmatpush.msra.mxu0 %v2030
    %2040 = vmatpush.msra.mxu0 %v2029
    %2041 = vmatpush.msra.mxu0 %v2028
    %2042 = vmatpush.msra.mxu0 %v2027
    %2043 = vmatpush.msra.mxu0 %v2026
    %2044 = vmatpush.msra.mxu0 %v2025
    %2045 = vmatpush.msra.mxu0 %v2024
    %2046 = vmatpush.msra.mxu0 %v2023
    %2047 = vmatpush.msra.mxu0 %v2022
    %2048 = vmatpush.msra.mxu0 %v2021
    %2049 = vmatpush.msra.mxu0 %v2020
    %2050 = vmatpush.msra.mxu0 %v2019
    %2051 = vmatmul.f32.gmra.mxu0 %v2014
    %v2052 = vpop.f32.mrf.mxu0
    %v2053 = vadd.f32 0.0, %v2052
    %2054 = vmatmul.f32.gmra.mxu0 %v2016
    %v2055 = vpop.f32.mrf.mxu0
    %v2056 = vadd.f32 0.0, %v2055
    %2057 = vdwg.mxu0
    %s2058 = scalar_lea.vmem %s8, 128
    %v2059 = vld [vmem:[%s2058] sm:$0xff]
    %v2060 = vld [vmem:[%s2058 + $0x8] sm:$0xff]
    %v2061 = vld [vmem:[%s2058 + $0x10] sm:$0xff]
    %v2062 = vld [vmem:[%s2058 + $0x18] sm:$0xff]
    %v2063 = vld [vmem:[%s2058 + $0x20] sm:$0xff]
    %v2064 = vld [vmem:[%s2058 + $0x28] sm:$0xff]
    %v2065 = vld [vmem:[%s2058 + $0x30] sm:$0xff]
    %v2066 = vld [vmem:[%s2058 + $0x38] sm:$0xff]
    %v2067 = vld [vmem:[%s2058 + $0x40] sm:$0xff]
    %v2068 = vld [vmem:[%s2058 + $0x48] sm:$0xff]
    %v2069 = vld [vmem:[%s2058 + $0x50] sm:$0xff]
    %v2070 = vld [vmem:[%s2058 + $0x58] sm:$0xff]
    %v2071 = vld [vmem:[%s2058 + $0x60] sm:$0xff]
    %v2072 = vld [vmem:[%s2058 + $0x68] sm:$0xff]
    %v2073 = vld [vmem:[%s2058 + $0x70] sm:$0xff]
    %v2074 = vld [vmem:[%s2058 + $0x78] sm:$0xff]
    %2075 = vmatpush.msra.mxu0 %v2074
    %2076 = vmatpush.msra.mxu0 %v2073
    %2077 = vmatpush.msra.mxu0 %v2072
    %2078 = vmatpush.msra.mxu0 %v2071
    %2079 = vmatpush.msra.mxu0 %v2070
    %2080 = vmatpush.msra.mxu0 %v2069
    %2081 = vmatpush.msra.mxu0 %v2068
    %2082 = vmatpush.msra.mxu0 %v2067
    %2083 = vmatpush.msra.mxu0 %v2066
    %2084 = vmatpush.msra.mxu0 %v2065
    %2085 = vmatpush.msra.mxu0 %v2064
    %2086 = vmatpush.msra.mxu0 %v2063
    %2087 = vmatpush.msra.mxu0 %v2062
    %2088 = vmatpush.msra.mxu0 %v2061
    %2089 = vmatpush.msra.mxu0 %v2060
    %2090 = vmatpush.msra.mxu0 %v2059
    %2091 = vmatmul.f32.gmra.mxu0 %v2014
    %v2092 = vpop.f32.mrf.mxu0
    %v2093 = vadd.f32 0.0, %v2092
    %2094 = vmatmul.f32.gmra.mxu0 %v2016
    %v2095 = vpop.f32.mrf.mxu0
    %v2096 = vadd.f32 0.0, %v2095
    %2097 = vdwg.mxu0
    %2098 = vxpose.xlu0.b32.start [1/16] %v2053, 128
    %2099 = vxpose.xlu0.b32.cont [2/16] %v2056, 128
    %2100 = vxpose.xlu0.b32.cont [3/16] 0.0, 128
    %2101 = vxpose.xlu0.b32.cont [4/16] 0.0, 128
    %2102 = vxpose.xlu0.b32.cont [5/16] 0.0, 128
    %2103 = vxpose.xlu0.b32.cont [6/16] 0.0, 128
    %2104 = vxpose.xlu0.b32.cont [7/16] 0.0, 128
    %2105 = vxpose.xlu0.b32.cont [8/16] 0.0, 128
    %2106 = vxpose.xlu0.b32.cont [9/16] 0.0, 128
    %2107 = vxpose.xlu0.b32.cont [10/16] 0.0, 128
    %2108 = vxpose.xlu0.b32.cont [11/16] 0.0, 128
    %2109 = vxpose.xlu0.b32.cont [12/16] 0.0, 128
    %2110 = vxpose.xlu0.b32.cont [13/16] 0.0, 128
    %2111 = vxpose.xlu0.b32.cont [14/16] 0.0, 128
    %2112 = vxpose.xlu0.b32.cont [15/16] 0.0, 128
    %2113 = vxpose.xlu0.b32.end [16/16] 0.0, 128
    %v2114 = vpop.trf.xlu0
    %v2115 = vpop.trf.xlu0
    %v2116 = vpop.trf.xlu0
    %v2117 = vpop.trf.xlu0
    %v2118 = vpop.trf.xlu0
    %v2119 = vpop.trf.xlu0
    %v2120 = vpop.trf.xlu0
    %v2121 = vpop.trf.xlu0
    %v2122 = vpop.trf.xlu0
    %v2123 = vpop.trf.xlu0
    %v2124 = vpop.trf.xlu0
    %v2125 = vpop.trf.xlu0
    %v2126 = vpop.trf.xlu0
    %v2127 = vpop.trf.xlu0
    %v2128 = vpop.trf.xlu0
    %v2129 = vpop.trf.xlu0
    %2131 = vset.pattern.permute.xlu0 0
    %2132 = vperm.xlu0 %2131, %v2093
    %v2133 = vpop.permute.xlu0 %2132
    %2136 = vset.pattern.permute.xlu0 0
    %2137 = vperm.xlu0 %2136, %v2096
    %v2138 = vpop.permute.xlu0 %2137
    %v2140 = vperm.slane %v2114, 0
    %v2141 = vadd.f32 %v2133, %v2140
    %v2142 = vadd.f32 %v2138, %v2140
    %vm2143 = vcmp.gt.f32.partialorder %v2141, 0.0
    %vm2144 = vcmp.gt.f32.partialorder %v2142, 0.0
    %v2145 = vmul.f32 %v2141, 0.2
    %v2146 = vmul.f32 %v2142, 0.2
    %v2147 = vsel %vm2143, %v2141, %v2145
    %v2148 = vsel %vm2144, %v2142, %v2146
    %v2149 = vsel %vm1281, %v2147, -1e+30
    %v2150 = vsel %vm1282, %v2148, -1e+30
    %v2151 = vsel %vm1053, %v2149, -inf
    %2152 = vmax.xlane.f32.xlu0 %v2151
    %v2153 = vpop.xlane.xlu0 %2152
    %v2154 = vsel %vm1053, %v2150, -inf
    %2155 = vmax.xlane.f32.xlu0 %v2154
    %v2156 = vpop.xlane.xlu0 %2155
    %v2157 = vsub.f32 %v2149, %v2153
    %v2158 = vsub.f32 %v2150, %v2156
    %v2159 = vmul.f32 %v2157, 1.442695
    %v2160 = vpow.pop %v2159
    %v2161 = vmul.f32 %v2158, 1.442695
    %v2162 = vpow.pop %v2161
    %v2163 = vsel %vm1053, %v2160, 0.0
    %2164 = vadd.xlane.f32.xlu0 %v2163
    %v2165 = vpop.xlane.xlu0 %2164
    %v2166 = vsel %vm1053, %v2162, 0.0
    %2167 = vadd.xlane.f32.xlu0 %v2166
    %v2168 = vpop.xlane.xlu0 %2167
    %v2169 = vrcp.pop %v2165
    %v2170 = vrcp.pop %v2168
    %v2171 = vmul.f32 %v2160, %v2169
    %v2172 = vmul.f32 %v2162, %v2170
    %2173 = vset.pattern.permute.xlu0 1
    %2174 = vperm.xlu0 %2173, %v2093
    %v2175 = vpop.permute.xlu0 %2174
    %2177 = vset.pattern.permute.xlu0 1
    %2178 = vperm.xlu0 %2177, %v2096
    %v2179 = vpop.permute.xlu0 %2178
    %v2181 = vperm.slane %v2114, 1
    %v2182 = vadd.f32 %v2175, %v2181
    %v2183 = vadd.f32 %v2179, %v2181
    %vm2184 = vcmp.gt.f32.partialorder %v2182, 0.0
    %vm2185 = vcmp.gt.f32.partialorder %v2183, 0.0
    %v2186 = vmul.f32 %v2182, 0.2
    %v2187 = vmul.f32 %v2183, 0.2
    %v2188 = vsel %vm2184, %v2182, %v2186
    %v2189 = vsel %vm2185, %v2183, %v2187
    %v2190 = vsel %vm1281, %v2188, -1e+30
    %v2191 = vsel %vm1282, %v2189, -1e+30
    %v2192 = vsel %vm1053, %v2190, -inf
    %2193 = vmax.xlane.f32.xlu0 %v2192
    %v2194 = vpop.xlane.xlu0 %2193
    %v2195 = vsel %vm1053, %v2191, -inf
    %2196 = vmax.xlane.f32.xlu0 %v2195
    %v2197 = vpop.xlane.xlu0 %2196
    %v2198 = vsub.f32 %v2190, %v2194
    %v2199 = vsub.f32 %v2191, %v2197
    %v2200 = vmul.f32 %v2198, 1.442695
    %v2201 = vpow.pop %v2200
    %v2202 = vmul.f32 %v2199, 1.442695
    %v2203 = vpow.pop %v2202
    %v2204 = vsel %vm1053, %v2201, 0.0
    %2205 = vadd.xlane.f32.xlu0 %v2204
    %v2206 = vpop.xlane.xlu0 %2205
    %v2207 = vsel %vm1053, %v2203, 0.0
    %2208 = vadd.xlane.f32.xlu0 %v2207
    %v2209 = vpop.xlane.xlu0 %2208
    %v2210 = vrcp.pop %v2206
    %v2211 = vrcp.pop %v2209
    %v2212 = vmul.f32 %v2201, %v2210
    %v2213 = vmul.f32 %v2203, %v2211
    %2216 = vrot.lane.b32.xlu0 %v2014, 112
    %v2217 = vpop.permute.xlu0 %2216
    %2218 = vrot.lane.b32.xlu0 %v2016, 112
    %v2219 = vpop.permute.xlu0 %2218
    %v2223 = vsel %vm1053, %v2212, 0
    %v2226 = vsel %vm1053, %v2213, 0
    %2228 = vmatpush.msra.mxu0 0.0
    %2229 = vmatpush.msra.mxu0 0.0
    %2230 = vmatpush.msra.mxu0 0.0
    %2231 = vmatpush.msra.mxu0 0.0
    %2232 = vmatpush.msra.mxu0 0.0
    %2233 = vmatpush.msra.mxu0 0.0
    %2234 = vmatpush.msra.mxu0 0.0
    %2235 = vmatpush.msra.mxu0 0.0
    %2236 = vmatpush.msra.mxu0 0.0
    %2237 = vmatpush.msra.mxu0 0.0
    %2238 = vmatpush.msra.mxu0 0.0
    %2239 = vmatpush.msra.mxu0 0.0
    %2240 = vmatpush.msra.mxu0 0.0
    %2241 = vmatpush.msra.mxu0 0.0
    %2242 = vmatpush.msra.mxu0 %v2219
    %2243 = vmatpush.msra.mxu0 %v2217
    %2244 = vmatmul.f32.gmra.mxu0 %v2223
    %v2245 = vpop.f32.mrf.mxu0
    %v2246 = vadd.f32 0.0, %v2245
    %2247 = vmatmul.f32.gmra.mxu0 %v2226
    %v2248 = vpop.f32.mrf.mxu0
    %v2249 = vadd.f32 0.0, %v2248
    %2250 = vdwg.mxu0
    %v2252 = vsel %vm1053, %v2171, 0
    %v2255 = vsel %vm1053, %v2172, 0
    %2257 = vmatpush.msra.mxu0 0.0
    %2258 = vmatpush.msra.mxu0 0.0
    %2259 = vmatpush.msra.mxu0 0.0
    %2260 = vmatpush.msra.mxu0 0.0
    %2261 = vmatpush.msra.mxu0 0.0
    %2262 = vmatpush.msra.mxu0 0.0
    %2263 = vmatpush.msra.mxu0 0.0
    %2264 = vmatpush.msra.mxu0 0.0
    %2265 = vmatpush.msra.mxu0 0.0
    %2266 = vmatpush.msra.mxu0 0.0
    %2267 = vmatpush.msra.mxu0 0.0
    %2268 = vmatpush.msra.mxu0 0.0
    %2269 = vmatpush.msra.mxu0 0.0
    %2270 = vmatpush.msra.mxu0 0.0
    %2271 = vmatpush.msra.mxu0 %v2016
    %2272 = vmatpush.msra.mxu0 %v2014
    %2273 = vmatmul.f32.gmra.mxu0 %v2252
    %v2274 = vpop.f32.mrf.mxu0
    %v2275 = vadd.f32 %v2246, %v2274
    %2276 = vmatmul.f32.gmra.mxu0 %v2255
    %v2277 = vpop.f32.mrf.mxu0
    %v2278 = vadd.f32 %v2249, %v2277
    %2279 = vdwg.mxu0
    %2280 = vset.pattern.permute.xlu0 2
    %2281 = vperm.xlu0 %2280, %v2093
    %v2282 = vpop.permute.xlu0 %2281
    %2284 = vset.pattern.permute.xlu0 2
    %2285 = vperm.xlu0 %2284, %v2096
    %v2286 = vpop.permute.xlu0 %2285
    %v2288 = vperm.slane %v2114, 2
    %v2289 = vadd.f32 %v2282, %v2288
    %v2290 = vadd.f32 %v2286, %v2288
    %vm2291 = vcmp.gt.f32.partialorder %v2289, 0.0
    %vm2292 = vcmp.gt.f32.partialorder %v2290, 0.0
    %v2293 = vmul.f32 %v2289, 0.2
    %v2294 = vmul.f32 %v2290, 0.2
    %v2295 = vsel %vm2291, %v2289, %v2293
    %v2296 = vsel %vm2292, %v2290, %v2294
    %v2297 = vsel %vm1281, %v2295, -1e+30
    %v2298 = vsel %vm1282, %v2296, -1e+30
    %v2299 = vsel %vm1053, %v2297, -inf
    %2300 = vmax.xlane.f32.xlu0 %v2299
    %v2301 = vpop.xlane.xlu0 %2300
    %v2302 = vsel %vm1053, %v2298, -inf
    %2303 = vmax.xlane.f32.xlu0 %v2302
    %v2304 = vpop.xlane.xlu0 %2303
    %v2305 = vsub.f32 %v2297, %v2301
    %v2306 = vsub.f32 %v2298, %v2304
    %v2307 = vmul.f32 %v2305, 1.442695
    %v2308 = vpow.pop %v2307
    %v2309 = vmul.f32 %v2306, 1.442695
    %v2310 = vpow.pop %v2309
    %v2311 = vsel %vm1053, %v2308, 0.0
    %2312 = vadd.xlane.f32.xlu0 %v2311
    %v2313 = vpop.xlane.xlu0 %2312
    %v2314 = vsel %vm1053, %v2310, 0.0
    %2315 = vadd.xlane.f32.xlu0 %v2314
    %v2316 = vpop.xlane.xlu0 %2315
    %v2317 = vrcp.pop %v2313
    %v2318 = vrcp.pop %v2316
    %v2319 = vmul.f32 %v2308, %v2317
    %v2320 = vmul.f32 %v2310, %v2318
    %2321 = vrot.lane.b32.xlu0 %v2014, 96
    %v2322 = vpop.permute.xlu0 %2321
    %2323 = vrot.lane.b32.xlu0 %v2016, 96
    %v2324 = vpop.permute.xlu0 %2323
    %v2328 = vsel %vm1053, %v2319, 0
    %v2331 = vsel %vm1053, %v2320, 0
    %2333 = vmatpush.msra.mxu0 0.0
    %2334 = vmatpush.msra.mxu0 0.0
    %2335 = vmatpush.msra.mxu0 0.0
    %2336 = vmatpush.msra.mxu0 0.0
    %2337 = vmatpush.msra.mxu0 0.0
    %2338 = vmatpush.msra.mxu0 0.0
    %2339 = vmatpush.msra.mxu0 0.0
    %2340 = vmatpush.msra.mxu0 0.0
    %2341 = vmatpush.msra.mxu0 0.0
    %2342 = vmatpush.msra.mxu0 0.0
    %2343 = vmatpush.msra.mxu0 0.0
    %2344 = vmatpush.msra.mxu0 0.0
    %2345 = vmatpush.msra.mxu0 0.0
    %2346 = vmatpush.msra.mxu0 0.0
    %2347 = vmatpush.msra.mxu0 %v2324
    %2348 = vmatpush.msra.mxu0 %v2322
    %2349 = vmatmul.f32.gmra.mxu0 %v2328
    %v2350 = vpop.f32.mrf.mxu0
    %v2351 = vadd.f32 0.0, %v2350
    %2352 = vmatmul.f32.gmra.mxu0 %v2331
    %v2353 = vpop.f32.mrf.mxu0
    %v2354 = vadd.f32 0.0, %v2353
    %2355 = vdwg.mxu0
    %v2356 = vadd.f32 %v2275, %v2351
    %v2357 = vadd.f32 %v2278, %v2354
    %2358 = vset.pattern.permute.xlu0 3
    %2359 = vperm.xlu0 %2358, %v2093
    %v2360 = vpop.permute.xlu0 %2359
    %2362 = vset.pattern.permute.xlu0 3
    %2363 = vperm.xlu0 %2362, %v2096
    %v2364 = vpop.permute.xlu0 %2363
    %v2366 = vperm.slane %v2114, 3
    %v2367 = vadd.f32 %v2360, %v2366
    %v2368 = vadd.f32 %v2364, %v2366
    %vm2369 = vcmp.gt.f32.partialorder %v2367, 0.0
    %vm2370 = vcmp.gt.f32.partialorder %v2368, 0.0
    %v2371 = vmul.f32 %v2367, 0.2
    %v2372 = vmul.f32 %v2368, 0.2
    %v2373 = vsel %vm2369, %v2367, %v2371
    %v2374 = vsel %vm2370, %v2368, %v2372
    %v2375 = vsel %vm1281, %v2373, -1e+30
    %v2376 = vsel %vm1282, %v2374, -1e+30
    %v2377 = vsel %vm1053, %v2375, -inf
    %2378 = vmax.xlane.f32.xlu0 %v2377
    %v2379 = vpop.xlane.xlu0 %2378
    %v2380 = vsel %vm1053, %v2376, -inf
    %2381 = vmax.xlane.f32.xlu0 %v2380
    %v2382 = vpop.xlane.xlu0 %2381
    %v2383 = vsub.f32 %v2375, %v2379
    %v2384 = vsub.f32 %v2376, %v2382
    %v2385 = vmul.f32 %v2383, 1.442695
    %v2386 = vpow.pop %v2385
    %v2387 = vmul.f32 %v2384, 1.442695
    %v2388 = vpow.pop %v2387
    %v2389 = vsel %vm1053, %v2386, 0.0
    %2390 = vadd.xlane.f32.xlu0 %v2389
    %v2391 = vpop.xlane.xlu0 %2390
    %v2392 = vsel %vm1053, %v2388, 0.0
    %2393 = vadd.xlane.f32.xlu0 %v2392
    %v2394 = vpop.xlane.xlu0 %2393
    %v2395 = vrcp.pop %v2391
    %v2396 = vrcp.pop %v2394
    %v2397 = vmul.f32 %v2386, %v2395
    %v2398 = vmul.f32 %v2388, %v2396
    %2399 = vrot.lane.b32.xlu0 %v2014, 80
    %v2400 = vpop.permute.xlu0 %2399
    %2401 = vrot.lane.b32.xlu0 %v2016, 80
    %v2402 = vpop.permute.xlu0 %2401
    %v2406 = vsel %vm1053, %v2397, 0
    %v2409 = vsel %vm1053, %v2398, 0
    %2411 = vmatpush.msra.mxu0 0.0
    %2412 = vmatpush.msra.mxu0 0.0
    %2413 = vmatpush.msra.mxu0 0.0
    %2414 = vmatpush.msra.mxu0 0.0
    %2415 = vmatpush.msra.mxu0 0.0
    %2416 = vmatpush.msra.mxu0 0.0
    %2417 = vmatpush.msra.mxu0 0.0
    %2418 = vmatpush.msra.mxu0 0.0
    %2419 = vmatpush.msra.mxu0 0.0
    %2420 = vmatpush.msra.mxu0 0.0
    %2421 = vmatpush.msra.mxu0 0.0
    %2422 = vmatpush.msra.mxu0 0.0
    %2423 = vmatpush.msra.mxu0 0.0
    %2424 = vmatpush.msra.mxu0 0.0
    %2425 = vmatpush.msra.mxu0 %v2402
    %2426 = vmatpush.msra.mxu0 %v2400
    %2427 = vmatmul.f32.gmra.mxu0 %v2406
    %v2428 = vpop.f32.mrf.mxu0
    %v2429 = vadd.f32 0.0, %v2428
    %2430 = vmatmul.f32.gmra.mxu0 %v2409
    %v2431 = vpop.f32.mrf.mxu0
    %v2432 = vadd.f32 0.0, %v2431
    %2433 = vdwg.mxu0
    %v2434 = vadd.f32 %v2356, %v2429
    %v2435 = vadd.f32 %v2357, %v2432
    %2436 = vset.pattern.permute.xlu0 4
    %2437 = vperm.xlu0 %2436, %v2093
    %v2438 = vpop.permute.xlu0 %2437
    %2440 = vset.pattern.permute.xlu0 4
    %2441 = vperm.xlu0 %2440, %v2096
    %v2442 = vpop.permute.xlu0 %2441
    %v2444 = vperm.slane %v2114, 4
    %v2445 = vadd.f32 %v2438, %v2444
    %v2446 = vadd.f32 %v2442, %v2444
    %vm2447 = vcmp.gt.f32.partialorder %v2445, 0.0
    %vm2448 = vcmp.gt.f32.partialorder %v2446, 0.0
    %v2449 = vmul.f32 %v2445, 0.2
    %v2450 = vmul.f32 %v2446, 0.2
    %v2451 = vsel %vm2447, %v2445, %v2449
    %v2452 = vsel %vm2448, %v2446, %v2450
    %v2453 = vsel %vm1281, %v2451, -1e+30
    %v2454 = vsel %vm1282, %v2452, -1e+30
    %v2455 = vsel %vm1053, %v2453, -inf
    %2456 = vmax.xlane.f32.xlu0 %v2455
    %v2457 = vpop.xlane.xlu0 %2456
    %v2458 = vsel %vm1053, %v2454, -inf
    %2459 = vmax.xlane.f32.xlu0 %v2458
    %v2460 = vpop.xlane.xlu0 %2459
    %v2461 = vsub.f32 %v2453, %v2457
    %v2462 = vsub.f32 %v2454, %v2460
    %v2463 = vmul.f32 %v2461, 1.442695
    %v2464 = vpow.pop %v2463
    %v2465 = vmul.f32 %v2462, 1.442695
    %v2466 = vpow.pop %v2465
    %v2467 = vsel %vm1053, %v2464, 0.0
    %2468 = vadd.xlane.f32.xlu0 %v2467
    %v2469 = vpop.xlane.xlu0 %2468
    %v2470 = vsel %vm1053, %v2466, 0.0
    %2471 = vadd.xlane.f32.xlu0 %v2470
    %v2472 = vpop.xlane.xlu0 %2471
    %v2473 = vrcp.pop %v2469
    %v2474 = vrcp.pop %v2472
    %v2475 = vmul.f32 %v2464, %v2473
    %v2476 = vmul.f32 %v2466, %v2474
    %2477 = vrot.lane.b32.xlu0 %v2014, 64
    %v2478 = vpop.permute.xlu0 %2477
    %2479 = vrot.lane.b32.xlu0 %v2016, 64
    %v2480 = vpop.permute.xlu0 %2479
    %v2484 = vsel %vm1053, %v2475, 0
    %v2487 = vsel %vm1053, %v2476, 0
    %2489 = vmatpush.msra.mxu0 0.0
    %2490 = vmatpush.msra.mxu0 0.0
    %2491 = vmatpush.msra.mxu0 0.0
    %2492 = vmatpush.msra.mxu0 0.0
    %2493 = vmatpush.msra.mxu0 0.0
    %2494 = vmatpush.msra.mxu0 0.0
    %2495 = vmatpush.msra.mxu0 0.0
    %2496 = vmatpush.msra.mxu0 0.0
    %2497 = vmatpush.msra.mxu0 0.0
    %2498 = vmatpush.msra.mxu0 0.0
    %2499 = vmatpush.msra.mxu0 0.0
    %2500 = vmatpush.msra.mxu0 0.0
    %2501 = vmatpush.msra.mxu0 0.0
    %2502 = vmatpush.msra.mxu0 0.0
    %2503 = vmatpush.msra.mxu0 %v2480
    %2504 = vmatpush.msra.mxu0 %v2478
    %2505 = vmatmul.f32.gmra.mxu0 %v2484
    %v2506 = vpop.f32.mrf.mxu0
    %v2507 = vadd.f32 0.0, %v2506
    %2508 = vmatmul.f32.gmra.mxu0 %v2487
    %v2509 = vpop.f32.mrf.mxu0
    %v2510 = vadd.f32 0.0, %v2509
    %2511 = vdwg.mxu0
    %v2512 = vadd.f32 %v2434, %v2507
    %v2513 = vadd.f32 %v2435, %v2510
    %2514 = vset.pattern.permute.xlu0 5
    %2515 = vperm.xlu0 %2514, %v2093
    %v2516 = vpop.permute.xlu0 %2515
    %2518 = vset.pattern.permute.xlu0 5
    %2519 = vperm.xlu0 %2518, %v2096
    %v2520 = vpop.permute.xlu0 %2519
    %v2522 = vperm.slane %v2114, 5
    %v2523 = vadd.f32 %v2516, %v2522
    %v2524 = vadd.f32 %v2520, %v2522
    %vm2525 = vcmp.gt.f32.partialorder %v2523, 0.0
    %vm2526 = vcmp.gt.f32.partialorder %v2524, 0.0
    %v2527 = vmul.f32 %v2523, 0.2
    %v2528 = vmul.f32 %v2524, 0.2
    %v2529 = vsel %vm2525, %v2523, %v2527
    %v2530 = vsel %vm2526, %v2524, %v2528
    %v2531 = vsel %vm1281, %v2529, -1e+30
    %v2532 = vsel %vm1282, %v2530, -1e+30
    %v2533 = vsel %vm1053, %v2531, -inf
    %2534 = vmax.xlane.f32.xlu0 %v2533
    %v2535 = vpop.xlane.xlu0 %2534
    %v2536 = vsel %vm1053, %v2532, -inf
    %2537 = vmax.xlane.f32.xlu0 %v2536
    %v2538 = vpop.xlane.xlu0 %2537
    %v2539 = vsub.f32 %v2531, %v2535
    %v2540 = vsub.f32 %v2532, %v2538
    %v2541 = vmul.f32 %v2539, 1.442695
    %v2542 = vpow.pop %v2541
    %v2543 = vmul.f32 %v2540, 1.442695
    %v2544 = vpow.pop %v2543
    %v2545 = vsel %vm1053, %v2542, 0.0
    %2546 = vadd.xlane.f32.xlu0 %v2545
    %v2547 = vpop.xlane.xlu0 %2546
    %v2548 = vsel %vm1053, %v2544, 0.0
    %2549 = vadd.xlane.f32.xlu0 %v2548
    %v2550 = vpop.xlane.xlu0 %2549
    %v2551 = vrcp.pop %v2547
    %v2552 = vrcp.pop %v2550
    %v2553 = vmul.f32 %v2542, %v2551
    %v2554 = vmul.f32 %v2544, %v2552
    %2555 = vrot.lane.b32.xlu0 %v2014, 48
    %v2556 = vpop.permute.xlu0 %2555
    %2557 = vrot.lane.b32.xlu0 %v2016, 48
    %v2558 = vpop.permute.xlu0 %2557
    %v2562 = vsel %vm1053, %v2553, 0
    %v2565 = vsel %vm1053, %v2554, 0
    %2567 = vmatpush.msra.mxu0 0.0
    %2568 = vmatpush.msra.mxu0 0.0
    %2569 = vmatpush.msra.mxu0 0.0
    %2570 = vmatpush.msra.mxu0 0.0
    %2571 = vmatpush.msra.mxu0 0.0
    %2572 = vmatpush.msra.mxu0 0.0
    %2573 = vmatpush.msra.mxu0 0.0
    %2574 = vmatpush.msra.mxu0 0.0
    %2575 = vmatpush.msra.mxu0 0.0
    %2576 = vmatpush.msra.mxu0 0.0
    %2577 = vmatpush.msra.mxu0 0.0
    %2578 = vmatpush.msra.mxu0 0.0
    %2579 = vmatpush.msra.mxu0 0.0
    %2580 = vmatpush.msra.mxu0 0.0
    %2581 = vmatpush.msra.mxu0 %v2558
    %2582 = vmatpush.msra.mxu0 %v2556
    %2583 = vmatmul.f32.gmra.mxu0 %v2562
    %v2584 = vpop.f32.mrf.mxu0
    %v2585 = vadd.f32 0.0, %v2584
    %2586 = vmatmul.f32.gmra.mxu0 %v2565
    %v2587 = vpop.f32.mrf.mxu0
    %v2588 = vadd.f32 0.0, %v2587
    %2589 = vdwg.mxu0
    %v2590 = vadd.f32 %v2512, %v2585
    %v2591 = vadd.f32 %v2513, %v2588
    %2592 = vset.pattern.permute.xlu0 6
    %2593 = vperm.xlu0 %2592, %v2093
    %v2594 = vpop.permute.xlu0 %2593
    %2596 = vset.pattern.permute.xlu0 6
    %2597 = vperm.xlu0 %2596, %v2096
    %v2598 = vpop.permute.xlu0 %2597
    %v2600 = vperm.slane %v2114, 6
    %v2601 = vadd.f32 %v2594, %v2600
    %v2602 = vadd.f32 %v2598, %v2600
    %vm2603 = vcmp.gt.f32.partialorder %v2601, 0.0
    %vm2604 = vcmp.gt.f32.partialorder %v2602, 0.0
    %v2605 = vmul.f32 %v2601, 0.2
    %v2606 = vmul.f32 %v2602, 0.2
    %v2607 = vsel %vm2603, %v2601, %v2605
    %v2608 = vsel %vm2604, %v2602, %v2606
    %v2609 = vsel %vm1281, %v2607, -1e+30
    %v2610 = vsel %vm1282, %v2608, -1e+30
    %v2611 = vsel %vm1053, %v2609, -inf
    %2612 = vmax.xlane.f32.xlu0 %v2611
    %v2613 = vpop.xlane.xlu0 %2612
    %v2614 = vsel %vm1053, %v2610, -inf
    %2615 = vmax.xlane.f32.xlu0 %v2614
    %v2616 = vpop.xlane.xlu0 %2615
    %v2617 = vsub.f32 %v2609, %v2613
    %v2618 = vsub.f32 %v2610, %v2616
    %v2619 = vmul.f32 %v2617, 1.442695
    %v2620 = vpow.pop %v2619
    %v2621 = vmul.f32 %v2618, 1.442695
    %v2622 = vpow.pop %v2621
    %v2623 = vsel %vm1053, %v2620, 0.0
    %2624 = vadd.xlane.f32.xlu0 %v2623
    %v2625 = vpop.xlane.xlu0 %2624
    %v2626 = vsel %vm1053, %v2622, 0.0
    %2627 = vadd.xlane.f32.xlu0 %v2626
    %v2628 = vpop.xlane.xlu0 %2627
    %v2629 = vrcp.pop %v2625
    %v2630 = vrcp.pop %v2628
    %v2631 = vmul.f32 %v2620, %v2629
    %v2632 = vmul.f32 %v2622, %v2630
    %2633 = vrot.lane.b32.xlu0 %v2014, 32
    %v2634 = vpop.permute.xlu0 %2633
    %2635 = vrot.lane.b32.xlu0 %v2016, 32
    %v2636 = vpop.permute.xlu0 %2635
    %v2640 = vsel %vm1053, %v2631, 0
    %v2643 = vsel %vm1053, %v2632, 0
    %2645 = vmatpush.msra.mxu0 0.0
    %2646 = vmatpush.msra.mxu0 0.0
    %2647 = vmatpush.msra.mxu0 0.0
    %2648 = vmatpush.msra.mxu0 0.0
    %2649 = vmatpush.msra.mxu0 0.0
    %2650 = vmatpush.msra.mxu0 0.0
    %2651 = vmatpush.msra.mxu0 0.0
    %2652 = vmatpush.msra.mxu0 0.0
    %2653 = vmatpush.msra.mxu0 0.0
    %2654 = vmatpush.msra.mxu0 0.0
    %2655 = vmatpush.msra.mxu0 0.0
    %2656 = vmatpush.msra.mxu0 0.0
    %2657 = vmatpush.msra.mxu0 0.0
    %2658 = vmatpush.msra.mxu0 0.0
    %2659 = vmatpush.msra.mxu0 %v2636
    %2660 = vmatpush.msra.mxu0 %v2634
    %2661 = vmatmul.f32.gmra.mxu0 %v2640
    %v2662 = vpop.f32.mrf.mxu0
    %v2663 = vadd.f32 0.0, %v2662
    %2664 = vmatmul.f32.gmra.mxu0 %v2643
    %v2665 = vpop.f32.mrf.mxu0
    %v2666 = vadd.f32 0.0, %v2665
    %2667 = vdwg.mxu0
    %v2668 = vadd.f32 %v2590, %v2663
    %v2669 = vadd.f32 %v2591, %v2666
    %2670 = vset.pattern.permute.xlu0 7
    %2671 = vperm.xlu0 %2670, %v2093
    %v2672 = vpop.permute.xlu0 %2671
    %2674 = vset.pattern.permute.xlu0 7
    %2675 = vperm.xlu0 %2674, %v2096
    %v2676 = vpop.permute.xlu0 %2675
    %v2678 = vperm.slane %v2114, 7
    %v2679 = vadd.f32 %v2672, %v2678
    %v2680 = vadd.f32 %v2676, %v2678
    %vm2681 = vcmp.gt.f32.partialorder %v2679, 0.0
    %vm2682 = vcmp.gt.f32.partialorder %v2680, 0.0
    %v2683 = vmul.f32 %v2679, 0.2
    %v2684 = vmul.f32 %v2680, 0.2
    %v2685 = vsel %vm2681, %v2679, %v2683
    %v2686 = vsel %vm2682, %v2680, %v2684
    %v2687 = vsel %vm1281, %v2685, -1e+30
    %v2688 = vsel %vm1282, %v2686, -1e+30
    %v2689 = vsel %vm1053, %v2687, -inf
    %2690 = vmax.xlane.f32.xlu0 %v2689
    %v2691 = vpop.xlane.xlu0 %2690
    %v2692 = vsel %vm1053, %v2688, -inf
    %2693 = vmax.xlane.f32.xlu0 %v2692
    %v2694 = vpop.xlane.xlu0 %2693
    %v2695 = vsub.f32 %v2687, %v2691
    %v2696 = vsub.f32 %v2688, %v2694
    %v2697 = vmul.f32 %v2695, 1.442695
    %v2698 = vpow.pop %v2697
    %v2699 = vmul.f32 %v2696, 1.442695
    %v2700 = vpow.pop %v2699
    %v2701 = vsel %vm1053, %v2698, 0.0
    %2702 = vadd.xlane.f32.xlu0 %v2701
    %v2703 = vpop.xlane.xlu0 %2702
    %v2704 = vsel %vm1053, %v2700, 0.0
    %2705 = vadd.xlane.f32.xlu0 %v2704
    %v2706 = vpop.xlane.xlu0 %2705
    %v2707 = vrcp.pop %v2703
    %v2708 = vrcp.pop %v2706
    %v2709 = vmul.f32 %v2698, %v2707
    %v2710 = vmul.f32 %v2700, %v2708
    %2711 = vrot.lane.b32.xlu0 %v2014, 16
    %v2712 = vpop.permute.xlu0 %2711
    %2713 = vrot.lane.b32.xlu0 %v2016, 16
    %v2714 = vpop.permute.xlu0 %2713
    %v2718 = vsel %vm1053, %v2709, 0
    %v2721 = vsel %vm1053, %v2710, 0
    %2723 = vmatpush.msra.mxu0 0.0
    %2724 = vmatpush.msra.mxu0 0.0
    %2725 = vmatpush.msra.mxu0 0.0
    %2726 = vmatpush.msra.mxu0 0.0
    %2727 = vmatpush.msra.mxu0 0.0
    %2728 = vmatpush.msra.mxu0 0.0
    %2729 = vmatpush.msra.mxu0 0.0
    %2730 = vmatpush.msra.mxu0 0.0
    %2731 = vmatpush.msra.mxu0 0.0
    %2732 = vmatpush.msra.mxu0 0.0
    %2733 = vmatpush.msra.mxu0 0.0
    %2734 = vmatpush.msra.mxu0 0.0
    %2735 = vmatpush.msra.mxu0 0.0
    %2736 = vmatpush.msra.mxu0 0.0
    %2737 = vmatpush.msra.mxu0 %v2714
    %2738 = vmatpush.msra.mxu0 %v2712
    %2739 = vmatmul.f32.gmra.mxu0 %v2718
    %v2740 = vpop.f32.mrf.mxu0
    %v2741 = vadd.f32 0.0, %v2740
    %2742 = vmatmul.f32.gmra.mxu0 %v2721
    %v2743 = vpop.f32.mrf.mxu0
    %v2744 = vadd.f32 0.0, %v2743
    %2745 = vdwg.mxu0
    %v2746 = vadd.f32 %v2668, %v2741
    %v2747 = vadd.f32 %v2669, %v2744
    %v2748 = vmul.f32 %v2746, 0.125
    %v2749 = vmul.f32 %v2747, 0.125
    %s2750 = scalar_lea.vmem %s9, 1
    %v2751 = vld [vmem:[%s2750] sm:$0x1]
    %v2753 = vperm.slane %v2751, 0
    %v2755 = vadd.f32 %v2748, %v2753
    %v2756 = vadd.f32 %v2749, %v2753
    %v2757 = vpack.c.bf16 %v2756, %v2755
    %s2758 = scalar_lea.vmem %s4, 8
    %v2759 = vld [vmem:[%s2758] sm:$0xf]
    %v2760 = vld [vmem:[%s2758 + $0x4] sm:$0xf]
    %v2763 = vunpack.c.l.b16 %v2759
    %v2764 = vunpack.c.l.b16 %v2760
    %v2765 = vpack.c.b16 %v2764, %v2763
    %v2768 = vsel %vm1053, %v2757, 0
    %2770 = vmatpush.bf16.msra.mxu0 0
    %2771 = vmatpush.bf16.msra.mxu0 0
    %2772 = vmatpush.bf16.msra.mxu0 0
    %2773 = vmatpush.bf16.msra.mxu0 0
    %2774 = vmatpush.bf16.msra.mxu0 0
    %2775 = vmatpush.bf16.msra.mxu0 0
    %2776 = vmatpush.bf16.msra.mxu0 0
    %2777 = vmatpush.bf16.msra.mxu0 %v2765
    %2778 = vmatmul.bf16.gmra.mxu0 %v2768
    %v2779 = vpop.f32.mrf.mxu0
    %v2780 = vadd.f32 0.0, %v2779
    %v2781 = vpop.f32.mrf.mxu0
    %v2782 = vadd.f32 0.0, %v2781
    %2783 = vdwg.mxu0
    %v2784 = vpack.c.bf16 %v2782, %v2780
    %s2785 = scalar_lea.vmem %s5, 2
    %v2786 = vld [vmem:[%s2785] sm:$0x1]
    %v2788 = vperm.slane %v2786, 0
    %2790 = vmatpush.bf16.msra.mxu0 0
    %2791 = vmatpush.bf16.msra.mxu0 0
    %2792 = vmatpush.bf16.msra.mxu0 0
    %2793 = vmatpush.bf16.msra.mxu0 0
    %2794 = vmatpush.bf16.msra.mxu0 0
    %2795 = vmatpush.bf16.msra.mxu0 0
    %2796 = vmatpush.bf16.msra.mxu0 0
    %2797 = vmatpush.bf16.msra.mxu0 %v2784
    %2798 = vmatmul.bf16.gmra.mxu0 %v1055
    %v2799 = vpop.f32.mrf.mxu0
    %v2800 = vadd.f32 %v2788, %v2799
    %v2801 = vpop.f32.mrf.mxu0
    %v2802 = vadd.f32 %v2788, %v2801
    %2803 = vdwg.mxu0
    %v2804 = vmax.f32 %v2800, 0.0
    %v2805 = vmax.f32 %v2802, 0.0
    %v2806 = vpack.c.bf16 %v2805, %v2804
    %s2807 = scalar_lea.vmem [#allocation4], 128
    %v2808 = vld [vmem:[%s2807] sm:$0xf]
    %v2809 = vld [vmem:[%s2807 + $0x4] sm:$0xf]
    %v2810 = vld [vmem:[%s2807 + $0x8] sm:$0xf]
    %v2811 = vld [vmem:[%s2807 + $0xc] sm:$0xf]
    %v2812 = vld [vmem:[%s2807 + $0x10] sm:$0xf]
    %v2813 = vld [vmem:[%s2807 + $0x14] sm:$0xf]
    %v2814 = vld [vmem:[%s2807 + $0x18] sm:$0xf]
    %v2815 = vld [vmem:[%s2807 + $0x1c] sm:$0xf]
    %v2816 = vld [vmem:[%s2807 + $0x20] sm:$0xf]
    %v2817 = vld [vmem:[%s2807 + $0x24] sm:$0xf]
    %v2818 = vld [vmem:[%s2807 + $0x28] sm:$0xf]
    %v2819 = vld [vmem:[%s2807 + $0x2c] sm:$0xf]
    %v2820 = vld [vmem:[%s2807 + $0x30] sm:$0xf]
    %v2821 = vld [vmem:[%s2807 + $0x34] sm:$0xf]
    %v2822 = vld [vmem:[%s2807 + $0x38] sm:$0xf]
    %v2823 = vld [vmem:[%s2807 + $0x3c] sm:$0xf]
    %v2840 = vunpack.c.l.b16 %v2808
    %v2841 = vunpack.c.l.b16 %v2809
    %v2842 = vunpack.c.l.b16 %v2810
    %v2843 = vunpack.c.l.b16 %v2811
    %v2844 = vunpack.c.l.b16 %v2812
    %v2845 = vunpack.c.l.b16 %v2813
    %v2846 = vunpack.c.l.b16 %v2814
    %v2847 = vunpack.c.l.b16 %v2815
    %v2848 = vunpack.c.l.b16 %v2816
    %v2849 = vunpack.c.l.b16 %v2817
    %v2850 = vunpack.c.l.b16 %v2818
    %v2851 = vunpack.c.l.b16 %v2819
    %v2852 = vunpack.c.l.b16 %v2820
    %v2853 = vunpack.c.l.b16 %v2821
    %v2854 = vunpack.c.l.b16 %v2822
    %v2855 = vunpack.c.l.b16 %v2823
    %v2856 = vpack.c.b16 %v2841, %v2840
    %v2857 = vpack.c.b16 %v2843, %v2842
    %v2858 = vpack.c.b16 %v2845, %v2844
    %v2859 = vpack.c.b16 %v2847, %v2846
    %v2860 = vpack.c.b16 %v2849, %v2848
    %v2861 = vpack.c.b16 %v2851, %v2850
    %v2862 = vpack.c.b16 %v2853, %v2852
    %v2863 = vpack.c.b16 %v2855, %v2854
    %2872 = vmatpush.bf16.msra.mxu0 %v2863
    %2873 = vmatpush.bf16.msra.mxu0 %v2862
    %2874 = vmatpush.bf16.msra.mxu0 %v2861
    %2875 = vmatpush.bf16.msra.mxu0 %v2860
    %2876 = vmatpush.bf16.msra.mxu0 %v2859
    %2877 = vmatpush.bf16.msra.mxu0 %v2858
    %2878 = vmatpush.bf16.msra.mxu0 %v2857
    %2879 = vmatpush.bf16.msra.mxu0 %v2856
    %2880 = vmatmul.bf16.gmra.mxu0 %v2806
    %v2881 = vpop.f32.mrf.mxu0
    %v2882 = vadd.f32 0.0, %v2881
    %v2883 = vpop.f32.mrf.mxu0
    %v2884 = vadd.f32 0.0, %v2883
    %2885 = vdwg.mxu0
    %s2886 = scalar_lea.vmem %s7, 256
    %v2887 = vld [vmem:[%s2886] sm:$0xff]
    %v2888 = vld [vmem:[%s2886 + $0x8] sm:$0xff]
    %v2889 = vld [vmem:[%s2886 + $0x10] sm:$0xff]
    %v2890 = vld [vmem:[%s2886 + $0x18] sm:$0xff]
    %v2891 = vld [vmem:[%s2886 + $0x20] sm:$0xff]
    %v2892 = vld [vmem:[%s2886 + $0x28] sm:$0xff]
    %v2893 = vld [vmem:[%s2886 + $0x30] sm:$0xff]
    %v2894 = vld [vmem:[%s2886 + $0x38] sm:$0xff]
    %v2895 = vld [vmem:[%s2886 + $0x40] sm:$0xff]
    %v2896 = vld [vmem:[%s2886 + $0x48] sm:$0xff]
    %v2897 = vld [vmem:[%s2886 + $0x50] sm:$0xff]
    %v2898 = vld [vmem:[%s2886 + $0x58] sm:$0xff]
    %v2899 = vld [vmem:[%s2886 + $0x60] sm:$0xff]
    %v2900 = vld [vmem:[%s2886 + $0x68] sm:$0xff]
    %v2901 = vld [vmem:[%s2886 + $0x70] sm:$0xff]
    %v2902 = vld [vmem:[%s2886 + $0x78] sm:$0xff]
    %2903 = vmatpush.msra.mxu0 %v2902
    %2904 = vmatpush.msra.mxu0 %v2901
    %2905 = vmatpush.msra.mxu0 %v2900
    %2906 = vmatpush.msra.mxu0 %v2899
    %2907 = vmatpush.msra.mxu0 %v2898
    %2908 = vmatpush.msra.mxu0 %v2897
    %2909 = vmatpush.msra.mxu0 %v2896
    %2910 = vmatpush.msra.mxu0 %v2895
    %2911 = vmatpush.msra.mxu0 %v2894
    %2912 = vmatpush.msra.mxu0 %v2893
    %2913 = vmatpush.msra.mxu0 %v2892
    %2914 = vmatpush.msra.mxu0 %v2891
    %2915 = vmatpush.msra.mxu0 %v2890
    %2916 = vmatpush.msra.mxu0 %v2889
    %2917 = vmatpush.msra.mxu0 %v2888
    %2918 = vmatpush.msra.mxu0 %v2887
    %2919 = vmatmul.f32.gmra.mxu0 %v2882
    %v2920 = vpop.f32.mrf.mxu0
    %v2921 = vadd.f32 0.0, %v2920
    %2922 = vmatmul.f32.gmra.mxu0 %v2884
    %v2923 = vpop.f32.mrf.mxu0
    %v2924 = vadd.f32 0.0, %v2923
    %2925 = vdwg.mxu0
    %s2926 = scalar_lea.vmem %s8, 256
    %v2927 = vld [vmem:[%s2926] sm:$0xff]
    %v2928 = vld [vmem:[%s2926 + $0x8] sm:$0xff]
    %v2929 = vld [vmem:[%s2926 + $0x10] sm:$0xff]
    %v2930 = vld [vmem:[%s2926 + $0x18] sm:$0xff]
    %v2931 = vld [vmem:[%s2926 + $0x20] sm:$0xff]
    %v2932 = vld [vmem:[%s2926 + $0x28] sm:$0xff]
    %v2933 = vld [vmem:[%s2926 + $0x30] sm:$0xff]
    %v2934 = vld [vmem:[%s2926 + $0x38] sm:$0xff]
    %v2935 = vld [vmem:[%s2926 + $0x40] sm:$0xff]
    %v2936 = vld [vmem:[%s2926 + $0x48] sm:$0xff]
    %v2937 = vld [vmem:[%s2926 + $0x50] sm:$0xff]
    %v2938 = vld [vmem:[%s2926 + $0x58] sm:$0xff]
    %v2939 = vld [vmem:[%s2926 + $0x60] sm:$0xff]
    %v2940 = vld [vmem:[%s2926 + $0x68] sm:$0xff]
    %v2941 = vld [vmem:[%s2926 + $0x70] sm:$0xff]
    %v2942 = vld [vmem:[%s2926 + $0x78] sm:$0xff]
    %2943 = vmatpush.msra.mxu0 %v2942
    %2944 = vmatpush.msra.mxu0 %v2941
    %2945 = vmatpush.msra.mxu0 %v2940
    %2946 = vmatpush.msra.mxu0 %v2939
    %2947 = vmatpush.msra.mxu0 %v2938
    %2948 = vmatpush.msra.mxu0 %v2937
    %2949 = vmatpush.msra.mxu0 %v2936
    %2950 = vmatpush.msra.mxu0 %v2935
    %2951 = vmatpush.msra.mxu0 %v2934
    %2952 = vmatpush.msra.mxu0 %v2933
    %2953 = vmatpush.msra.mxu0 %v2932
    %2954 = vmatpush.msra.mxu0 %v2931
    %2955 = vmatpush.msra.mxu0 %v2930
    %2956 = vmatpush.msra.mxu0 %v2929
    %2957 = vmatpush.msra.mxu0 %v2928
    %2958 = vmatpush.msra.mxu0 %v2927
    %2959 = vmatmul.f32.gmra.mxu0 %v2882
    %v2960 = vpop.f32.mrf.mxu0
    %v2961 = vadd.f32 0.0, %v2960
    %2962 = vmatmul.f32.gmra.mxu0 %v2884
    %v2963 = vpop.f32.mrf.mxu0
    %v2964 = vadd.f32 0.0, %v2963
    %2965 = vdwg.mxu0
    %2966 = vxpose.xlu0.b32.start [1/16] %v2921, 128
    %2967 = vxpose.xlu0.b32.cont [2/16] %v2924, 128
    %2968 = vxpose.xlu0.b32.cont [3/16] 0.0, 128
    %2969 = vxpose.xlu0.b32.cont [4/16] 0.0, 128
    %2970 = vxpose.xlu0.b32.cont [5/16] 0.0, 128
    %2971 = vxpose.xlu0.b32.cont [6/16] 0.0, 128
    %2972 = vxpose.xlu0.b32.cont [7/16] 0.0, 128
    %2973 = vxpose.xlu0.b32.cont [8/16] 0.0, 128
    %2974 = vxpose.xlu0.b32.cont [9/16] 0.0, 128
    %2975 = vxpose.xlu0.b32.cont [10/16] 0.0, 128
    %2976 = vxpose.xlu0.b32.cont [11/16] 0.0, 128
    %2977 = vxpose.xlu0.b32.cont [12/16] 0.0, 128
    %2978 = vxpose.xlu0.b32.cont [13/16] 0.0, 128
    %2979 = vxpose.xlu0.b32.cont [14/16] 0.0, 128
    %2980 = vxpose.xlu0.b32.cont [15/16] 0.0, 128
    %2981 = vxpose.xlu0.b32.end [16/16] 0.0, 128
    %v2982 = vpop.trf.xlu0
    %v2983 = vpop.trf.xlu0
    %v2984 = vpop.trf.xlu0
    %v2985 = vpop.trf.xlu0
    %v2986 = vpop.trf.xlu0
    %v2987 = vpop.trf.xlu0
    %v2988 = vpop.trf.xlu0
    %v2989 = vpop.trf.xlu0
    %v2990 = vpop.trf.xlu0
    %v2991 = vpop.trf.xlu0
    %v2992 = vpop.trf.xlu0
    %v2993 = vpop.trf.xlu0
    %v2994 = vpop.trf.xlu0
    %v2995 = vpop.trf.xlu0
    %v2996 = vpop.trf.xlu0
    %v2997 = vpop.trf.xlu0
    %2999 = vset.pattern.permute.xlu0 0
    %3000 = vperm.xlu0 %2999, %v2961
    %v3001 = vpop.permute.xlu0 %3000
    %3004 = vset.pattern.permute.xlu0 0
    %3005 = vperm.xlu0 %3004, %v2964
    %v3006 = vpop.permute.xlu0 %3005
    %v3008 = vperm.slane %v2982, 0
    %v3009 = vadd.f32 %v3001, %v3008
    %v3010 = vadd.f32 %v3006, %v3008
    %vm3011 = vcmp.gt.f32.partialorder %v3009, 0.0
    %vm3012 = vcmp.gt.f32.partialorder %v3010, 0.0
    %v3013 = vmul.f32 %v3009, 0.2
    %v3014 = vmul.f32 %v3010, 0.2
    %v3015 = vsel %vm3011, %v3009, %v3013
    %v3016 = vsel %vm3012, %v3010, %v3014
    %v3017 = vsel %vm1281, %v3015, -1e+30
    %v3018 = vsel %vm1282, %v3016, -1e+30
    %v3019 = vsel %vm1053, %v3017, -inf
    %3020 = vmax.xlane.f32.xlu0 %v3019
    %v3021 = vpop.xlane.xlu0 %3020
    %v3022 = vsel %vm1053, %v3018, -inf
    %3023 = vmax.xlane.f32.xlu0 %v3022
    %v3024 = vpop.xlane.xlu0 %3023
    %v3025 = vsub.f32 %v3017, %v3021
    %v3026 = vsub.f32 %v3018, %v3024
    %v3027 = vmul.f32 %v3025, 1.442695
    %v3028 = vpow.pop %v3027
    %v3029 = vmul.f32 %v3026, 1.442695
    %v3030 = vpow.pop %v3029
    %v3031 = vsel %vm1053, %v3028, 0.0
    %3032 = vadd.xlane.f32.xlu0 %v3031
    %v3033 = vpop.xlane.xlu0 %3032
    %v3034 = vsel %vm1053, %v3030, 0.0
    %3035 = vadd.xlane.f32.xlu0 %v3034
    %v3036 = vpop.xlane.xlu0 %3035
    %v3037 = vrcp.pop %v3033
    %v3038 = vrcp.pop %v3036
    %v3039 = vmul.f32 %v3028, %v3037
    %v3040 = vmul.f32 %v3030, %v3038
    %3041 = vset.pattern.permute.xlu0 1
    %3042 = vperm.xlu0 %3041, %v2961
    %v3043 = vpop.permute.xlu0 %3042
    %3045 = vset.pattern.permute.xlu0 1
    %3046 = vperm.xlu0 %3045, %v2964
    %v3047 = vpop.permute.xlu0 %3046
    %v3049 = vperm.slane %v2982, 1
    %v3050 = vadd.f32 %v3043, %v3049
    %v3051 = vadd.f32 %v3047, %v3049
    %vm3052 = vcmp.gt.f32.partialorder %v3050, 0.0
    %vm3053 = vcmp.gt.f32.partialorder %v3051, 0.0
    %v3054 = vmul.f32 %v3050, 0.2
    %v3055 = vmul.f32 %v3051, 0.2
    %v3056 = vsel %vm3052, %v3050, %v3054
    %v3057 = vsel %vm3053, %v3051, %v3055
    %v3058 = vsel %vm1281, %v3056, -1e+30
    %v3059 = vsel %vm1282, %v3057, -1e+30
    %v3060 = vsel %vm1053, %v3058, -inf
    %3061 = vmax.xlane.f32.xlu0 %v3060
    %v3062 = vpop.xlane.xlu0 %3061
    %v3063 = vsel %vm1053, %v3059, -inf
    %3064 = vmax.xlane.f32.xlu0 %v3063
    %v3065 = vpop.xlane.xlu0 %3064
    %v3066 = vsub.f32 %v3058, %v3062
    %v3067 = vsub.f32 %v3059, %v3065
    %v3068 = vmul.f32 %v3066, 1.442695
    %v3069 = vpow.pop %v3068
    %v3070 = vmul.f32 %v3067, 1.442695
    %v3071 = vpow.pop %v3070
    %v3072 = vsel %vm1053, %v3069, 0.0
    %3073 = vadd.xlane.f32.xlu0 %v3072
    %v3074 = vpop.xlane.xlu0 %3073
    %v3075 = vsel %vm1053, %v3071, 0.0
    %3076 = vadd.xlane.f32.xlu0 %v3075
    %v3077 = vpop.xlane.xlu0 %3076
    %v3078 = vrcp.pop %v3074
    %v3079 = vrcp.pop %v3077
    %v3080 = vmul.f32 %v3069, %v3078
    %v3081 = vmul.f32 %v3071, %v3079
    %3084 = vrot.lane.b32.xlu0 %v2882, 112
    %v3085 = vpop.permute.xlu0 %3084
    %3086 = vrot.lane.b32.xlu0 %v2884, 112
    %v3087 = vpop.permute.xlu0 %3086
    %v3091 = vsel %vm1053, %v3080, 0
    %v3094 = vsel %vm1053, %v3081, 0
    %3096 = vmatpush.msra.mxu0 0.0
    %3097 = vmatpush.msra.mxu0 0.0
    %3098 = vmatpush.msra.mxu0 0.0
    %3099 = vmatpush.msra.mxu0 0.0
    %3100 = vmatpush.msra.mxu0 0.0
    %3101 = vmatpush.msra.mxu0 0.0
    %3102 = vmatpush.msra.mxu0 0.0
    %3103 = vmatpush.msra.mxu0 0.0
    %3104 = vmatpush.msra.mxu0 0.0
    %3105 = vmatpush.msra.mxu0 0.0
    %3106 = vmatpush.msra.mxu0 0.0
    %3107 = vmatpush.msra.mxu0 0.0
    %3108 = vmatpush.msra.mxu0 0.0
    %3109 = vmatpush.msra.mxu0 0.0
    %3110 = vmatpush.msra.mxu0 %v3087
    %3111 = vmatpush.msra.mxu0 %v3085
    %3112 = vmatmul.f32.gmra.mxu0 %v3091
    %v3113 = vpop.f32.mrf.mxu0
    %v3114 = vadd.f32 0.0, %v3113
    %3115 = vmatmul.f32.gmra.mxu0 %v3094
    %v3116 = vpop.f32.mrf.mxu0
    %v3117 = vadd.f32 0.0, %v3116
    %3118 = vdwg.mxu0
    %v3120 = vsel %vm1053, %v3039, 0
    %v3123 = vsel %vm1053, %v3040, 0
    %3125 = vmatpush.msra.mxu0 0.0
    %3126 = vmatpush.msra.mxu0 0.0
    %3127 = vmatpush.msra.mxu0 0.0
    %3128 = vmatpush.msra.mxu0 0.0
    %3129 = vmatpush.msra.mxu0 0.0
    %3130 = vmatpush.msra.mxu0 0.0
    %3131 = vmatpush.msra.mxu0 0.0
    %3132 = vmatpush.msra.mxu0 0.0
    %3133 = vmatpush.msra.mxu0 0.0
    %3134 = vmatpush.msra.mxu0 0.0
    %3135 = vmatpush.msra.mxu0 0.0
    %3136 = vmatpush.msra.mxu0 0.0
    %3137 = vmatpush.msra.mxu0 0.0
    %3138 = vmatpush.msra.mxu0 0.0
    %3139 = vmatpush.msra.mxu0 %v2884
    %3140 = vmatpush.msra.mxu0 %v2882
    %3141 = vmatmul.f32.gmra.mxu0 %v3120
    %v3142 = vpop.f32.mrf.mxu0
    %v3143 = vadd.f32 %v3114, %v3142
    %3144 = vmatmul.f32.gmra.mxu0 %v3123
    %v3145 = vpop.f32.mrf.mxu0
    %v3146 = vadd.f32 %v3117, %v3145
    %3147 = vdwg.mxu0
    %3148 = vset.pattern.permute.xlu0 2
    %3149 = vperm.xlu0 %3148, %v2961
    %v3150 = vpop.permute.xlu0 %3149
    %3152 = vset.pattern.permute.xlu0 2
    %3153 = vperm.xlu0 %3152, %v2964
    %v3154 = vpop.permute.xlu0 %3153
    %v3156 = vperm.slane %v2982, 2
    %v3157 = vadd.f32 %v3150, %v3156
    %v3158 = vadd.f32 %v3154, %v3156
    %vm3159 = vcmp.gt.f32.partialorder %v3157, 0.0
    %vm3160 = vcmp.gt.f32.partialorder %v3158, 0.0
    %v3161 = vmul.f32 %v3157, 0.2
    %v3162 = vmul.f32 %v3158, 0.2
    %v3163 = vsel %vm3159, %v3157, %v3161
    %v3164 = vsel %vm3160, %v3158, %v3162
    %v3165 = vsel %vm1281, %v3163, -1e+30
    %v3166 = vsel %vm1282, %v3164, -1e+30
    %v3167 = vsel %vm1053, %v3165, -inf
    %3168 = vmax.xlane.f32.xlu0 %v3167
    %v3169 = vpop.xlane.xlu0 %3168
    %v3170 = vsel %vm1053, %v3166, -inf
    %3171 = vmax.xlane.f32.xlu0 %v3170
    %v3172 = vpop.xlane.xlu0 %3171
    %v3173 = vsub.f32 %v3165, %v3169
    %v3174 = vsub.f32 %v3166, %v3172
    %v3175 = vmul.f32 %v3173, 1.442695
    %v3176 = vpow.pop %v3175
    %v3177 = vmul.f32 %v3174, 1.442695
    %v3178 = vpow.pop %v3177
    %v3179 = vsel %vm1053, %v3176, 0.0
    %3180 = vadd.xlane.f32.xlu0 %v3179
    %v3181 = vpop.xlane.xlu0 %3180
    %v3182 = vsel %vm1053, %v3178, 0.0
    %3183 = vadd.xlane.f32.xlu0 %v3182
    %v3184 = vpop.xlane.xlu0 %3183
    %v3185 = vrcp.pop %v3181
    %v3186 = vrcp.pop %v3184
    %v3187 = vmul.f32 %v3176, %v3185
    %v3188 = vmul.f32 %v3178, %v3186
    %3189 = vrot.lane.b32.xlu0 %v2882, 96
    %v3190 = vpop.permute.xlu0 %3189
    %3191 = vrot.lane.b32.xlu0 %v2884, 96
    %v3192 = vpop.permute.xlu0 %3191
    %v3196 = vsel %vm1053, %v3187, 0
    %v3199 = vsel %vm1053, %v3188, 0
    %3201 = vmatpush.msra.mxu0 0.0
    %3202 = vmatpush.msra.mxu0 0.0
    %3203 = vmatpush.msra.mxu0 0.0
    %3204 = vmatpush.msra.mxu0 0.0
    %3205 = vmatpush.msra.mxu0 0.0
    %3206 = vmatpush.msra.mxu0 0.0
    %3207 = vmatpush.msra.mxu0 0.0
    %3208 = vmatpush.msra.mxu0 0.0
    %3209 = vmatpush.msra.mxu0 0.0
    %3210 = vmatpush.msra.mxu0 0.0
    %3211 = vmatpush.msra.mxu0 0.0
    %3212 = vmatpush.msra.mxu0 0.0
    %3213 = vmatpush.msra.mxu0 0.0
    %3214 = vmatpush.msra.mxu0 0.0
    %3215 = vmatpush.msra.mxu0 %v3192
    %3216 = vmatpush.msra.mxu0 %v3190
    %3217 = vmatmul.f32.gmra.mxu0 %v3196
    %v3218 = vpop.f32.mrf.mxu0
    %v3219 = vadd.f32 0.0, %v3218
    %3220 = vmatmul.f32.gmra.mxu0 %v3199
    %v3221 = vpop.f32.mrf.mxu0
    %v3222 = vadd.f32 0.0, %v3221
    %3223 = vdwg.mxu0
    %v3224 = vadd.f32 %v3143, %v3219
    %v3225 = vadd.f32 %v3146, %v3222
    %3226 = vset.pattern.permute.xlu0 3
    %3227 = vperm.xlu0 %3226, %v2961
    %v3228 = vpop.permute.xlu0 %3227
    %3230 = vset.pattern.permute.xlu0 3
    %3231 = vperm.xlu0 %3230, %v2964
    %v3232 = vpop.permute.xlu0 %3231
    %v3234 = vperm.slane %v2982, 3
    %v3235 = vadd.f32 %v3228, %v3234
    %v3236 = vadd.f32 %v3232, %v3234
    %vm3237 = vcmp.gt.f32.partialorder %v3235, 0.0
    %vm3238 = vcmp.gt.f32.partialorder %v3236, 0.0
    %v3239 = vmul.f32 %v3235, 0.2
    %v3240 = vmul.f32 %v3236, 0.2
    %v3241 = vsel %vm3237, %v3235, %v3239
    %v3242 = vsel %vm3238, %v3236, %v3240
    %v3243 = vsel %vm1281, %v3241, -1e+30
    %v3244 = vsel %vm1282, %v3242, -1e+30
    %v3245 = vsel %vm1053, %v3243, -inf
    %3246 = vmax.xlane.f32.xlu0 %v3245
    %v3247 = vpop.xlane.xlu0 %3246
    %v3248 = vsel %vm1053, %v3244, -inf
    %3249 = vmax.xlane.f32.xlu0 %v3248
    %v3250 = vpop.xlane.xlu0 %3249
    %v3251 = vsub.f32 %v3243, %v3247
    %v3252 = vsub.f32 %v3244, %v3250
    %v3253 = vmul.f32 %v3251, 1.442695
    %v3254 = vpow.pop %v3253
    %v3255 = vmul.f32 %v3252, 1.442695
    %v3256 = vpow.pop %v3255
    %v3257 = vsel %vm1053, %v3254, 0.0
    %3258 = vadd.xlane.f32.xlu0 %v3257
    %v3259 = vpop.xlane.xlu0 %3258
    %v3260 = vsel %vm1053, %v3256, 0.0
    %3261 = vadd.xlane.f32.xlu0 %v3260
    %v3262 = vpop.xlane.xlu0 %3261
    %v3263 = vrcp.pop %v3259
    %v3264 = vrcp.pop %v3262
    %v3265 = vmul.f32 %v3254, %v3263
    %v3266 = vmul.f32 %v3256, %v3264
    %3267 = vrot.lane.b32.xlu0 %v2882, 80
    %v3268 = vpop.permute.xlu0 %3267
    %3269 = vrot.lane.b32.xlu0 %v2884, 80
    %v3270 = vpop.permute.xlu0 %3269
    %v3274 = vsel %vm1053, %v3265, 0
    %v3277 = vsel %vm1053, %v3266, 0
    %3279 = vmatpush.msra.mxu0 0.0
    %3280 = vmatpush.msra.mxu0 0.0
    %3281 = vmatpush.msra.mxu0 0.0
    %3282 = vmatpush.msra.mxu0 0.0
    %3283 = vmatpush.msra.mxu0 0.0
    %3284 = vmatpush.msra.mxu0 0.0
    %3285 = vmatpush.msra.mxu0 0.0
    %3286 = vmatpush.msra.mxu0 0.0
    %3287 = vmatpush.msra.mxu0 0.0
    %3288 = vmatpush.msra.mxu0 0.0
    %3289 = vmatpush.msra.mxu0 0.0
    %3290 = vmatpush.msra.mxu0 0.0
    %3291 = vmatpush.msra.mxu0 0.0
    %3292 = vmatpush.msra.mxu0 0.0
    %3293 = vmatpush.msra.mxu0 %v3270
    %3294 = vmatpush.msra.mxu0 %v3268
    %3295 = vmatmul.f32.gmra.mxu0 %v3274
    %v3296 = vpop.f32.mrf.mxu0
    %v3297 = vadd.f32 0.0, %v3296
    %3298 = vmatmul.f32.gmra.mxu0 %v3277
    %v3299 = vpop.f32.mrf.mxu0
    %v3300 = vadd.f32 0.0, %v3299
    %3301 = vdwg.mxu0
    %v3302 = vadd.f32 %v3224, %v3297
    %v3303 = vadd.f32 %v3225, %v3300
    %3304 = vset.pattern.permute.xlu0 4
    %3305 = vperm.xlu0 %3304, %v2961
    %v3306 = vpop.permute.xlu0 %3305
    %3308 = vset.pattern.permute.xlu0 4
    %3309 = vperm.xlu0 %3308, %v2964
    %v3310 = vpop.permute.xlu0 %3309
    %v3312 = vperm.slane %v2982, 4
    %v3313 = vadd.f32 %v3306, %v3312
    %v3314 = vadd.f32 %v3310, %v3312
    %vm3315 = vcmp.gt.f32.partialorder %v3313, 0.0
    %vm3316 = vcmp.gt.f32.partialorder %v3314, 0.0
    %v3317 = vmul.f32 %v3313, 0.2
    %v3318 = vmul.f32 %v3314, 0.2
    %v3319 = vsel %vm3315, %v3313, %v3317
    %v3320 = vsel %vm3316, %v3314, %v3318
    %v3321 = vsel %vm1281, %v3319, -1e+30
    %v3322 = vsel %vm1282, %v3320, -1e+30
    %v3323 = vsel %vm1053, %v3321, -inf
    %3324 = vmax.xlane.f32.xlu0 %v3323
    %v3325 = vpop.xlane.xlu0 %3324
    %v3326 = vsel %vm1053, %v3322, -inf
    %3327 = vmax.xlane.f32.xlu0 %v3326
    %v3328 = vpop.xlane.xlu0 %3327
    %v3329 = vsub.f32 %v3321, %v3325
    %v3330 = vsub.f32 %v3322, %v3328
    %v3331 = vmul.f32 %v3329, 1.442695
    %v3332 = vpow.pop %v3331
    %v3333 = vmul.f32 %v3330, 1.442695
    %v3334 = vpow.pop %v3333
    %v3335 = vsel %vm1053, %v3332, 0.0
    %3336 = vadd.xlane.f32.xlu0 %v3335
    %v3337 = vpop.xlane.xlu0 %3336
    %v3338 = vsel %vm1053, %v3334, 0.0
    %3339 = vadd.xlane.f32.xlu0 %v3338
    %v3340 = vpop.xlane.xlu0 %3339
    %v3341 = vrcp.pop %v3337
    %v3342 = vrcp.pop %v3340
    %v3343 = vmul.f32 %v3332, %v3341
    %v3344 = vmul.f32 %v3334, %v3342
    %3345 = vrot.lane.b32.xlu0 %v2882, 64
    %v3346 = vpop.permute.xlu0 %3345
    %3347 = vrot.lane.b32.xlu0 %v2884, 64
    %v3348 = vpop.permute.xlu0 %3347
    %v3352 = vsel %vm1053, %v3343, 0
    %v3355 = vsel %vm1053, %v3344, 0
    %3357 = vmatpush.msra.mxu0 0.0
    %3358 = vmatpush.msra.mxu0 0.0
    %3359 = vmatpush.msra.mxu0 0.0
    %3360 = vmatpush.msra.mxu0 0.0
    %3361 = vmatpush.msra.mxu0 0.0
    %3362 = vmatpush.msra.mxu0 0.0
    %3363 = vmatpush.msra.mxu0 0.0
    %3364 = vmatpush.msra.mxu0 0.0
    %3365 = vmatpush.msra.mxu0 0.0
    %3366 = vmatpush.msra.mxu0 0.0
    %3367 = vmatpush.msra.mxu0 0.0
    %3368 = vmatpush.msra.mxu0 0.0
    %3369 = vmatpush.msra.mxu0 0.0
    %3370 = vmatpush.msra.mxu0 0.0
    %3371 = vmatpush.msra.mxu0 %v3348
    %3372 = vmatpush.msra.mxu0 %v3346
    %3373 = vmatmul.f32.gmra.mxu0 %v3352
    %v3374 = vpop.f32.mrf.mxu0
    %v3375 = vadd.f32 0.0, %v3374
    %3376 = vmatmul.f32.gmra.mxu0 %v3355
    %v3377 = vpop.f32.mrf.mxu0
    %v3378 = vadd.f32 0.0, %v3377
    %3379 = vdwg.mxu0
    %v3380 = vadd.f32 %v3302, %v3375
    %v3381 = vadd.f32 %v3303, %v3378
    %3382 = vset.pattern.permute.xlu0 5
    %3383 = vperm.xlu0 %3382, %v2961
    %v3384 = vpop.permute.xlu0 %3383
    %3386 = vset.pattern.permute.xlu0 5
    %3387 = vperm.xlu0 %3386, %v2964
    %v3388 = vpop.permute.xlu0 %3387
    %v3390 = vperm.slane %v2982, 5
    %v3391 = vadd.f32 %v3384, %v3390
    %v3392 = vadd.f32 %v3388, %v3390
    %vm3393 = vcmp.gt.f32.partialorder %v3391, 0.0
    %vm3394 = vcmp.gt.f32.partialorder %v3392, 0.0
    %v3395 = vmul.f32 %v3391, 0.2
    %v3396 = vmul.f32 %v3392, 0.2
    %v3397 = vsel %vm3393, %v3391, %v3395
    %v3398 = vsel %vm3394, %v3392, %v3396
    %v3399 = vsel %vm1281, %v3397, -1e+30
    %v3400 = vsel %vm1282, %v3398, -1e+30
    %v3401 = vsel %vm1053, %v3399, -inf
    %3402 = vmax.xlane.f32.xlu0 %v3401
    %v3403 = vpop.xlane.xlu0 %3402
    %v3404 = vsel %vm1053, %v3400, -inf
    %3405 = vmax.xlane.f32.xlu0 %v3404
    %v3406 = vpop.xlane.xlu0 %3405
    %v3407 = vsub.f32 %v3399, %v3403
    %v3408 = vsub.f32 %v3400, %v3406
    %v3409 = vmul.f32 %v3407, 1.442695
    %v3410 = vpow.pop %v3409
    %v3411 = vmul.f32 %v3408, 1.442695
    %v3412 = vpow.pop %v3411
    %v3413 = vsel %vm1053, %v3410, 0.0
    %3414 = vadd.xlane.f32.xlu0 %v3413
    %v3415 = vpop.xlane.xlu0 %3414
    %v3416 = vsel %vm1053, %v3412, 0.0
    %3417 = vadd.xlane.f32.xlu0 %v3416
    %v3418 = vpop.xlane.xlu0 %3417
    %v3419 = vrcp.pop %v3415
    %v3420 = vrcp.pop %v3418
    %v3421 = vmul.f32 %v3410, %v3419
    %v3422 = vmul.f32 %v3412, %v3420
    %3423 = vrot.lane.b32.xlu0 %v2882, 48
    %v3424 = vpop.permute.xlu0 %3423
    %3425 = vrot.lane.b32.xlu0 %v2884, 48
    %v3426 = vpop.permute.xlu0 %3425
    %v3430 = vsel %vm1053, %v3421, 0
    %v3433 = vsel %vm1053, %v3422, 0
    %3435 = vmatpush.msra.mxu0 0.0
    %3436 = vmatpush.msra.mxu0 0.0
    %3437 = vmatpush.msra.mxu0 0.0
    %3438 = vmatpush.msra.mxu0 0.0
    %3439 = vmatpush.msra.mxu0 0.0
    %3440 = vmatpush.msra.mxu0 0.0
    %3441 = vmatpush.msra.mxu0 0.0
    %3442 = vmatpush.msra.mxu0 0.0
    %3443 = vmatpush.msra.mxu0 0.0
    %3444 = vmatpush.msra.mxu0 0.0
    %3445 = vmatpush.msra.mxu0 0.0
    %3446 = vmatpush.msra.mxu0 0.0
    %3447 = vmatpush.msra.mxu0 0.0
    %3448 = vmatpush.msra.mxu0 0.0
    %3449 = vmatpush.msra.mxu0 %v3426
    %3450 = vmatpush.msra.mxu0 %v3424
    %3451 = vmatmul.f32.gmra.mxu0 %v3430
    %v3452 = vpop.f32.mrf.mxu0
    %v3453 = vadd.f32 0.0, %v3452
    %3454 = vmatmul.f32.gmra.mxu0 %v3433
    %v3455 = vpop.f32.mrf.mxu0
    %v3456 = vadd.f32 0.0, %v3455
    %3457 = vdwg.mxu0
    %v3458 = vadd.f32 %v3380, %v3453
    %v3459 = vadd.f32 %v3381, %v3456
    %3460 = vset.pattern.permute.xlu0 6
    %3461 = vperm.xlu0 %3460, %v2961
    %v3462 = vpop.permute.xlu0 %3461
    %3464 = vset.pattern.permute.xlu0 6
    %3465 = vperm.xlu0 %3464, %v2964
    %v3466 = vpop.permute.xlu0 %3465
    %v3468 = vperm.slane %v2982, 6
    %v3469 = vadd.f32 %v3462, %v3468
    %v3470 = vadd.f32 %v3466, %v3468
    %vm3471 = vcmp.gt.f32.partialorder %v3469, 0.0
    %vm3472 = vcmp.gt.f32.partialorder %v3470, 0.0
    %v3473 = vmul.f32 %v3469, 0.2
    %v3474 = vmul.f32 %v3470, 0.2
    %v3475 = vsel %vm3471, %v3469, %v3473
    %v3476 = vsel %vm3472, %v3470, %v3474
    %v3477 = vsel %vm1281, %v3475, -1e+30
    %v3478 = vsel %vm1282, %v3476, -1e+30
    %v3479 = vsel %vm1053, %v3477, -inf
    %3480 = vmax.xlane.f32.xlu0 %v3479
    %v3481 = vpop.xlane.xlu0 %3480
    %v3482 = vsel %vm1053, %v3478, -inf
    %3483 = vmax.xlane.f32.xlu0 %v3482
    %v3484 = vpop.xlane.xlu0 %3483
    %v3485 = vsub.f32 %v3477, %v3481
    %v3486 = vsub.f32 %v3478, %v3484
    %v3487 = vmul.f32 %v3485, 1.442695
    %v3488 = vpow.pop %v3487
    %v3489 = vmul.f32 %v3486, 1.442695
    %v3490 = vpow.pop %v3489
    %v3491 = vsel %vm1053, %v3488, 0.0
    %3492 = vadd.xlane.f32.xlu0 %v3491
    %v3493 = vpop.xlane.xlu0 %3492
    %v3494 = vsel %vm1053, %v3490, 0.0
    %3495 = vadd.xlane.f32.xlu0 %v3494
    %v3496 = vpop.xlane.xlu0 %3495
    %v3497 = vrcp.pop %v3493
    %v3498 = vrcp.pop %v3496
    %v3499 = vmul.f32 %v3488, %v3497
    %v3500 = vmul.f32 %v3490, %v3498
    %3501 = vrot.lane.b32.xlu0 %v2882, 32
    %v3502 = vpop.permute.xlu0 %3501
    %3503 = vrot.lane.b32.xlu0 %v2884, 32
    %v3504 = vpop.permute.xlu0 %3503
    %v3508 = vsel %vm1053, %v3499, 0
    %v3511 = vsel %vm1053, %v3500, 0
    %3513 = vmatpush.msra.mxu0 0.0
    %3514 = vmatpush.msra.mxu0 0.0
    %3515 = vmatpush.msra.mxu0 0.0
    %3516 = vmatpush.msra.mxu0 0.0
    %3517 = vmatpush.msra.mxu0 0.0
    %3518 = vmatpush.msra.mxu0 0.0
    %3519 = vmatpush.msra.mxu0 0.0
    %3520 = vmatpush.msra.mxu0 0.0
    %3521 = vmatpush.msra.mxu0 0.0
    %3522 = vmatpush.msra.mxu0 0.0
    %3523 = vmatpush.msra.mxu0 0.0
    %3524 = vmatpush.msra.mxu0 0.0
    %3525 = vmatpush.msra.mxu0 0.0
    %3526 = vmatpush.msra.mxu0 0.0
    %3527 = vmatpush.msra.mxu0 %v3504
    %3528 = vmatpush.msra.mxu0 %v3502
    %3529 = vmatmul.f32.gmra.mxu0 %v3508
    %v3530 = vpop.f32.mrf.mxu0
    %v3531 = vadd.f32 0.0, %v3530
    %3532 = vmatmul.f32.gmra.mxu0 %v3511
    %v3533 = vpop.f32.mrf.mxu0
    %v3534 = vadd.f32 0.0, %v3533
    %3535 = vdwg.mxu0
    %v3536 = vadd.f32 %v3458, %v3531
    %v3537 = vadd.f32 %v3459, %v3534
    %3538 = vset.pattern.permute.xlu0 7
    %3539 = vperm.xlu0 %3538, %v2961
    %v3540 = vpop.permute.xlu0 %3539
    %3542 = vset.pattern.permute.xlu0 7
    %3543 = vperm.xlu0 %3542, %v2964
    %v3544 = vpop.permute.xlu0 %3543
    %v3546 = vperm.slane %v2982, 7
    %v3547 = vadd.f32 %v3540, %v3546
    %v3548 = vadd.f32 %v3544, %v3546
    %vm3549 = vcmp.gt.f32.partialorder %v3547, 0.0
    %vm3550 = vcmp.gt.f32.partialorder %v3548, 0.0
    %v3551 = vmul.f32 %v3547, 0.2
    %v3552 = vmul.f32 %v3548, 0.2
    %v3553 = vsel %vm3549, %v3547, %v3551
    %v3554 = vsel %vm3550, %v3548, %v3552
    %v3555 = vsel %vm1281, %v3553, -1e+30
    %v3556 = vsel %vm1282, %v3554, -1e+30
    %v3557 = vsel %vm1053, %v3555, -inf
    %3558 = vmax.xlane.f32.xlu0 %v3557
    %v3559 = vpop.xlane.xlu0 %3558
    %v3560 = vsel %vm1053, %v3556, -inf
    %3561 = vmax.xlane.f32.xlu0 %v3560
    %v3562 = vpop.xlane.xlu0 %3561
    %v3563 = vsub.f32 %v3555, %v3559
    %v3564 = vsub.f32 %v3556, %v3562
    %v3565 = vmul.f32 %v3563, 1.442695
    %v3566 = vpow.pop %v3565
    %v3567 = vmul.f32 %v3564, 1.442695
    %v3568 = vpow.pop %v3567
    %v3569 = vsel %vm1053, %v3566, 0.0
    %3570 = vadd.xlane.f32.xlu0 %v3569
    %v3571 = vpop.xlane.xlu0 %3570
    %v3572 = vsel %vm1053, %v3568, 0.0
    %3573 = vadd.xlane.f32.xlu0 %v3572
    %v3574 = vpop.xlane.xlu0 %3573
    %v3575 = vrcp.pop %v3571
    %v3576 = vrcp.pop %v3574
    %v3577 = vmul.f32 %v3566, %v3575
    %v3578 = vmul.f32 %v3568, %v3576
    %3579 = vrot.lane.b32.xlu0 %v2882, 16
    %v3580 = vpop.permute.xlu0 %3579
    %3581 = vrot.lane.b32.xlu0 %v2884, 16
    %v3582 = vpop.permute.xlu0 %3581
    %v3586 = vsel %vm1053, %v3577, 0
    %v3589 = vsel %vm1053, %v3578, 0
    %3591 = vmatpush.msra.mxu0 0.0
    %3592 = vmatpush.msra.mxu0 0.0
    %3593 = vmatpush.msra.mxu0 0.0
    %3594 = vmatpush.msra.mxu0 0.0
    %3595 = vmatpush.msra.mxu0 0.0
    %3596 = vmatpush.msra.mxu0 0.0
    %3597 = vmatpush.msra.mxu0 0.0
    %3598 = vmatpush.msra.mxu0 0.0
    %3599 = vmatpush.msra.mxu0 0.0
    %3600 = vmatpush.msra.mxu0 0.0
    %3601 = vmatpush.msra.mxu0 0.0
    %3602 = vmatpush.msra.mxu0 0.0
    %3603 = vmatpush.msra.mxu0 0.0
    %3604 = vmatpush.msra.mxu0 0.0
    %3605 = vmatpush.msra.mxu0 %v3582
    %3606 = vmatpush.msra.mxu0 %v3580
    %3607 = vmatmul.f32.gmra.mxu0 %v3586
    %v3608 = vpop.f32.mrf.mxu0
    %v3609 = vadd.f32 0.0, %v3608
    %3610 = vmatmul.f32.gmra.mxu0 %v3589
    %v3611 = vpop.f32.mrf.mxu0
    %v3612 = vadd.f32 0.0, %v3611
    %3613 = vdwg.mxu0
    %v3614 = vadd.f32 %v3536, %v3609
    %v3615 = vadd.f32 %v3537, %v3612
    %v3616 = vmul.f32 %v3614, 0.125
    %v3617 = vmul.f32 %v3615, 0.125
    %s3618 = scalar_lea.vmem %s9, 2
    %v3619 = vld [vmem:[%s3618] sm:$0x1]
    %v3621 = vperm.slane %v3619, 0
    %v3623 = vadd.f32 %v3616, %v3621
    %v3624 = vadd.f32 %v3617, %v3621
    %v3625 = vld [vmem:[%s10] sm:$0xff]
    %v3626 = vld [vmem:[%s10 + $0x8] sm:$0xff]
    %v3627 = vld [vmem:[%s11] sm:$0x1]
    %v3629 = vperm.slane %v3627, 0
    %v3632 = vsel %vm1053, %v3623, 0
    %v3635 = vsel %vm1053, %v3624, 0
    %3637 = vmatpush.msra.mxu0 0.0
    %3638 = vmatpush.msra.mxu0 0.0
    %3639 = vmatpush.msra.mxu0 0.0
    %3640 = vmatpush.msra.mxu0 0.0
    %3641 = vmatpush.msra.mxu0 0.0
    %3642 = vmatpush.msra.mxu0 0.0
    %3643 = vmatpush.msra.mxu0 0.0
    %3644 = vmatpush.msra.mxu0 0.0
    %3645 = vmatpush.msra.mxu0 0.0
    %3646 = vmatpush.msra.mxu0 0.0
    %3647 = vmatpush.msra.mxu0 0.0
    %3648 = vmatpush.msra.mxu0 0.0
    %3649 = vmatpush.msra.mxu0 0.0
    %3650 = vmatpush.msra.mxu0 0.0
    %3651 = vmatpush.msra.mxu0 %v3626
    %3652 = vmatpush.msra.mxu0 %v3625
    %3653 = vmatmul.f32.gmra.mxu0 %v3632
    %v3654 = vpop.f32.mrf.mxu0
    %v3655 = vadd.f32 %v3629, %v3654
    %3656 = vmatmul.f32.gmra.mxu0 %v3635
    %v3657 = vpop.f32.mrf.mxu0
    %v3658 = vadd.f32 %v3629, %v3657
    %3659 = vdwg.mxu0
    %vm3660 = vcmask 56320
    %3661 = vst.msk [vmem:[%s12] sm:$0xff] %vm3660, %v3655
    %3662 = vst.msk [vmem:[%s12 + $0x8] sm:$0xff] %vm3660, %v3658
    // Predicated region
    $region58: #{mas_forward.1} parent=1 // pred_check
      _
    $region59: #{mas_forward.1} parent=1 // pred_check_branch
      %3664 = sbr.rel (0) target = $region61
    $region60: #{mas_forward.1} parent=1 // pred_region
      _
    $region61: #{mas_forward.1} parent=1 // pred_fallthru
      _
    // Predicated region
    $region62: #{mas_forward.1} parent=1 // pred_check
      _
    $region63: #{mas_forward.1} parent=1 // pred_check_branch
      %3666 = sbr.rel (0) target = $region65
    $region64: #{mas_forward.1} parent=1 // pred_region
      _
    $region65: #{mas_forward.1} parent=1 // pred_fallthru
      _
    %3667 = vsyncpa [#allocation3], 1
    %3668 = vsyncpa [#allocation5], 1

</llo_original>
